<compile_context>
chip_gen: v7x
topology: tpu7x:2x2x1
jax: 0.10.0
libtpu: 0.0.40
codegen_flags: <defaults>
</compile_context>

<pallas_src>
import jax
import jax.numpy as jnp
from jax import lax
from jax.experimental import pallas as pl
from jax.experimental.pallas import tpu as pltpu

B = 2
H = W = 28
CIN = 1
COUT = 8
POOL_OUT = 13
S = POOL_OUT * POOL_OUT          # 169 spatial positions after pooling
FLAT = COUT * S                  # 1352
H1, H2, H3 = 676, 84, 10


# ----------------------------- Pallas kernel ------------------------------- #

def _fused_kernel(slabs_ref, convw_ref, convb_ref,
                  w1_ref, b1_ref, w2_ref, b2_ref, w3_ref, b3_ref, out_ref):
    """Fused conv(1->8, 3x3) + ReLU + MaxPool(2,2) + fc1 + ReLU + fc2 + ReLU + fc3.

    slabs_ref: [36, B, 169] VMEM  im2col slabs; index (u*9 + t) with
               u = 2x2 pool-window offset, t = 3x3 conv tap,
               column s = ph*13 + pw (pooled spatial position).
    convw_ref: [9, 8]  SMEM  conv weight (tap, out-channel) -- read as scalars.
    convb_ref: [8]     SMEM  conv bias.
    w1_ref:    [8, 169, 676] VMEM  fc1 weight, pre-transposed & reshaped so the
               leading axis is the conv output channel (PyTorch flatten order
               c*169 + s is folded into this layout).
    b1/w2/b2/w3/b3: fc biases / pre-transposed fc weights in VMEM.
    out_ref:   [B, 10] VMEM.
    """
    # Hoist the 72 conv-weight scalars + 8 bias scalars out of the loops.
    wts = [[convw_ref[t, c] for c in range(COUT)] for t in range(9)]
    bias = [convb_ref[c] for c in range(COUT)]

    # ---- conv + maxpool on the VPU, per output channel (lane axis = spatial) ----
    pooled = [None] * COUT                      # per-channel [B, 169]
    for u in range(4):                          # 2x2 pooling-window positions
        acc = [None] * COUT
        for t in range(9):                      # 3x3 conv taps
            s_ut = slabs_ref[u * 9 + t]         # [B, 169]
            for c in range(COUT):
                term = s_ut * wts[t][c]
                acc[c] = term if acc[c] is None else acc[c] + term
        for c in range(COUT):
            pooled[c] = acc[c] if pooled[c] is None else jnp.maximum(pooled[c], acc[c])

    # bias + ReLU hoisted out of the pool max (exact: bias const / ReLU monotone)
    for c in range(COUT):
        pooled[c] = jnp.maximum(pooled[c] + bias[c], 0.0)

    # ---- fc1 as 8 accumulated MXU matmuls (channel-major flatten is in w1 layout) ----
    h = None
    for c in range(COUT):
        part = jnp.dot(pooled[c], w1_ref[c], preferred_element_type=jnp.float32)
        h = part if h is None else h + part
    h = jnp.maximum(h + b1_ref[...], 0.0)

    # ---- fc2 + ReLU + fc3 ----
    h = jnp.maximum(
        jnp.dot(h, w2_ref[...], preferred_element_type=jnp.float32) + b2_ref[...], 0.0)
    out_ref[...] = jnp.dot(h, w3_ref[...], preferred_element_type=jnp.float32) + b3_ref[...]


# ------------------------------ wrapper glue -------------------------------- #

def _im2col_pool_slabs(x):
    """x: [B, 1, 28, 28] -> slabs [36, B, 169] with
    slabs[(uu*2+vv)*9 + di*3+dj, b, ph*13+pw] = x[b, 0, 2*ph+uu+di, 2*pw+vv+dj].
    Only 16 unique strided planes exist (start offsets 0..3 per spatial dim)."""
    xs = x[:, 0]                                 # [B, 28, 28]
    b = xs.shape[0]
    span = 2 * (POOL_OUT - 1) + 1                # 25 -> last index e+24
    planes = [[xs[:, e:e + span:2, f:f + span:2].reshape(b, S)
               for f in range(4)] for e in range(4)]
    order = []
    for uu in range(2):
        for vv in range(2):
            for di in range(3):
                for dj in range(3):
                    order.append(planes[uu + di][vv + dj])
    return jnp.stack(order, axis=0)              # [36, B, 169]


def init_params(key):
    """Deterministic synthetic parameters, PyTorch-default-style uniform init."""
    ks = jax.random.split(key, 8)

    def unif(k, shape, fan_in):
        bound = 1.0 / jnp.sqrt(jnp.float32(fan_in))
        return jax.random.uniform(k, shape, jnp.float32, -bound, bound)

    return {
        "conv_w": unif(ks[0], (COUT, CIN, 3, 3), CIN * 9),
        "conv_b": unif(ks[1], (COUT,), CIN * 9),
        "fc1_w": unif(ks[2], (H1, FLAT), FLAT),
        "fc1_b": unif(ks[3], (H1,), FLAT),
        "fc2_w": unif(ks[4], (H2, H1), H1),
        "fc2_b": unif(ks[5], (H2,), H1),
        "fc3_w": unif(ks[6], (H3, H2), H2),
        "fc3_b": unif(ks[7], (H3,), H2),
    }


def prepare_params(params):
    """One-time layout prep (run once, NOT per forward): transposes + the
    channel-major fc1 reshape that matches PyTorch's view(-1, 1352) order."""
    return {
        "conv_w": params["conv_w"].reshape(COUT, 9).T,      # [9, 8]  (tap, cout)
        "conv_b": params["conv_b"],                         # [8]
        "w1": params["fc1_w"].T.reshape(COUT, S, H1),       # [8, 169, 676]
        "b1": params["fc1_b"].reshape(1, H1),
        "w2": params["fc2_w"].T,                            # [676, 84]
        "b2": params["fc2_b"].reshape(1, H2),
        "w3": params["fc3_w"].T,                            # [84, 10]
        "b3": params["fc3_b"].reshape(1, H3),
    }


@jax.jit
def forward(prep, x):
    b = x.shape[0]
    slabs = _im2col_pool_slabs(x)                           # [36, B, 169]

    flops = 2 * b * (36 * S * COUT + FLAT * H1 + H1 * H2 + H2 * H3)
    bytes_accessed = 4 * (slabs.size + prep["w1"].size + prep["w2"].size
                          + prep["w3"].size + H1 + H2 + H3
                          + 9 * COUT + COUT + b * H3)

    vmem = pl.BlockSpec(memory_space=pltpu.MemorySpace.VMEM)
    smem = pl.BlockSpec(memory_space=pltpu.MemorySpace.SMEM)

    return pl.pallas_call(
        _fused_kernel,
        out_shape=jax.ShapeDtypeStruct((b, H3), jnp.float32),
        in_specs=[vmem, smem, smem, vmem, vmem, vmem, vmem, vmem, vmem],
        out_specs=vmem,
        cost_estimate=pl.CostEstimate(flops=flops, transcendentals=0,
                                      bytes_accessed=bytes_accessed),
    )(slabs, prep["conv_w"], prep["conv_b"],
      prep["w1"], prep["b1"], prep["w2"], prep["b2"], prep["w3"], prep["b3"])


def forward_ref(params, x):
    """Pure-JAX reference with PyTorch semantics (NCHW, valid conv)."""
    conv = lax.conv_general_dilated(
        x, params["conv_w"], window_strides=(1, 1), padding="VALID",
        dimension_numbers=("NCHW", "OIHW", "NCHW"))
    conv = conv + params["conv_b"].reshape(1, COUT, 1, 1)
    conv = jnp.maximum(conv, 0.0)
    pooled = lax.reduce_window(conv, -jnp.inf, lax.max,
                               (1, 1, 2, 2), (1, 1, 2, 2), "VALID")
    xf = pooled.reshape(x.shape[0], FLAT)                   # PyTorch view(-1, 1352)
    h = jnp.maximum(xf @ params["fc1_w"].T + params["fc1_b"], 0.0)
    h = jnp.maximum(h @ params["fc2_w"].T + params["fc2_b"], 0.0)
    return h @ params["fc3_w"].T + params["fc3_b"]


if __name__ == "__main__":
    key = jax.random.PRNGKey(0)
    pk, xk = jax.random.split(key)
    params = init_params(pk)
    x = jax.random.normal(xk, (B, CIN, H, W), jnp.float32)

    prep = prepare_params(params)        # one-time layout prep (not per call)
    out = forward(prep, x)
    out = jax.block_until_ready(out)

    ref = forward_ref(params, x)
    assert out.shape == (B, H3), out.shape
    assert jnp.allclose(out, ref, rtol=1e-3, atol=1e-3), \
        float(jnp.max(jnp.abs(out - ref)))
    print("KERNEL_OK")
</pallas_src>

<mosaic_0001>
module attributes {stable_mosaic.version = 11 : i64} {
  func.func @_fused_kernel(%arg0: memref<36x2x169xf32, #tpu.memory_space<vmem>>, %arg1: memref<9x8xf32, #tpu.memory_space<smem>>, %arg2: memref<8xf32, #tpu.memory_space<smem>>, %arg3: memref<8x169x676xf32, #tpu.memory_space<vmem>>, %arg4: memref<1x676xf32, #tpu.memory_space<vmem>>, %arg5: memref<676x84xf32, #tpu.memory_space<vmem>>, %arg6: memref<1x84xf32, #tpu.memory_space<vmem>>, %arg7: memref<84x10xf32, #tpu.memory_space<vmem>>, %arg8: memref<1x10xf32, #tpu.memory_space<vmem>>, %arg9: memref<2x10xf32, #tpu.memory_space<vmem>>) attributes {dimension_semantics = [], scalar_prefetch = 0 : i64, scratch_operands = 0 : i64, tpu.core_type = #tpu.core_type<tc>} {
    %c0 = arith.constant 0 : index
    %c0_0 = arith.constant 0 : index
    %0 = memref.load %arg1[%c0, %c0_0] : memref<9x8xf32, #tpu.memory_space<smem>>
    %c0_1 = arith.constant 0 : index
    %c1 = arith.constant 1 : index
    %1 = memref.load %arg1[%c0_1, %c1] : memref<9x8xf32, #tpu.memory_space<smem>>
    %c0_2 = arith.constant 0 : index
    %c2 = arith.constant 2 : index
    %2 = memref.load %arg1[%c0_2, %c2] : memref<9x8xf32, #tpu.memory_space<smem>>
    %c0_3 = arith.constant 0 : index
    %c3 = arith.constant 3 : index
    %3 = memref.load %arg1[%c0_3, %c3] : memref<9x8xf32, #tpu.memory_space<smem>>
    %c0_4 = arith.constant 0 : index
    %c4 = arith.constant 4 : index
    %4 = memref.load %arg1[%c0_4, %c4] : memref<9x8xf32, #tpu.memory_space<smem>>
    %c0_5 = arith.constant 0 : index
    %c5 = arith.constant 5 : index
    %5 = memref.load %arg1[%c0_5, %c5] : memref<9x8xf32, #tpu.memory_space<smem>>
    %c0_6 = arith.constant 0 : index
    %c6 = arith.constant 6 : index
    %6 = memref.load %arg1[%c0_6, %c6] : memref<9x8xf32, #tpu.memory_space<smem>>
    %c0_7 = arith.constant 0 : index
    %c7 = arith.constant 7 : index
    %7 = memref.load %arg1[%c0_7, %c7] : memref<9x8xf32, #tpu.memory_space<smem>>
    %c1_8 = arith.constant 1 : index
    %c0_9 = arith.constant 0 : index
    %8 = memref.load %arg1[%c1_8, %c0_9] : memref<9x8xf32, #tpu.memory_space<smem>>
    %c1_10 = arith.constant 1 : index
    %c1_11 = arith.constant 1 : index
    %9 = memref.load %arg1[%c1_10, %c1_11] : memref<9x8xf32, #tpu.memory_space<smem>>
    %c1_12 = arith.constant 1 : index
    %c2_13 = arith.constant 2 : index
    %10 = memref.load %arg1[%c1_12, %c2_13] : memref<9x8xf32, #tpu.memory_space<smem>>
    %c1_14 = arith.constant 1 : index
    %c3_15 = arith.constant 3 : index
    %11 = memref.load %arg1[%c1_14, %c3_15] : memref<9x8xf32, #tpu.memory_space<smem>>
    %c1_16 = arith.constant 1 : index
    %c4_17 = arith.constant 4 : index
    %12 = memref.load %arg1[%c1_16, %c4_17] : memref<9x8xf32, #tpu.memory_space<smem>>
    %c1_18 = arith.constant 1 : index
    %c5_19 = arith.constant 5 : index
    %13 = memref.load %arg1[%c1_18, %c5_19] : memref<9x8xf32, #tpu.memory_space<smem>>
    %c1_20 = arith.constant 1 : index
    %c6_21 = arith.constant 6 : index
    %14 = memref.load %arg1[%c1_20, %c6_21] : memref<9x8xf32, #tpu.memory_space<smem>>
    %c1_22 = arith.constant 1 : index
    %c7_23 = arith.constant 7 : index
    %15 = memref.load %arg1[%c1_22, %c7_23] : memref<9x8xf32, #tpu.memory_space<smem>>
    %c2_24 = arith.constant 2 : index
    %c0_25 = arith.constant 0 : index
    %16 = memref.load %arg1[%c2_24, %c0_25] : memref<9x8xf32, #tpu.memory_space<smem>>
    %c2_26 = arith.constant 2 : index
    %c1_27 = arith.constant 1 : index
    %17 = memref.load %arg1[%c2_26, %c1_27] : memref<9x8xf32, #tpu.memory_space<smem>>
    %c2_28 = arith.constant 2 : index
    %c2_29 = arith.constant 2 : index
    %18 = memref.load %arg1[%c2_28, %c2_29] : memref<9x8xf32, #tpu.memory_space<smem>>
    %c2_30 = arith.constant 2 : index
    %c3_31 = arith.constant 3 : index
    %19 = memref.load %arg1[%c2_30, %c3_31] : memref<9x8xf32, #tpu.memory_space<smem>>
    %c2_32 = arith.constant 2 : index
    %c4_33 = arith.constant 4 : index
    %20 = memref.load %arg1[%c2_32, %c4_33] : memref<9x8xf32, #tpu.memory_space<smem>>
    %c2_34 = arith.constant 2 : index
    %c5_35 = arith.constant 5 : index
    %21 = memref.load %arg1[%c2_34, %c5_35] : memref<9x8xf32, #tpu.memory_space<smem>>
    %c2_36 = arith.constant 2 : index
    %c6_37 = arith.constant 6 : index
    %22 = memref.load %arg1[%c2_36, %c6_37] : memref<9x8xf32, #tpu.memory_space<smem>>
    %c2_38 = arith.constant 2 : index
    %c7_39 = arith.constant 7 : index
    %23 = memref.load %arg1[%c2_38, %c7_39] : memref<9x8xf32, #tpu.memory_space<smem>>
    %c3_40 = arith.constant 3 : index
    %c0_41 = arith.constant 0 : index
    %24 = memref.load %arg1[%c3_40, %c0_41] : memref<9x8xf32, #tpu.memory_space<smem>>
    %c3_42 = arith.constant 3 : index
    %c1_43 = arith.constant 1 : index
    %25 = memref.load %arg1[%c3_42, %c1_43] : memref<9x8xf32, #tpu.memory_space<smem>>
    %c3_44 = arith.constant 3 : index
    %c2_45 = arith.constant 2 : index
    %26 = memref.load %arg1[%c3_44, %c2_45] : memref<9x8xf32, #tpu.memory_space<smem>>
    %c3_46 = arith.constant 3 : index
    %c3_47 = arith.constant 3 : index
    %27 = memref.load %arg1[%c3_46, %c3_47] : memref<9x8xf32, #tpu.memory_space<smem>>
    %c3_48 = arith.constant 3 : index
    %c4_49 = arith.constant 4 : index
    %28 = memref.load %arg1[%c3_48, %c4_49] : memref<9x8xf32, #tpu.memory_space<smem>>
    %c3_50 = arith.constant 3 : index
    %c5_51 = arith.constant 5 : index
    %29 = memref.load %arg1[%c3_50, %c5_51] : memref<9x8xf32, #tpu.memory_space<smem>>
    %c3_52 = arith.constant 3 : index
    %c6_53 = arith.constant 6 : index
    %30 = memref.load %arg1[%c3_52, %c6_53] : memref<9x8xf32, #tpu.memory_space<smem>>
    %c3_54 = arith.constant 3 : index
    %c7_55 = arith.constant 7 : index
    %31 = memref.load %arg1[%c3_54, %c7_55] : memref<9x8xf32, #tpu.memory_space<smem>>
    %c4_56 = arith.constant 4 : index
    %c0_57 = arith.constant 0 : index
    %32 = memref.load %arg1[%c4_56, %c0_57] : memref<9x8xf32, #tpu.memory_space<smem>>
    %c4_58 = arith.constant 4 : index
    %c1_59 = arith.constant 1 : index
    %33 = memref.load %arg1[%c4_58, %c1_59] : memref<9x8xf32, #tpu.memory_space<smem>>
    %c4_60 = arith.constant 4 : index
    %c2_61 = arith.constant 2 : index
    %34 = memref.load %arg1[%c4_60, %c2_61] : memref<9x8xf32, #tpu.memory_space<smem>>
    %c4_62 = arith.constant 4 : index
    %c3_63 = arith.constant 3 : index
    %35 = memref.load %arg1[%c4_62, %c3_63] : memref<9x8xf32, #tpu.memory_space<smem>>
    %c4_64 = arith.constant 4 : index
    %c4_65 = arith.constant 4 : index
    %36 = memref.load %arg1[%c4_64, %c4_65] : memref<9x8xf32, #tpu.memory_space<smem>>
    %c4_66 = arith.constant 4 : index
    %c5_67 = arith.constant 5 : index
    %37 = memref.load %arg1[%c4_66, %c5_67] : memref<9x8xf32, #tpu.memory_space<smem>>
    %c4_68 = arith.constant 4 : index
    %c6_69 = arith.constant 6 : index
    %38 = memref.load %arg1[%c4_68, %c6_69] : memref<9x8xf32, #tpu.memory_space<smem>>
    %c4_70 = arith.constant 4 : index
    %c7_71 = arith.constant 7 : index
    %39 = memref.load %arg1[%c4_70, %c7_71] : memref<9x8xf32, #tpu.memory_space<smem>>
    %c5_72 = arith.constant 5 : index
    %c0_73 = arith.constant 0 : index
    %40 = memref.load %arg1[%c5_72, %c0_73] : memref<9x8xf32, #tpu.memory_space<smem>>
    %c5_74 = arith.constant 5 : index
    %c1_75 = arith.constant 1 : index
    %41 = memref.load %arg1[%c5_74, %c1_75] : memref<9x8xf32, #tpu.memory_space<smem>>
    %c5_76 = arith.constant 5 : index
    %c2_77 = arith.constant 2 : index
    %42 = memref.load %arg1[%c5_76, %c2_77] : memref<9x8xf32, #tpu.memory_space<smem>>
    %c5_78 = arith.constant 5 : index
    %c3_79 = arith.constant 3 : index
    %43 = memref.load %arg1[%c5_78, %c3_79] : memref<9x8xf32, #tpu.memory_space<smem>>
    %c5_80 = arith.constant 5 : index
    %c4_81 = arith.constant 4 : index
    %44 = memref.load %arg1[%c5_80, %c4_81] : memref<9x8xf32, #tpu.memory_space<smem>>
    %c5_82 = arith.constant 5 : index
    %c5_83 = arith.constant 5 : index
    %45 = memref.load %arg1[%c5_82, %c5_83] : memref<9x8xf32, #tpu.memory_space<smem>>
    %c5_84 = arith.constant 5 : index
    %c6_85 = arith.constant 6 : index
    %46 = memref.load %arg1[%c5_84, %c6_85] : memref<9x8xf32, #tpu.memory_space<smem>>
    %c5_86 = arith.constant 5 : index
    %c7_87 = arith.constant 7 : index
    %47 = memref.load %arg1[%c5_86, %c7_87] : memref<9x8xf32, #tpu.memory_space<smem>>
    %c6_88 = arith.constant 6 : index
    %c0_89 = arith.constant 0 : index
    %48 = memref.load %arg1[%c6_88, %c0_89] : memref<9x8xf32, #tpu.memory_space<smem>>
    %c6_90 = arith.constant 6 : index
    %c1_91 = arith.constant 1 : index
    %49 = memref.load %arg1[%c6_90, %c1_91] : memref<9x8xf32, #tpu.memory_space<smem>>
    %c6_92 = arith.constant 6 : index
    %c2_93 = arith.constant 2 : index
    %50 = memref.load %arg1[%c6_92, %c2_93] : memref<9x8xf32, #tpu.memory_space<smem>>
    %c6_94 = arith.constant 6 : index
    %c3_95 = arith.constant 3 : index
    %51 = memref.load %arg1[%c6_94, %c3_95] : memref<9x8xf32, #tpu.memory_space<smem>>
    %c6_96 = arith.constant 6 : index
    %c4_97 = arith.constant 4 : index
    %52 = memref.load %arg1[%c6_96, %c4_97] : memref<9x8xf32, #tpu.memory_space<smem>>
    %c6_98 = arith.constant 6 : index
    %c5_99 = arith.constant 5 : index
    %53 = memref.load %arg1[%c6_98, %c5_99] : memref<9x8xf32, #tpu.memory_space<smem>>
    %c6_100 = arith.constant 6 : index
    %c6_101 = arith.constant 6 : index
    %54 = memref.load %arg1[%c6_100, %c6_101] : memref<9x8xf32, #tpu.memory_space<smem>>
    %c6_102 = arith.constant 6 : index
    %c7_103 = arith.constant 7 : index
    %55 = memref.load %arg1[%c6_102, %c7_103] : memref<9x8xf32, #tpu.memory_space<smem>>
    %c7_104 = arith.constant 7 : index
    %c0_105 = arith.constant 0 : index
    %56 = memref.load %arg1[%c7_104, %c0_105] : memref<9x8xf32, #tpu.memory_space<smem>>
    %c7_106 = arith.constant 7 : index
    %c1_107 = arith.constant 1 : index
    %57 = memref.load %arg1[%c7_106, %c1_107] : memref<9x8xf32, #tpu.memory_space<smem>>
    %c7_108 = arith.constant 7 : index
    %c2_109 = arith.constant 2 : index
    %58 = memref.load %arg1[%c7_108, %c2_109] : memref<9x8xf32, #tpu.memory_space<smem>>
    %c7_110 = arith.constant 7 : index
    %c3_111 = arith.constant 3 : index
    %59 = memref.load %arg1[%c7_110, %c3_111] : memref<9x8xf32, #tpu.memory_space<smem>>
    %c7_112 = arith.constant 7 : index
    %c4_113 = arith.constant 4 : index
    %60 = memref.load %arg1[%c7_112, %c4_113] : memref<9x8xf32, #tpu.memory_space<smem>>
    %c7_114 = arith.constant 7 : index
    %c5_115 = arith.constant 5 : index
    %61 = memref.load %arg1[%c7_114, %c5_115] : memref<9x8xf32, #tpu.memory_space<smem>>
    %c7_116 = arith.constant 7 : index
    %c6_117 = arith.constant 6 : index
    %62 = memref.load %arg1[%c7_116, %c6_117] : memref<9x8xf32, #tpu.memory_space<smem>>
    %c7_118 = arith.constant 7 : index
    %c7_119 = arith.constant 7 : index
    %63 = memref.load %arg1[%c7_118, %c7_119] : memref<9x8xf32, #tpu.memory_space<smem>>
    %c8 = arith.constant 8 : index
    %c0_120 = arith.constant 0 : index
    %64 = memref.load %arg1[%c8, %c0_120] : memref<9x8xf32, #tpu.memory_space<smem>>
    %c8_121 = arith.constant 8 : index
    %c1_122 = arith.constant 1 : index
    %65 = memref.load %arg1[%c8_121, %c1_122] : memref<9x8xf32, #tpu.memory_space<smem>>
    %c8_123 = arith.constant 8 : index
    %c2_124 = arith.constant 2 : index
    %66 = memref.load %arg1[%c8_123, %c2_124] : memref<9x8xf32, #tpu.memory_space<smem>>
    %c8_125 = arith.constant 8 : index
    %c3_126 = arith.constant 3 : index
    %67 = memref.load %arg1[%c8_125, %c3_126] : memref<9x8xf32, #tpu.memory_space<smem>>
    %c8_127 = arith.constant 8 : index
    %c4_128 = arith.constant 4 : index
    %68 = memref.load %arg1[%c8_127, %c4_128] : memref<9x8xf32, #tpu.memory_space<smem>>
    %c8_129 = arith.constant 8 : index
    %c5_130 = arith.constant 5 : index
    %69 = memref.load %arg1[%c8_129, %c5_130] : memref<9x8xf32, #tpu.memory_space<smem>>
    %c8_131 = arith.constant 8 : index
    %c6_132 = arith.constant 6 : index
    %70 = memref.load %arg1[%c8_131, %c6_132] : memref<9x8xf32, #tpu.memory_space<smem>>
    %c8_133 = arith.constant 8 : index
    %c7_134 = arith.constant 7 : index
    %71 = memref.load %arg1[%c8_133, %c7_134] : memref<9x8xf32, #tpu.memory_space<smem>>
    %c0_135 = arith.constant 0 : index
    %72 = memref.load %arg2[%c0_135] : memref<8xf32, #tpu.memory_space<smem>>
    %c1_136 = arith.constant 1 : index
    %73 = memref.load %arg2[%c1_136] : memref<8xf32, #tpu.memory_space<smem>>
    %c2_137 = arith.constant 2 : index
    %74 = memref.load %arg2[%c2_137] : memref<8xf32, #tpu.memory_space<smem>>
    %c3_138 = arith.constant 3 : index
    %75 = memref.load %arg2[%c3_138] : memref<8xf32, #tpu.memory_space<smem>>
    %c4_139 = arith.constant 4 : index
    %76 = memref.load %arg2[%c4_139] : memref<8xf32, #tpu.memory_space<smem>>
    %c5_140 = arith.constant 5 : index
    %77 = memref.load %arg2[%c5_140] : memref<8xf32, #tpu.memory_space<smem>>
    %c6_141 = arith.constant 6 : index
    %78 = memref.load %arg2[%c6_141] : memref<8xf32, #tpu.memory_space<smem>>
    %c7_142 = arith.constant 7 : index
    %79 = memref.load %arg2[%c7_142] : memref<8xf32, #tpu.memory_space<smem>>
    %c0_143 = arith.constant 0 : index
    %c0_144 = arith.constant 0 : index
    %c0_145 = arith.constant 0 : index
    %80 = vector.load %arg0[%c0_143, %c0_144, %c0_145] : memref<36x2x169xf32, #tpu.memory_space<vmem>>, vector<1x2x169xf32>
    %81 = vector.shape_cast %80 : vector<1x2x169xf32> to vector<2x169xf32>
    %82 = vector.broadcast %0 : f32 to vector<2x169xf32>
    %83 = arith.mulf %81, %82 : vector<2x169xf32>
    %84 = vector.broadcast %1 : f32 to vector<2x169xf32>
    %85 = arith.mulf %81, %84 : vector<2x169xf32>
    %86 = vector.broadcast %2 : f32 to vector<2x169xf32>
    %87 = arith.mulf %81, %86 : vector<2x169xf32>
    %88 = vector.broadcast %3 : f32 to vector<2x169xf32>
    %89 = arith.mulf %81, %88 : vector<2x169xf32>
    %90 = vector.broadcast %4 : f32 to vector<2x169xf32>
    %91 = arith.mulf %81, %90 : vector<2x169xf32>
    %92 = vector.broadcast %5 : f32 to vector<2x169xf32>
    %93 = arith.mulf %81, %92 : vector<2x169xf32>
    %94 = vector.broadcast %6 : f32 to vector<2x169xf32>
    %95 = arith.mulf %81, %94 : vector<2x169xf32>
    %96 = vector.broadcast %7 : f32 to vector<2x169xf32>
    %97 = arith.mulf %81, %96 : vector<2x169xf32>
    %c1_146 = arith.constant 1 : index
    %c0_147 = arith.constant 0 : index
    %c0_148 = arith.constant 0 : index
    %98 = vector.load %arg0[%c1_146, %c0_147, %c0_148] : memref<36x2x169xf32, #tpu.memory_space<vmem>>, vector<1x2x169xf32>
    %99 = vector.shape_cast %98 : vector<1x2x169xf32> to vector<2x169xf32>
    %100 = vector.broadcast %8 : f32 to vector<2x169xf32>
    %101 = arith.mulf %99, %100 : vector<2x169xf32>
    %102 = arith.addf %83, %101 : vector<2x169xf32>
    %103 = vector.broadcast %9 : f32 to vector<2x169xf32>
    %104 = arith.mulf %99, %103 : vector<2x169xf32>
    %105 = arith.addf %85, %104 : vector<2x169xf32>
    %106 = vector.broadcast %10 : f32 to vector<2x169xf32>
    %107 = arith.mulf %99, %106 : vector<2x169xf32>
    %108 = arith.addf %87, %107 : vector<2x169xf32>
    %109 = vector.broadcast %11 : f32 to vector<2x169xf32>
    %110 = arith.mulf %99, %109 : vector<2x169xf32>
    %111 = arith.addf %89, %110 : vector<2x169xf32>
    %112 = vector.broadcast %12 : f32 to vector<2x169xf32>
    %113 = arith.mulf %99, %112 : vector<2x169xf32>
    %114 = arith.addf %91, %113 : vector<2x169xf32>
    %115 = vector.broadcast %13 : f32 to vector<2x169xf32>
    %116 = arith.mulf %99, %115 : vector<2x169xf32>
    %117 = arith.addf %93, %116 : vector<2x169xf32>
    %118 = vector.broadcast %14 : f32 to vector<2x169xf32>
    %119 = arith.mulf %99, %118 : vector<2x169xf32>
    %120 = arith.addf %95, %119 : vector<2x169xf32>
    %121 = vector.broadcast %15 : f32 to vector<2x169xf32>
    %122 = arith.mulf %99, %121 : vector<2x169xf32>
    %123 = arith.addf %97, %122 : vector<2x169xf32>
    %c2_149 = arith.constant 2 : index
    %c0_150 = arith.constant 0 : index
    %c0_151 = arith.constant 0 : index
    %124 = vector.load %arg0[%c2_149, %c0_150, %c0_151] : memref<36x2x169xf32, #tpu.memory_space<vmem>>, vector<1x2x169xf32>
    %125 = vector.shape_cast %124 : vector<1x2x169xf32> to vector<2x169xf32>
    %126 = vector.broadcast %16 : f32 to vector<2x169xf32>
    %127 = arith.mulf %125, %126 : vector<2x169xf32>
    %128 = arith.addf %102, %127 : vector<2x169xf32>
    %129 = vector.broadcast %17 : f32 to vector<2x169xf32>
    %130 = arith.mulf %125, %129 : vector<2x169xf32>
    %131 = arith.addf %105, %130 : vector<2x169xf32>
    %132 = vector.broadcast %18 : f32 to vector<2x169xf32>
    %133 = arith.mulf %125, %132 : vector<2x169xf32>
    %134 = arith.addf %108, %133 : vector<2x169xf32>
    %135 = vector.broadcast %19 : f32 to vector<2x169xf32>
    %136 = arith.mulf %125, %135 : vector<2x169xf32>
    %137 = arith.addf %111, %136 : vector<2x169xf32>
    %138 = vector.broadcast %20 : f32 to vector<2x169xf32>
    %139 = arith.mulf %125, %138 : vector<2x169xf32>
    %140 = arith.addf %114, %139 : vector<2x169xf32>
    %141 = vector.broadcast %21 : f32 to vector<2x169xf32>
    %142 = arith.mulf %125, %141 : vector<2x169xf32>
    %143 = arith.addf %117, %142 : vector<2x169xf32>
    %144 = vector.broadcast %22 : f32 to vector<2x169xf32>
    %145 = arith.mulf %125, %144 : vector<2x169xf32>
    %146 = arith.addf %120, %145 : vector<2x169xf32>
    %147 = vector.broadcast %23 : f32 to vector<2x169xf32>
    %148 = arith.mulf %125, %147 : vector<2x169xf32>
    %149 = arith.addf %123, %148 : vector<2x169xf32>
    %c3_152 = arith.constant 3 : index
    %c0_153 = arith.constant 0 : index
    %c0_154 = arith.constant 0 : index
    %150 = vector.load %arg0[%c3_152, %c0_153, %c0_154] : memref<36x2x169xf32, #tpu.memory_space<vmem>>, vector<1x2x169xf32>
    %151 = vector.shape_cast %150 : vector<1x2x169xf32> to vector<2x169xf32>
    %152 = vector.broadcast %24 : f32 to vector<2x169xf32>
    %153 = arith.mulf %151, %152 : vector<2x169xf32>
    %154 = arith.addf %128, %153 : vector<2x169xf32>
    %155 = vector.broadcast %25 : f32 to vector<2x169xf32>
    %156 = arith.mulf %151, %155 : vector<2x169xf32>
    %157 = arith.addf %131, %156 : vector<2x169xf32>
    %158 = vector.broadcast %26 : f32 to vector<2x169xf32>
    %159 = arith.mulf %151, %158 : vector<2x169xf32>
    %160 = arith.addf %134, %159 : vector<2x169xf32>
    %161 = vector.broadcast %27 : f32 to vector<2x169xf32>
    %162 = arith.mulf %151, %161 : vector<2x169xf32>
    %163 = arith.addf %137, %162 : vector<2x169xf32>
    %164 = vector.broadcast %28 : f32 to vector<2x169xf32>
    %165 = arith.mulf %151, %164 : vector<2x169xf32>
    %166 = arith.addf %140, %165 : vector<2x169xf32>
    %167 = vector.broadcast %29 : f32 to vector<2x169xf32>
    %168 = arith.mulf %151, %167 : vector<2x169xf32>
    %169 = arith.addf %143, %168 : vector<2x169xf32>
    %170 = vector.broadcast %30 : f32 to vector<2x169xf32>
    %171 = arith.mulf %151, %170 : vector<2x169xf32>
    %172 = arith.addf %146, %171 : vector<2x169xf32>
    %173 = vector.broadcast %31 : f32 to vector<2x169xf32>
    %174 = arith.mulf %151, %173 : vector<2x169xf32>
    %175 = arith.addf %149, %174 : vector<2x169xf32>
    %c4_155 = arith.constant 4 : index
    %c0_156 = arith.constant 0 : index
    %c0_157 = arith.constant 0 : index
    %176 = vector.load %arg0[%c4_155, %c0_156, %c0_157] : memref<36x2x169xf32, #tpu.memory_space<vmem>>, vector<1x2x169xf32>
    %177 = vector.shape_cast %176 : vector<1x2x169xf32> to vector<2x169xf32>
    %178 = vector.broadcast %32 : f32 to vector<2x169xf32>
    %179 = arith.mulf %177, %178 : vector<2x169xf32>
    %180 = arith.addf %154, %179 : vector<2x169xf32>
    %181 = vector.broadcast %33 : f32 to vector<2x169xf32>
    %182 = arith.mulf %177, %181 : vector<2x169xf32>
    %183 = arith.addf %157, %182 : vector<2x169xf32>
    %184 = vector.broadcast %34 : f32 to vector<2x169xf32>
    %185 = arith.mulf %177, %184 : vector<2x169xf32>
    %186 = arith.addf %160, %185 : vector<2x169xf32>
    %187 = vector.broadcast %35 : f32 to vector<2x169xf32>
    %188 = arith.mulf %177, %187 : vector<2x169xf32>
    %189 = arith.addf %163, %188 : vector<2x169xf32>
    %190 = vector.broadcast %36 : f32 to vector<2x169xf32>
    %191 = arith.mulf %177, %190 : vector<2x169xf32>
    %192 = arith.addf %166, %191 : vector<2x169xf32>
    %193 = vector.broadcast %37 : f32 to vector<2x169xf32>
    %194 = arith.mulf %177, %193 : vector<2x169xf32>
    %195 = arith.addf %169, %194 : vector<2x169xf32>
    %196 = vector.broadcast %38 : f32 to vector<2x169xf32>
    %197 = arith.mulf %177, %196 : vector<2x169xf32>
    %198 = arith.addf %172, %197 : vector<2x169xf32>
    %199 = vector.broadcast %39 : f32 to vector<2x169xf32>
    %200 = arith.mulf %177, %199 : vector<2x169xf32>
    %201 = arith.addf %175, %200 : vector<2x169xf32>
    %c5_158 = arith.constant 5 : index
    %c0_159 = arith.constant 0 : index
    %c0_160 = arith.constant 0 : index
    %202 = vector.load %arg0[%c5_158, %c0_159, %c0_160] : memref<36x2x169xf32, #tpu.memory_space<vmem>>, vector<1x2x169xf32>
    %203 = vector.shape_cast %202 : vector<1x2x169xf32> to vector<2x169xf32>
    %204 = vector.broadcast %40 : f32 to vector<2x169xf32>
    %205 = arith.mulf %203, %204 : vector<2x169xf32>
    %206 = arith.addf %180, %205 : vector<2x169xf32>
    %207 = vector.broadcast %41 : f32 to vector<2x169xf32>
    %208 = arith.mulf %203, %207 : vector<2x169xf32>
    %209 = arith.addf %183, %208 : vector<2x169xf32>
    %210 = vector.broadcast %42 : f32 to vector<2x169xf32>
    %211 = arith.mulf %203, %210 : vector<2x169xf32>
    %212 = arith.addf %186, %211 : vector<2x169xf32>
    %213 = vector.broadcast %43 : f32 to vector<2x169xf32>
    %214 = arith.mulf %203, %213 : vector<2x169xf32>
    %215 = arith.addf %189, %214 : vector<2x169xf32>
    %216 = vector.broadcast %44 : f32 to vector<2x169xf32>
    %217 = arith.mulf %203, %216 : vector<2x169xf32>
    %218 = arith.addf %192, %217 : vector<2x169xf32>
    %219 = vector.broadcast %45 : f32 to vector<2x169xf32>
    %220 = arith.mulf %203, %219 : vector<2x169xf32>
    %221 = arith.addf %195, %220 : vector<2x169xf32>
    %222 = vector.broadcast %46 : f32 to vector<2x169xf32>
    %223 = arith.mulf %203, %222 : vector<2x169xf32>
    %224 = arith.addf %198, %223 : vector<2x169xf32>
    %225 = vector.broadcast %47 : f32 to vector<2x169xf32>
    %226 = arith.mulf %203, %225 : vector<2x169xf32>
    %227 = arith.addf %201, %226 : vector<2x169xf32>
    %c6_161 = arith.constant 6 : index
    %c0_162 = arith.constant 0 : index
    %c0_163 = arith.constant 0 : index
    %228 = vector.load %arg0[%c6_161, %c0_162, %c0_163] : memref<36x2x169xf32, #tpu.memory_space<vmem>>, vector<1x2x169xf32>
    %229 = vector.shape_cast %228 : vector<1x2x169xf32> to vector<2x169xf32>
    %230 = vector.broadcast %48 : f32 to vector<2x169xf32>
    %231 = arith.mulf %229, %230 : vector<2x169xf32>
    %232 = arith.addf %206, %231 : vector<2x169xf32>
    %233 = vector.broadcast %49 : f32 to vector<2x169xf32>
    %234 = arith.mulf %229, %233 : vector<2x169xf32>
    %235 = arith.addf %209, %234 : vector<2x169xf32>
    %236 = vector.broadcast %50 : f32 to vector<2x169xf32>
    %237 = arith.mulf %229, %236 : vector<2x169xf32>
    %238 = arith.addf %212, %237 : vector<2x169xf32>
    %239 = vector.broadcast %51 : f32 to vector<2x169xf32>
    %240 = arith.mulf %229, %239 : vector<2x169xf32>
    %241 = arith.addf %215, %240 : vector<2x169xf32>
    %242 = vector.broadcast %52 : f32 to vector<2x169xf32>
    %243 = arith.mulf %229, %242 : vector<2x169xf32>
    %244 = arith.addf %218, %243 : vector<2x169xf32>
    %245 = vector.broadcast %53 : f32 to vector<2x169xf32>
    %246 = arith.mulf %229, %245 : vector<2x169xf32>
    %247 = arith.addf %221, %246 : vector<2x169xf32>
    %248 = vector.broadcast %54 : f32 to vector<2x169xf32>
    %249 = arith.mulf %229, %248 : vector<2x169xf32>
    %250 = arith.addf %224, %249 : vector<2x169xf32>
    %251 = vector.broadcast %55 : f32 to vector<2x169xf32>
    %252 = arith.mulf %229, %251 : vector<2x169xf32>
    %253 = arith.addf %227, %252 : vector<2x169xf32>
    %c7_164 = arith.constant 7 : index
    %c0_165 = arith.constant 0 : index
    %c0_166 = arith.constant 0 : index
    %254 = vector.load %arg0[%c7_164, %c0_165, %c0_166] : memref<36x2x169xf32, #tpu.memory_space<vmem>>, vector<1x2x169xf32>
    %255 = vector.shape_cast %254 : vector<1x2x169xf32> to vector<2x169xf32>
    %256 = vector.broadcast %56 : f32 to vector<2x169xf32>
    %257 = arith.mulf %255, %256 : vector<2x169xf32>
    %258 = arith.addf %232, %257 : vector<2x169xf32>
    %259 = vector.broadcast %57 : f32 to vector<2x169xf32>
    %260 = arith.mulf %255, %259 : vector<2x169xf32>
    %261 = arith.addf %235, %260 : vector<2x169xf32>
    %262 = vector.broadcast %58 : f32 to vector<2x169xf32>
    %263 = arith.mulf %255, %262 : vector<2x169xf32>
    %264 = arith.addf %238, %263 : vector<2x169xf32>
    %265 = vector.broadcast %59 : f32 to vector<2x169xf32>
    %266 = arith.mulf %255, %265 : vector<2x169xf32>
    %267 = arith.addf %241, %266 : vector<2x169xf32>
    %268 = vector.broadcast %60 : f32 to vector<2x169xf32>
    %269 = arith.mulf %255, %268 : vector<2x169xf32>
    %270 = arith.addf %244, %269 : vector<2x169xf32>
    %271 = vector.broadcast %61 : f32 to vector<2x169xf32>
    %272 = arith.mulf %255, %271 : vector<2x169xf32>
    %273 = arith.addf %247, %272 : vector<2x169xf32>
    %274 = vector.broadcast %62 : f32 to vector<2x169xf32>
    %275 = arith.mulf %255, %274 : vector<2x169xf32>
    %276 = arith.addf %250, %275 : vector<2x169xf32>
    %277 = vector.broadcast %63 : f32 to vector<2x169xf32>
    %278 = arith.mulf %255, %277 : vector<2x169xf32>
    %279 = arith.addf %253, %278 : vector<2x169xf32>
    %c8_167 = arith.constant 8 : index
    %c0_168 = arith.constant 0 : index
    %c0_169 = arith.constant 0 : index
    %280 = vector.load %arg0[%c8_167, %c0_168, %c0_169] : memref<36x2x169xf32, #tpu.memory_space<vmem>>, vector<1x2x169xf32>
    %281 = vector.shape_cast %280 : vector<1x2x169xf32> to vector<2x169xf32>
    %282 = vector.broadcast %64 : f32 to vector<2x169xf32>
    %283 = arith.mulf %281, %282 : vector<2x169xf32>
    %284 = arith.addf %258, %283 : vector<2x169xf32>
    %285 = vector.broadcast %65 : f32 to vector<2x169xf32>
    %286 = arith.mulf %281, %285 : vector<2x169xf32>
    %287 = arith.addf %261, %286 : vector<2x169xf32>
    %288 = vector.broadcast %66 : f32 to vector<2x169xf32>
    %289 = arith.mulf %281, %288 : vector<2x169xf32>
    %290 = arith.addf %264, %289 : vector<2x169xf32>
    %291 = vector.broadcast %67 : f32 to vector<2x169xf32>
    %292 = arith.mulf %281, %291 : vector<2x169xf32>
    %293 = arith.addf %267, %292 : vector<2x169xf32>
    %294 = vector.broadcast %68 : f32 to vector<2x169xf32>
    %295 = arith.mulf %281, %294 : vector<2x169xf32>
    %296 = arith.addf %270, %295 : vector<2x169xf32>
    %297 = vector.broadcast %69 : f32 to vector<2x169xf32>
    %298 = arith.mulf %281, %297 : vector<2x169xf32>
    %299 = arith.addf %273, %298 : vector<2x169xf32>
    %300 = vector.broadcast %70 : f32 to vector<2x169xf32>
    %301 = arith.mulf %281, %300 : vector<2x169xf32>
    %302 = arith.addf %276, %301 : vector<2x169xf32>
    %303 = vector.broadcast %71 : f32 to vector<2x169xf32>
    %304 = arith.mulf %281, %303 : vector<2x169xf32>
    %305 = arith.addf %279, %304 : vector<2x169xf32>
    %c9 = arith.constant 9 : index
    %c0_170 = arith.constant 0 : index
    %c0_171 = arith.constant 0 : index
    %306 = vector.load %arg0[%c9, %c0_170, %c0_171] : memref<36x2x169xf32, #tpu.memory_space<vmem>>, vector<1x2x169xf32>
    %307 = vector.shape_cast %306 : vector<1x2x169xf32> to vector<2x169xf32>
    %308 = vector.broadcast %0 : f32 to vector<2x169xf32>
    %309 = arith.mulf %307, %308 : vector<2x169xf32>
    %310 = vector.broadcast %1 : f32 to vector<2x169xf32>
    %311 = arith.mulf %307, %310 : vector<2x169xf32>
    %312 = vector.broadcast %2 : f32 to vector<2x169xf32>
    %313 = arith.mulf %307, %312 : vector<2x169xf32>
    %314 = vector.broadcast %3 : f32 to vector<2x169xf32>
    %315 = arith.mulf %307, %314 : vector<2x169xf32>
    %316 = vector.broadcast %4 : f32 to vector<2x169xf32>
    %317 = arith.mulf %307, %316 : vector<2x169xf32>
    %318 = vector.broadcast %5 : f32 to vector<2x169xf32>
    %319 = arith.mulf %307, %318 : vector<2x169xf32>
    %320 = vector.broadcast %6 : f32 to vector<2x169xf32>
    %321 = arith.mulf %307, %320 : vector<2x169xf32>
    %322 = vector.broadcast %7 : f32 to vector<2x169xf32>
    %323 = arith.mulf %307, %322 : vector<2x169xf32>
    %c10 = arith.constant 10 : index
    %c0_172 = arith.constant 0 : index
    %c0_173 = arith.constant 0 : index
    %324 = vector.load %arg0[%c10, %c0_172, %c0_173] : memref<36x2x169xf32, #tpu.memory_space<vmem>>, vector<1x2x169xf32>
    %325 = vector.shape_cast %324 : vector<1x2x169xf32> to vector<2x169xf32>
    %326 = vector.broadcast %8 : f32 to vector<2x169xf32>
    %327 = arith.mulf %325, %326 : vector<2x169xf32>
    %328 = arith.addf %309, %327 : vector<2x169xf32>
    %329 = vector.broadcast %9 : f32 to vector<2x169xf32>
    %330 = arith.mulf %325, %329 : vector<2x169xf32>
    %331 = arith.addf %311, %330 : vector<2x169xf32>
    %332 = vector.broadcast %10 : f32 to vector<2x169xf32>
    %333 = arith.mulf %325, %332 : vector<2x169xf32>
    %334 = arith.addf %313, %333 : vector<2x169xf32>
    %335 = vector.broadcast %11 : f32 to vector<2x169xf32>
    %336 = arith.mulf %325, %335 : vector<2x169xf32>
    %337 = arith.addf %315, %336 : vector<2x169xf32>
    %338 = vector.broadcast %12 : f32 to vector<2x169xf32>
    %339 = arith.mulf %325, %338 : vector<2x169xf32>
    %340 = arith.addf %317, %339 : vector<2x169xf32>
    %341 = vector.broadcast %13 : f32 to vector<2x169xf32>
    %342 = arith.mulf %325, %341 : vector<2x169xf32>
    %343 = arith.addf %319, %342 : vector<2x169xf32>
    %344 = vector.broadcast %14 : f32 to vector<2x169xf32>
    %345 = arith.mulf %325, %344 : vector<2x169xf32>
    %346 = arith.addf %321, %345 : vector<2x169xf32>
    %347 = vector.broadcast %15 : f32 to vector<2x169xf32>
    %348 = arith.mulf %325, %347 : vector<2x169xf32>
    %349 = arith.addf %323, %348 : vector<2x169xf32>
    %c11 = arith.constant 11 : index
    %c0_174 = arith.constant 0 : index
    %c0_175 = arith.constant 0 : index
    %350 = vector.load %arg0[%c11, %c0_174, %c0_175] : memref<36x2x169xf32, #tpu.memory_space<vmem>>, vector<1x2x169xf32>
    %351 = vector.shape_cast %350 : vector<1x2x169xf32> to vector<2x169xf32>
    %352 = vector.broadcast %16 : f32 to vector<2x169xf32>
    %353 = arith.mulf %351, %352 : vector<2x169xf32>
    %354 = arith.addf %328, %353 : vector<2x169xf32>
    %355 = vector.broadcast %17 : f32 to vector<2x169xf32>
    %356 = arith.mulf %351, %355 : vector<2x169xf32>
    %357 = arith.addf %331, %356 : vector<2x169xf32>
    %358 = vector.broadcast %18 : f32 to vector<2x169xf32>
    %359 = arith.mulf %351, %358 : vector<2x169xf32>
    %360 = arith.addf %334, %359 : vector<2x169xf32>
    %361 = vector.broadcast %19 : f32 to vector<2x169xf32>
    %362 = arith.mulf %351, %361 : vector<2x169xf32>
    %363 = arith.addf %337, %362 : vector<2x169xf32>
    %364 = vector.broadcast %20 : f32 to vector<2x169xf32>
    %365 = arith.mulf %351, %364 : vector<2x169xf32>
    %366 = arith.addf %340, %365 : vector<2x169xf32>
    %367 = vector.broadcast %21 : f32 to vector<2x169xf32>
    %368 = arith.mulf %351, %367 : vector<2x169xf32>
    %369 = arith.addf %343, %368 : vector<2x169xf32>
    %370 = vector.broadcast %22 : f32 to vector<2x169xf32>
    %371 = arith.mulf %351, %370 : vector<2x169xf32>
    %372 = arith.addf %346, %371 : vector<2x169xf32>
    %373 = vector.broadcast %23 : f32 to vector<2x169xf32>
    %374 = arith.mulf %351, %373 : vector<2x169xf32>
    %375 = arith.addf %349, %374 : vector<2x169xf32>
    %c12 = arith.constant 12 : index
    %c0_176 = arith.constant 0 : index
    %c0_177 = arith.constant 0 : index
    %376 = vector.load %arg0[%c12, %c0_176, %c0_177] : memref<36x2x169xf32, #tpu.memory_space<vmem>>, vector<1x2x169xf32>
    %377 = vector.shape_cast %376 : vector<1x2x169xf32> to vector<2x169xf32>
    %378 = vector.broadcast %24 : f32 to vector<2x169xf32>
    %379 = arith.mulf %377, %378 : vector<2x169xf32>
    %380 = arith.addf %354, %379 : vector<2x169xf32>
    %381 = vector.broadcast %25 : f32 to vector<2x169xf32>
    %382 = arith.mulf %377, %381 : vector<2x169xf32>
    %383 = arith.addf %357, %382 : vector<2x169xf32>
    %384 = vector.broadcast %26 : f32 to vector<2x169xf32>
    %385 = arith.mulf %377, %384 : vector<2x169xf32>
    %386 = arith.addf %360, %385 : vector<2x169xf32>
    %387 = vector.broadcast %27 : f32 to vector<2x169xf32>
    %388 = arith.mulf %377, %387 : vector<2x169xf32>
    %389 = arith.addf %363, %388 : vector<2x169xf32>
    %390 = vector.broadcast %28 : f32 to vector<2x169xf32>
    %391 = arith.mulf %377, %390 : vector<2x169xf32>
    %392 = arith.addf %366, %391 : vector<2x169xf32>
    %393 = vector.broadcast %29 : f32 to vector<2x169xf32>
    %394 = arith.mulf %377, %393 : vector<2x169xf32>
    %395 = arith.addf %369, %394 : vector<2x169xf32>
    %396 = vector.broadcast %30 : f32 to vector<2x169xf32>
    %397 = arith.mulf %377, %396 : vector<2x169xf32>
    %398 = arith.addf %372, %397 : vector<2x169xf32>
    %399 = vector.broadcast %31 : f32 to vector<2x169xf32>
    %400 = arith.mulf %377, %399 : vector<2x169xf32>
    %401 = arith.addf %375, %400 : vector<2x169xf32>
    %c13 = arith.constant 13 : index
    %c0_178 = arith.constant 0 : index
    %c0_179 = arith.constant 0 : index
    %402 = vector.load %arg0[%c13, %c0_178, %c0_179] : memref<36x2x169xf32, #tpu.memory_space<vmem>>, vector<1x2x169xf32>
    %403 = vector.shape_cast %402 : vector<1x2x169xf32> to vector<2x169xf32>
    %404 = vector.broadcast %32 : f32 to vector<2x169xf32>
    %405 = arith.mulf %403, %404 : vector<2x169xf32>
    %406 = arith.addf %380, %405 : vector<2x169xf32>
    %407 = vector.broadcast %33 : f32 to vector<2x169xf32>
    %408 = arith.mulf %403, %407 : vector<2x169xf32>
    %409 = arith.addf %383, %408 : vector<2x169xf32>
    %410 = vector.broadcast %34 : f32 to vector<2x169xf32>
    %411 = arith.mulf %403, %410 : vector<2x169xf32>
    %412 = arith.addf %386, %411 : vector<2x169xf32>
    %413 = vector.broadcast %35 : f32 to vector<2x169xf32>
    %414 = arith.mulf %403, %413 : vector<2x169xf32>
    %415 = arith.addf %389, %414 : vector<2x169xf32>
    %416 = vector.broadcast %36 : f32 to vector<2x169xf32>
    %417 = arith.mulf %403, %416 : vector<2x169xf32>
    %418 = arith.addf %392, %417 : vector<2x169xf32>
    %419 = vector.broadcast %37 : f32 to vector<2x169xf32>
    %420 = arith.mulf %403, %419 : vector<2x169xf32>
    %421 = arith.addf %395, %420 : vector<2x169xf32>
    %422 = vector.broadcast %38 : f32 to vector<2x169xf32>
    %423 = arith.mulf %403, %422 : vector<2x169xf32>
    %424 = arith.addf %398, %423 : vector<2x169xf32>
    %425 = vector.broadcast %39 : f32 to vector<2x169xf32>
    %426 = arith.mulf %403, %425 : vector<2x169xf32>
    %427 = arith.addf %401, %426 : vector<2x169xf32>
    %c14 = arith.constant 14 : index
    %c0_180 = arith.constant 0 : index
    %c0_181 = arith.constant 0 : index
    %428 = vector.load %arg0[%c14, %c0_180, %c0_181] : memref<36x2x169xf32, #tpu.memory_space<vmem>>, vector<1x2x169xf32>
    %429 = vector.shape_cast %428 : vector<1x2x169xf32> to vector<2x169xf32>
    %430 = vector.broadcast %40 : f32 to vector<2x169xf32>
    %431 = arith.mulf %429, %430 : vector<2x169xf32>
    %432 = arith.addf %406, %431 : vector<2x169xf32>
    %433 = vector.broadcast %41 : f32 to vector<2x169xf32>
    %434 = arith.mulf %429, %433 : vector<2x169xf32>
    %435 = arith.addf %409, %434 : vector<2x169xf32>
    %436 = vector.broadcast %42 : f32 to vector<2x169xf32>
    %437 = arith.mulf %429, %436 : vector<2x169xf32>
    %438 = arith.addf %412, %437 : vector<2x169xf32>
    %439 = vector.broadcast %43 : f32 to vector<2x169xf32>
    %440 = arith.mulf %429, %439 : vector<2x169xf32>
    %441 = arith.addf %415, %440 : vector<2x169xf32>
    %442 = vector.broadcast %44 : f32 to vector<2x169xf32>
    %443 = arith.mulf %429, %442 : vector<2x169xf32>
    %444 = arith.addf %418, %443 : vector<2x169xf32>
    %445 = vector.broadcast %45 : f32 to vector<2x169xf32>
    %446 = arith.mulf %429, %445 : vector<2x169xf32>
    %447 = arith.addf %421, %446 : vector<2x169xf32>
    %448 = vector.broadcast %46 : f32 to vector<2x169xf32>
    %449 = arith.mulf %429, %448 : vector<2x169xf32>
    %450 = arith.addf %424, %449 : vector<2x169xf32>
    %451 = vector.broadcast %47 : f32 to vector<2x169xf32>
    %452 = arith.mulf %429, %451 : vector<2x169xf32>
    %453 = arith.addf %427, %452 : vector<2x169xf32>
    %c15 = arith.constant 15 : index
    %c0_182 = arith.constant 0 : index
    %c0_183 = arith.constant 0 : index
    %454 = vector.load %arg0[%c15, %c0_182, %c0_183] : memref<36x2x169xf32, #tpu.memory_space<vmem>>, vector<1x2x169xf32>
    %455 = vector.shape_cast %454 : vector<1x2x169xf32> to vector<2x169xf32>
    %456 = vector.broadcast %48 : f32 to vector<2x169xf32>
    %457 = arith.mulf %455, %456 : vector<2x169xf32>
    %458 = arith.addf %432, %457 : vector<2x169xf32>
    %459 = vector.broadcast %49 : f32 to vector<2x169xf32>
    %460 = arith.mulf %455, %459 : vector<2x169xf32>
    %461 = arith.addf %435, %460 : vector<2x169xf32>
    %462 = vector.broadcast %50 : f32 to vector<2x169xf32>
    %463 = arith.mulf %455, %462 : vector<2x169xf32>
    %464 = arith.addf %438, %463 : vector<2x169xf32>
    %465 = vector.broadcast %51 : f32 to vector<2x169xf32>
    %466 = arith.mulf %455, %465 : vector<2x169xf32>
    %467 = arith.addf %441, %466 : vector<2x169xf32>
    %468 = vector.broadcast %52 : f32 to vector<2x169xf32>
    %469 = arith.mulf %455, %468 : vector<2x169xf32>
    %470 = arith.addf %444, %469 : vector<2x169xf32>
    %471 = vector.broadcast %53 : f32 to vector<2x169xf32>
    %472 = arith.mulf %455, %471 : vector<2x169xf32>
    %473 = arith.addf %447, %472 : vector<2x169xf32>
    %474 = vector.broadcast %54 : f32 to vector<2x169xf32>
    %475 = arith.mulf %455, %474 : vector<2x169xf32>
    %476 = arith.addf %450, %475 : vector<2x169xf32>
    %477 = vector.broadcast %55 : f32 to vector<2x169xf32>
    %478 = arith.mulf %455, %477 : vector<2x169xf32>
    %479 = arith.addf %453, %478 : vector<2x169xf32>
    %c16 = arith.constant 16 : index
    %c0_184 = arith.constant 0 : index
    %c0_185 = arith.constant 0 : index
    %480 = vector.load %arg0[%c16, %c0_184, %c0_185] : memref<36x2x169xf32, #tpu.memory_space<vmem>>, vector<1x2x169xf32>
    %481 = vector.shape_cast %480 : vector<1x2x169xf32> to vector<2x169xf32>
    %482 = vector.broadcast %56 : f32 to vector<2x169xf32>
    %483 = arith.mulf %481, %482 : vector<2x169xf32>
    %484 = arith.addf %458, %483 : vector<2x169xf32>
    %485 = vector.broadcast %57 : f32 to vector<2x169xf32>
    %486 = arith.mulf %481, %485 : vector<2x169xf32>
    %487 = arith.addf %461, %486 : vector<2x169xf32>
    %488 = vector.broadcast %58 : f32 to vector<2x169xf32>
    %489 = arith.mulf %481, %488 : vector<2x169xf32>
    %490 = arith.addf %464, %489 : vector<2x169xf32>
    %491 = vector.broadcast %59 : f32 to vector<2x169xf32>
    %492 = arith.mulf %481, %491 : vector<2x169xf32>
    %493 = arith.addf %467, %492 : vector<2x169xf32>
    %494 = vector.broadcast %60 : f32 to vector<2x169xf32>
    %495 = arith.mulf %481, %494 : vector<2x169xf32>
    %496 = arith.addf %470, %495 : vector<2x169xf32>
    %497 = vector.broadcast %61 : f32 to vector<2x169xf32>
    %498 = arith.mulf %481, %497 : vector<2x169xf32>
    %499 = arith.addf %473, %498 : vector<2x169xf32>
    %500 = vector.broadcast %62 : f32 to vector<2x169xf32>
    %501 = arith.mulf %481, %500 : vector<2x169xf32>
    %502 = arith.addf %476, %501 : vector<2x169xf32>
    %503 = vector.broadcast %63 : f32 to vector<2x169xf32>
    %504 = arith.mulf %481, %503 : vector<2x169xf32>
    %505 = arith.addf %479, %504 : vector<2x169xf32>
    %c17 = arith.constant 17 : index
    %c0_186 = arith.constant 0 : index
    %c0_187 = arith.constant 0 : index
    %506 = vector.load %arg0[%c17, %c0_186, %c0_187] : memref<36x2x169xf32, #tpu.memory_space<vmem>>, vector<1x2x169xf32>
    %507 = vector.shape_cast %506 : vector<1x2x169xf32> to vector<2x169xf32>
    %508 = vector.broadcast %64 : f32 to vector<2x169xf32>
    %509 = arith.mulf %507, %508 : vector<2x169xf32>
    %510 = arith.addf %484, %509 : vector<2x169xf32>
    %511 = vector.broadcast %65 : f32 to vector<2x169xf32>
    %512 = arith.mulf %507, %511 : vector<2x169xf32>
    %513 = arith.addf %487, %512 : vector<2x169xf32>
    %514 = vector.broadcast %66 : f32 to vector<2x169xf32>
    %515 = arith.mulf %507, %514 : vector<2x169xf32>
    %516 = arith.addf %490, %515 : vector<2x169xf32>
    %517 = vector.broadcast %67 : f32 to vector<2x169xf32>
    %518 = arith.mulf %507, %517 : vector<2x169xf32>
    %519 = arith.addf %493, %518 : vector<2x169xf32>
    %520 = vector.broadcast %68 : f32 to vector<2x169xf32>
    %521 = arith.mulf %507, %520 : vector<2x169xf32>
    %522 = arith.addf %496, %521 : vector<2x169xf32>
    %523 = vector.broadcast %69 : f32 to vector<2x169xf32>
    %524 = arith.mulf %507, %523 : vector<2x169xf32>
    %525 = arith.addf %499, %524 : vector<2x169xf32>
    %526 = vector.broadcast %70 : f32 to vector<2x169xf32>
    %527 = arith.mulf %507, %526 : vector<2x169xf32>
    %528 = arith.addf %502, %527 : vector<2x169xf32>
    %529 = vector.broadcast %71 : f32 to vector<2x169xf32>
    %530 = arith.mulf %507, %529 : vector<2x169xf32>
    %531 = arith.addf %505, %530 : vector<2x169xf32>
    %532 = arith.maximumf %284, %510 : vector<2x169xf32>
    %533 = arith.maximumf %287, %513 : vector<2x169xf32>
    %534 = arith.maximumf %290, %516 : vector<2x169xf32>
    %535 = arith.maximumf %293, %519 : vector<2x169xf32>
    %536 = arith.maximumf %296, %522 : vector<2x169xf32>
    %537 = arith.maximumf %299, %525 : vector<2x169xf32>
    %538 = arith.maximumf %302, %528 : vector<2x169xf32>
    %539 = arith.maximumf %305, %531 : vector<2x169xf32>
    %c18 = arith.constant 18 : index
    %c0_188 = arith.constant 0 : index
    %c0_189 = arith.constant 0 : index
    %540 = vector.load %arg0[%c18, %c0_188, %c0_189] : memref<36x2x169xf32, #tpu.memory_space<vmem>>, vector<1x2x169xf32>
    %541 = vector.shape_cast %540 : vector<1x2x169xf32> to vector<2x169xf32>
    %542 = vector.broadcast %0 : f32 to vector<2x169xf32>
    %543 = arith.mulf %541, %542 : vector<2x169xf32>
    %544 = vector.broadcast %1 : f32 to vector<2x169xf32>
    %545 = arith.mulf %541, %544 : vector<2x169xf32>
    %546 = vector.broadcast %2 : f32 to vector<2x169xf32>
    %547 = arith.mulf %541, %546 : vector<2x169xf32>
    %548 = vector.broadcast %3 : f32 to vector<2x169xf32>
    %549 = arith.mulf %541, %548 : vector<2x169xf32>
    %550 = vector.broadcast %4 : f32 to vector<2x169xf32>
    %551 = arith.mulf %541, %550 : vector<2x169xf32>
    %552 = vector.broadcast %5 : f32 to vector<2x169xf32>
    %553 = arith.mulf %541, %552 : vector<2x169xf32>
    %554 = vector.broadcast %6 : f32 to vector<2x169xf32>
    %555 = arith.mulf %541, %554 : vector<2x169xf32>
    %556 = vector.broadcast %7 : f32 to vector<2x169xf32>
    %557 = arith.mulf %541, %556 : vector<2x169xf32>
    %c19 = arith.constant 19 : index
    %c0_190 = arith.constant 0 : index
    %c0_191 = arith.constant 0 : index
    %558 = vector.load %arg0[%c19, %c0_190, %c0_191] : memref<36x2x169xf32, #tpu.memory_space<vmem>>, vector<1x2x169xf32>
    %559 = vector.shape_cast %558 : vector<1x2x169xf32> to vector<2x169xf32>
    %560 = vector.broadcast %8 : f32 to vector<2x169xf32>
    %561 = arith.mulf %559, %560 : vector<2x169xf32>
    %562 = arith.addf %543, %561 : vector<2x169xf32>
    %563 = vector.broadcast %9 : f32 to vector<2x169xf32>
    %564 = arith.mulf %559, %563 : vector<2x169xf32>
    %565 = arith.addf %545, %564 : vector<2x169xf32>
    %566 = vector.broadcast %10 : f32 to vector<2x169xf32>
    %567 = arith.mulf %559, %566 : vector<2x169xf32>
    %568 = arith.addf %547, %567 : vector<2x169xf32>
    %569 = vector.broadcast %11 : f32 to vector<2x169xf32>
    %570 = arith.mulf %559, %569 : vector<2x169xf32>
    %571 = arith.addf %549, %570 : vector<2x169xf32>
    %572 = vector.broadcast %12 : f32 to vector<2x169xf32>
    %573 = arith.mulf %559, %572 : vector<2x169xf32>
    %574 = arith.addf %551, %573 : vector<2x169xf32>
    %575 = vector.broadcast %13 : f32 to vector<2x169xf32>
    %576 = arith.mulf %559, %575 : vector<2x169xf32>
    %577 = arith.addf %553, %576 : vector<2x169xf32>
    %578 = vector.broadcast %14 : f32 to vector<2x169xf32>
    %579 = arith.mulf %559, %578 : vector<2x169xf32>
    %580 = arith.addf %555, %579 : vector<2x169xf32>
    %581 = vector.broadcast %15 : f32 to vector<2x169xf32>
    %582 = arith.mulf %559, %581 : vector<2x169xf32>
    %583 = arith.addf %557, %582 : vector<2x169xf32>
    %c20 = arith.constant 20 : index
    %c0_192 = arith.constant 0 : index
    %c0_193 = arith.constant 0 : index
    %584 = vector.load %arg0[%c20, %c0_192, %c0_193] : memref<36x2x169xf32, #tpu.memory_space<vmem>>, vector<1x2x169xf32>
    %585 = vector.shape_cast %584 : vector<1x2x169xf32> to vector<2x169xf32>
    %586 = vector.broadcast %16 : f32 to vector<2x169xf32>
    %587 = arith.mulf %585, %586 : vector<2x169xf32>
    %588 = arith.addf %562, %587 : vector<2x169xf32>
    %589 = vector.broadcast %17 : f32 to vector<2x169xf32>
    %590 = arith.mulf %585, %589 : vector<2x169xf32>
    %591 = arith.addf %565, %590 : vector<2x169xf32>
    %592 = vector.broadcast %18 : f32 to vector<2x169xf32>
    %593 = arith.mulf %585, %592 : vector<2x169xf32>
    %594 = arith.addf %568, %593 : vector<2x169xf32>
    %595 = vector.broadcast %19 : f32 to vector<2x169xf32>
    %596 = arith.mulf %585, %595 : vector<2x169xf32>
    %597 = arith.addf %571, %596 : vector<2x169xf32>
    %598 = vector.broadcast %20 : f32 to vector<2x169xf32>
    %599 = arith.mulf %585, %598 : vector<2x169xf32>
    %600 = arith.addf %574, %599 : vector<2x169xf32>
    %601 = vector.broadcast %21 : f32 to vector<2x169xf32>
    %602 = arith.mulf %585, %601 : vector<2x169xf32>
    %603 = arith.addf %577, %602 : vector<2x169xf32>
    %604 = vector.broadcast %22 : f32 to vector<2x169xf32>
    %605 = arith.mulf %585, %604 : vector<2x169xf32>
    %606 = arith.addf %580, %605 : vector<2x169xf32>
    %607 = vector.broadcast %23 : f32 to vector<2x169xf32>
    %608 = arith.mulf %585, %607 : vector<2x169xf32>
    %609 = arith.addf %583, %608 : vector<2x169xf32>
    %c21 = arith.constant 21 : index
    %c0_194 = arith.constant 0 : index
    %c0_195 = arith.constant 0 : index
    %610 = vector.load %arg0[%c21, %c0_194, %c0_195] : memref<36x2x169xf32, #tpu.memory_space<vmem>>, vector<1x2x169xf32>
    %611 = vector.shape_cast %610 : vector<1x2x169xf32> to vector<2x169xf32>
    %612 = vector.broadcast %24 : f32 to vector<2x169xf32>
    %613 = arith.mulf %611, %612 : vector<2x169xf32>
    %614 = arith.addf %588, %613 : vector<2x169xf32>
    %615 = vector.broadcast %25 : f32 to vector<2x169xf32>
    %616 = arith.mulf %611, %615 : vector<2x169xf32>
    %617 = arith.addf %591, %616 : vector<2x169xf32>
    %618 = vector.broadcast %26 : f32 to vector<2x169xf32>
    %619 = arith.mulf %611, %618 : vector<2x169xf32>
    %620 = arith.addf %594, %619 : vector<2x169xf32>
    %621 = vector.broadcast %27 : f32 to vector<2x169xf32>
    %622 = arith.mulf %611, %621 : vector<2x169xf32>
    %623 = arith.addf %597, %622 : vector<2x169xf32>
    %624 = vector.broadcast %28 : f32 to vector<2x169xf32>
    %625 = arith.mulf %611, %624 : vector<2x169xf32>
    %626 = arith.addf %600, %625 : vector<2x169xf32>
    %627 = vector.broadcast %29 : f32 to vector<2x169xf32>
    %628 = arith.mulf %611, %627 : vector<2x169xf32>
    %629 = arith.addf %603, %628 : vector<2x169xf32>
    %630 = vector.broadcast %30 : f32 to vector<2x169xf32>
    %631 = arith.mulf %611, %630 : vector<2x169xf32>
    %632 = arith.addf %606, %631 : vector<2x169xf32>
    %633 = vector.broadcast %31 : f32 to vector<2x169xf32>
    %634 = arith.mulf %611, %633 : vector<2x169xf32>
    %635 = arith.addf %609, %634 : vector<2x169xf32>
    %c22 = arith.constant 22 : index
    %c0_196 = arith.constant 0 : index
    %c0_197 = arith.constant 0 : index
    %636 = vector.load %arg0[%c22, %c0_196, %c0_197] : memref<36x2x169xf32, #tpu.memory_space<vmem>>, vector<1x2x169xf32>
    %637 = vector.shape_cast %636 : vector<1x2x169xf32> to vector<2x169xf32>
    %638 = vector.broadcast %32 : f32 to vector<2x169xf32>
    %639 = arith.mulf %637, %638 : vector<2x169xf32>
    %640 = arith.addf %614, %639 : vector<2x169xf32>
    %641 = vector.broadcast %33 : f32 to vector<2x169xf32>
    %642 = arith.mulf %637, %641 : vector<2x169xf32>
    %643 = arith.addf %617, %642 : vector<2x169xf32>
    %644 = vector.broadcast %34 : f32 to vector<2x169xf32>
    %645 = arith.mulf %637, %644 : vector<2x169xf32>
    %646 = arith.addf %620, %645 : vector<2x169xf32>
    %647 = vector.broadcast %35 : f32 to vector<2x169xf32>
    %648 = arith.mulf %637, %647 : vector<2x169xf32>
    %649 = arith.addf %623, %648 : vector<2x169xf32>
    %650 = vector.broadcast %36 : f32 to vector<2x169xf32>
    %651 = arith.mulf %637, %650 : vector<2x169xf32>
    %652 = arith.addf %626, %651 : vector<2x169xf32>
    %653 = vector.broadcast %37 : f32 to vector<2x169xf32>
    %654 = arith.mulf %637, %653 : vector<2x169xf32>
    %655 = arith.addf %629, %654 : vector<2x169xf32>
    %656 = vector.broadcast %38 : f32 to vector<2x169xf32>
    %657 = arith.mulf %637, %656 : vector<2x169xf32>
    %658 = arith.addf %632, %657 : vector<2x169xf32>
    %659 = vector.broadcast %39 : f32 to vector<2x169xf32>
    %660 = arith.mulf %637, %659 : vector<2x169xf32>
    %661 = arith.addf %635, %660 : vector<2x169xf32>
    %c23 = arith.constant 23 : index
    %c0_198 = arith.constant 0 : index
    %c0_199 = arith.constant 0 : index
    %662 = vector.load %arg0[%c23, %c0_198, %c0_199] : memref<36x2x169xf32, #tpu.memory_space<vmem>>, vector<1x2x169xf32>
    %663 = vector.shape_cast %662 : vector<1x2x169xf32> to vector<2x169xf32>
    %664 = vector.broadcast %40 : f32 to vector<2x169xf32>
    %665 = arith.mulf %663, %664 : vector<2x169xf32>
    %666 = arith.addf %640, %665 : vector<2x169xf32>
    %667 = vector.broadcast %41 : f32 to vector<2x169xf32>
    %668 = arith.mulf %663, %667 : vector<2x169xf32>
    %669 = arith.addf %643, %668 : vector<2x169xf32>
    %670 = vector.broadcast %42 : f32 to vector<2x169xf32>
    %671 = arith.mulf %663, %670 : vector<2x169xf32>
    %672 = arith.addf %646, %671 : vector<2x169xf32>
    %673 = vector.broadcast %43 : f32 to vector<2x169xf32>
    %674 = arith.mulf %663, %673 : vector<2x169xf32>
    %675 = arith.addf %649, %674 : vector<2x169xf32>
    %676 = vector.broadcast %44 : f32 to vector<2x169xf32>
    %677 = arith.mulf %663, %676 : vector<2x169xf32>
    %678 = arith.addf %652, %677 : vector<2x169xf32>
    %679 = vector.broadcast %45 : f32 to vector<2x169xf32>
    %680 = arith.mulf %663, %679 : vector<2x169xf32>
    %681 = arith.addf %655, %680 : vector<2x169xf32>
    %682 = vector.broadcast %46 : f32 to vector<2x169xf32>
    %683 = arith.mulf %663, %682 : vector<2x169xf32>
    %684 = arith.addf %658, %683 : vector<2x169xf32>
    %685 = vector.broadcast %47 : f32 to vector<2x169xf32>
    %686 = arith.mulf %663, %685 : vector<2x169xf32>
    %687 = arith.addf %661, %686 : vector<2x169xf32>
    %c24 = arith.constant 24 : index
    %c0_200 = arith.constant 0 : index
    %c0_201 = arith.constant 0 : index
    %688 = vector.load %arg0[%c24, %c0_200, %c0_201] : memref<36x2x169xf32, #tpu.memory_space<vmem>>, vector<1x2x169xf32>
    %689 = vector.shape_cast %688 : vector<1x2x169xf32> to vector<2x169xf32>
    %690 = vector.broadcast %48 : f32 to vector<2x169xf32>
    %691 = arith.mulf %689, %690 : vector<2x169xf32>
    %692 = arith.addf %666, %691 : vector<2x169xf32>
    %693 = vector.broadcast %49 : f32 to vector<2x169xf32>
    %694 = arith.mulf %689, %693 : vector<2x169xf32>
    %695 = arith.addf %669, %694 : vector<2x169xf32>
    %696 = vector.broadcast %50 : f32 to vector<2x169xf32>
    %697 = arith.mulf %689, %696 : vector<2x169xf32>
    %698 = arith.addf %672, %697 : vector<2x169xf32>
    %699 = vector.broadcast %51 : f32 to vector<2x169xf32>
    %700 = arith.mulf %689, %699 : vector<2x169xf32>
    %701 = arith.addf %675, %700 : vector<2x169xf32>
    %702 = vector.broadcast %52 : f32 to vector<2x169xf32>
    %703 = arith.mulf %689, %702 : vector<2x169xf32>
    %704 = arith.addf %678, %703 : vector<2x169xf32>
    %705 = vector.broadcast %53 : f32 to vector<2x169xf32>
    %706 = arith.mulf %689, %705 : vector<2x169xf32>
    %707 = arith.addf %681, %706 : vector<2x169xf32>
    %708 = vector.broadcast %54 : f32 to vector<2x169xf32>
    %709 = arith.mulf %689, %708 : vector<2x169xf32>
    %710 = arith.addf %684, %709 : vector<2x169xf32>
    %711 = vector.broadcast %55 : f32 to vector<2x169xf32>
    %712 = arith.mulf %689, %711 : vector<2x169xf32>
    %713 = arith.addf %687, %712 : vector<2x169xf32>
    %c25 = arith.constant 25 : index
    %c0_202 = arith.constant 0 : index
    %c0_203 = arith.constant 0 : index
    %714 = vector.load %arg0[%c25, %c0_202, %c0_203] : memref<36x2x169xf32, #tpu.memory_space<vmem>>, vector<1x2x169xf32>
    %715 = vector.shape_cast %714 : vector<1x2x169xf32> to vector<2x169xf32>
    %716 = vector.broadcast %56 : f32 to vector<2x169xf32>
    %717 = arith.mulf %715, %716 : vector<2x169xf32>
    %718 = arith.addf %692, %717 : vector<2x169xf32>
    %719 = vector.broadcast %57 : f32 to vector<2x169xf32>
    %720 = arith.mulf %715, %719 : vector<2x169xf32>
    %721 = arith.addf %695, %720 : vector<2x169xf32>
    %722 = vector.broadcast %58 : f32 to vector<2x169xf32>
    %723 = arith.mulf %715, %722 : vector<2x169xf32>
    %724 = arith.addf %698, %723 : vector<2x169xf32>
    %725 = vector.broadcast %59 : f32 to vector<2x169xf32>
    %726 = arith.mulf %715, %725 : vector<2x169xf32>
    %727 = arith.addf %701, %726 : vector<2x169xf32>
    %728 = vector.broadcast %60 : f32 to vector<2x169xf32>
    %729 = arith.mulf %715, %728 : vector<2x169xf32>
    %730 = arith.addf %704, %729 : vector<2x169xf32>
    %731 = vector.broadcast %61 : f32 to vector<2x169xf32>
    %732 = arith.mulf %715, %731 : vector<2x169xf32>
    %733 = arith.addf %707, %732 : vector<2x169xf32>
    %734 = vector.broadcast %62 : f32 to vector<2x169xf32>
    %735 = arith.mulf %715, %734 : vector<2x169xf32>
    %736 = arith.addf %710, %735 : vector<2x169xf32>
    %737 = vector.broadcast %63 : f32 to vector<2x169xf32>
    %738 = arith.mulf %715, %737 : vector<2x169xf32>
    %739 = arith.addf %713, %738 : vector<2x169xf32>
    %c26 = arith.constant 26 : index
    %c0_204 = arith.constant 0 : index
    %c0_205 = arith.constant 0 : index
    %740 = vector.load %arg0[%c26, %c0_204, %c0_205] : memref<36x2x169xf32, #tpu.memory_space<vmem>>, vector<1x2x169xf32>
    %741 = vector.shape_cast %740 : vector<1x2x169xf32> to vector<2x169xf32>
    %742 = vector.broadcast %64 : f32 to vector<2x169xf32>
    %743 = arith.mulf %741, %742 : vector<2x169xf32>
    %744 = arith.addf %718, %743 : vector<2x169xf32>
    %745 = vector.broadcast %65 : f32 to vector<2x169xf32>
    %746 = arith.mulf %741, %745 : vector<2x169xf32>
    %747 = arith.addf %721, %746 : vector<2x169xf32>
    %748 = vector.broadcast %66 : f32 to vector<2x169xf32>
    %749 = arith.mulf %741, %748 : vector<2x169xf32>
    %750 = arith.addf %724, %749 : vector<2x169xf32>
    %751 = vector.broadcast %67 : f32 to vector<2x169xf32>
    %752 = arith.mulf %741, %751 : vector<2x169xf32>
    %753 = arith.addf %727, %752 : vector<2x169xf32>
    %754 = vector.broadcast %68 : f32 to vector<2x169xf32>
    %755 = arith.mulf %741, %754 : vector<2x169xf32>
    %756 = arith.addf %730, %755 : vector<2x169xf32>
    %757 = vector.broadcast %69 : f32 to vector<2x169xf32>
    %758 = arith.mulf %741, %757 : vector<2x169xf32>
    %759 = arith.addf %733, %758 : vector<2x169xf32>
    %760 = vector.broadcast %70 : f32 to vector<2x169xf32>
    %761 = arith.mulf %741, %760 : vector<2x169xf32>
    %762 = arith.addf %736, %761 : vector<2x169xf32>
    %763 = vector.broadcast %71 : f32 to vector<2x169xf32>
    %764 = arith.mulf %741, %763 : vector<2x169xf32>
    %765 = arith.addf %739, %764 : vector<2x169xf32>
    %766 = arith.maximumf %532, %744 : vector<2x169xf32>
    %767 = arith.maximumf %533, %747 : vector<2x169xf32>
    %768 = arith.maximumf %534, %750 : vector<2x169xf32>
    %769 = arith.maximumf %535, %753 : vector<2x169xf32>
    %770 = arith.maximumf %536, %756 : vector<2x169xf32>
    %771 = arith.maximumf %537, %759 : vector<2x169xf32>
    %772 = arith.maximumf %538, %762 : vector<2x169xf32>
    %773 = arith.maximumf %539, %765 : vector<2x169xf32>
    %c27 = arith.constant 27 : index
    %c0_206 = arith.constant 0 : index
    %c0_207 = arith.constant 0 : index
    %774 = vector.load %arg0[%c27, %c0_206, %c0_207] : memref<36x2x169xf32, #tpu.memory_space<vmem>>, vector<1x2x169xf32>
    %775 = vector.shape_cast %774 : vector<1x2x169xf32> to vector<2x169xf32>
    %776 = vector.broadcast %0 : f32 to vector<2x169xf32>
    %777 = arith.mulf %775, %776 : vector<2x169xf32>
    %778 = vector.broadcast %1 : f32 to vector<2x169xf32>
    %779 = arith.mulf %775, %778 : vector<2x169xf32>
    %780 = vector.broadcast %2 : f32 to vector<2x169xf32>
    %781 = arith.mulf %775, %780 : vector<2x169xf32>
    %782 = vector.broadcast %3 : f32 to vector<2x169xf32>
    %783 = arith.mulf %775, %782 : vector<2x169xf32>
    %784 = vector.broadcast %4 : f32 to vector<2x169xf32>
    %785 = arith.mulf %775, %784 : vector<2x169xf32>
    %786 = vector.broadcast %5 : f32 to vector<2x169xf32>
    %787 = arith.mulf %775, %786 : vector<2x169xf32>
    %788 = vector.broadcast %6 : f32 to vector<2x169xf32>
    %789 = arith.mulf %775, %788 : vector<2x169xf32>
    %790 = vector.broadcast %7 : f32 to vector<2x169xf32>
    %791 = arith.mulf %775, %790 : vector<2x169xf32>
    %c28 = arith.constant 28 : index
    %c0_208 = arith.constant 0 : index
    %c0_209 = arith.constant 0 : index
    %792 = vector.load %arg0[%c28, %c0_208, %c0_209] : memref<36x2x169xf32, #tpu.memory_space<vmem>>, vector<1x2x169xf32>
    %793 = vector.shape_cast %792 : vector<1x2x169xf32> to vector<2x169xf32>
    %794 = vector.broadcast %8 : f32 to vector<2x169xf32>
    %795 = arith.mulf %793, %794 : vector<2x169xf32>
    %796 = arith.addf %777, %795 : vector<2x169xf32>
    %797 = vector.broadcast %9 : f32 to vector<2x169xf32>
    %798 = arith.mulf %793, %797 : vector<2x169xf32>
    %799 = arith.addf %779, %798 : vector<2x169xf32>
    %800 = vector.broadcast %10 : f32 to vector<2x169xf32>
    %801 = arith.mulf %793, %800 : vector<2x169xf32>
    %802 = arith.addf %781, %801 : vector<2x169xf32>
    %803 = vector.broadcast %11 : f32 to vector<2x169xf32>
    %804 = arith.mulf %793, %803 : vector<2x169xf32>
    %805 = arith.addf %783, %804 : vector<2x169xf32>
    %806 = vector.broadcast %12 : f32 to vector<2x169xf32>
    %807 = arith.mulf %793, %806 : vector<2x169xf32>
    %808 = arith.addf %785, %807 : vector<2x169xf32>
    %809 = vector.broadcast %13 : f32 to vector<2x169xf32>
    %810 = arith.mulf %793, %809 : vector<2x169xf32>
    %811 = arith.addf %787, %810 : vector<2x169xf32>
    %812 = vector.broadcast %14 : f32 to vector<2x169xf32>
    %813 = arith.mulf %793, %812 : vector<2x169xf32>
    %814 = arith.addf %789, %813 : vector<2x169xf32>
    %815 = vector.broadcast %15 : f32 to vector<2x169xf32>
    %816 = arith.mulf %793, %815 : vector<2x169xf32>
    %817 = arith.addf %791, %816 : vector<2x169xf32>
    %c29 = arith.constant 29 : index
    %c0_210 = arith.constant 0 : index
    %c0_211 = arith.constant 0 : index
    %818 = vector.load %arg0[%c29, %c0_210, %c0_211] : memref<36x2x169xf32, #tpu.memory_space<vmem>>, vector<1x2x169xf32>
    %819 = vector.shape_cast %818 : vector<1x2x169xf32> to vector<2x169xf32>
    %820 = vector.broadcast %16 : f32 to vector<2x169xf32>
    %821 = arith.mulf %819, %820 : vector<2x169xf32>
    %822 = arith.addf %796, %821 : vector<2x169xf32>
    %823 = vector.broadcast %17 : f32 to vector<2x169xf32>
    %824 = arith.mulf %819, %823 : vector<2x169xf32>
    %825 = arith.addf %799, %824 : vector<2x169xf32>
    %826 = vector.broadcast %18 : f32 to vector<2x169xf32>
    %827 = arith.mulf %819, %826 : vector<2x169xf32>
    %828 = arith.addf %802, %827 : vector<2x169xf32>
    %829 = vector.broadcast %19 : f32 to vector<2x169xf32>
    %830 = arith.mulf %819, %829 : vector<2x169xf32>
    %831 = arith.addf %805, %830 : vector<2x169xf32>
    %832 = vector.broadcast %20 : f32 to vector<2x169xf32>
    %833 = arith.mulf %819, %832 : vector<2x169xf32>
    %834 = arith.addf %808, %833 : vector<2x169xf32>
    %835 = vector.broadcast %21 : f32 to vector<2x169xf32>
    %836 = arith.mulf %819, %835 : vector<2x169xf32>
    %837 = arith.addf %811, %836 : vector<2x169xf32>
    %838 = vector.broadcast %22 : f32 to vector<2x169xf32>
    %839 = arith.mulf %819, %838 : vector<2x169xf32>
    %840 = arith.addf %814, %839 : vector<2x169xf32>
    %841 = vector.broadcast %23 : f32 to vector<2x169xf32>
    %842 = arith.mulf %819, %841 : vector<2x169xf32>
    %843 = arith.addf %817, %842 : vector<2x169xf32>
    %c30 = arith.constant 30 : index
    %c0_212 = arith.constant 0 : index
    %c0_213 = arith.constant 0 : index
    %844 = vector.load %arg0[%c30, %c0_212, %c0_213] : memref<36x2x169xf32, #tpu.memory_space<vmem>>, vector<1x2x169xf32>
    %845 = vector.shape_cast %844 : vector<1x2x169xf32> to vector<2x169xf32>
    %846 = vector.broadcast %24 : f32 to vector<2x169xf32>
    %847 = arith.mulf %845, %846 : vector<2x169xf32>
    %848 = arith.addf %822, %847 : vector<2x169xf32>
    %849 = vector.broadcast %25 : f32 to vector<2x169xf32>
    %850 = arith.mulf %845, %849 : vector<2x169xf32>
    %851 = arith.addf %825, %850 : vector<2x169xf32>
    %852 = vector.broadcast %26 : f32 to vector<2x169xf32>
    %853 = arith.mulf %845, %852 : vector<2x169xf32>
    %854 = arith.addf %828, %853 : vector<2x169xf32>
    %855 = vector.broadcast %27 : f32 to vector<2x169xf32>
    %856 = arith.mulf %845, %855 : vector<2x169xf32>
    %857 = arith.addf %831, %856 : vector<2x169xf32>
    %858 = vector.broadcast %28 : f32 to vector<2x169xf32>
    %859 = arith.mulf %845, %858 : vector<2x169xf32>
    %860 = arith.addf %834, %859 : vector<2x169xf32>
    %861 = vector.broadcast %29 : f32 to vector<2x169xf32>
    %862 = arith.mulf %845, %861 : vector<2x169xf32>
    %863 = arith.addf %837, %862 : vector<2x169xf32>
    %864 = vector.broadcast %30 : f32 to vector<2x169xf32>
    %865 = arith.mulf %845, %864 : vector<2x169xf32>
    %866 = arith.addf %840, %865 : vector<2x169xf32>
    %867 = vector.broadcast %31 : f32 to vector<2x169xf32>
    %868 = arith.mulf %845, %867 : vector<2x169xf32>
    %869 = arith.addf %843, %868 : vector<2x169xf32>
    %c31 = arith.constant 31 : index
    %c0_214 = arith.constant 0 : index
    %c0_215 = arith.constant 0 : index
    %870 = vector.load %arg0[%c31, %c0_214, %c0_215] : memref<36x2x169xf32, #tpu.memory_space<vmem>>, vector<1x2x169xf32>
    %871 = vector.shape_cast %870 : vector<1x2x169xf32> to vector<2x169xf32>
    %872 = vector.broadcast %32 : f32 to vector<2x169xf32>
    %873 = arith.mulf %871, %872 : vector<2x169xf32>
    %874 = arith.addf %848, %873 : vector<2x169xf32>
    %875 = vector.broadcast %33 : f32 to vector<2x169xf32>
    %876 = arith.mulf %871, %875 : vector<2x169xf32>
    %877 = arith.addf %851, %876 : vector<2x169xf32>
    %878 = vector.broadcast %34 : f32 to vector<2x169xf32>
    %879 = arith.mulf %871, %878 : vector<2x169xf32>
    %880 = arith.addf %854, %879 : vector<2x169xf32>
    %881 = vector.broadcast %35 : f32 to vector<2x169xf32>
    %882 = arith.mulf %871, %881 : vector<2x169xf32>
    %883 = arith.addf %857, %882 : vector<2x169xf32>
    %884 = vector.broadcast %36 : f32 to vector<2x169xf32>
    %885 = arith.mulf %871, %884 : vector<2x169xf32>
    %886 = arith.addf %860, %885 : vector<2x169xf32>
    %887 = vector.broadcast %37 : f32 to vector<2x169xf32>
    %888 = arith.mulf %871, %887 : vector<2x169xf32>
    %889 = arith.addf %863, %888 : vector<2x169xf32>
    %890 = vector.broadcast %38 : f32 to vector<2x169xf32>
    %891 = arith.mulf %871, %890 : vector<2x169xf32>
    %892 = arith.addf %866, %891 : vector<2x169xf32>
    %893 = vector.broadcast %39 : f32 to vector<2x169xf32>
    %894 = arith.mulf %871, %893 : vector<2x169xf32>
    %895 = arith.addf %869, %894 : vector<2x169xf32>
    %c32 = arith.constant 32 : index
    %c0_216 = arith.constant 0 : index
    %c0_217 = arith.constant 0 : index
    %896 = vector.load %arg0[%c32, %c0_216, %c0_217] : memref<36x2x169xf32, #tpu.memory_space<vmem>>, vector<1x2x169xf32>
    %897 = vector.shape_cast %896 : vector<1x2x169xf32> to vector<2x169xf32>
    %898 = vector.broadcast %40 : f32 to vector<2x169xf32>
    %899 = arith.mulf %897, %898 : vector<2x169xf32>
    %900 = arith.addf %874, %899 : vector<2x169xf32>
    %901 = vector.broadcast %41 : f32 to vector<2x169xf32>
    %902 = arith.mulf %897, %901 : vector<2x169xf32>
    %903 = arith.addf %877, %902 : vector<2x169xf32>
    %904 = vector.broadcast %42 : f32 to vector<2x169xf32>
    %905 = arith.mulf %897, %904 : vector<2x169xf32>
    %906 = arith.addf %880, %905 : vector<2x169xf32>
    %907 = vector.broadcast %43 : f32 to vector<2x169xf32>
    %908 = arith.mulf %897, %907 : vector<2x169xf32>
    %909 = arith.addf %883, %908 : vector<2x169xf32>
    %910 = vector.broadcast %44 : f32 to vector<2x169xf32>
    %911 = arith.mulf %897, %910 : vector<2x169xf32>
    %912 = arith.addf %886, %911 : vector<2x169xf32>
    %913 = vector.broadcast %45 : f32 to vector<2x169xf32>
    %914 = arith.mulf %897, %913 : vector<2x169xf32>
    %915 = arith.addf %889, %914 : vector<2x169xf32>
    %916 = vector.broadcast %46 : f32 to vector<2x169xf32>
    %917 = arith.mulf %897, %916 : vector<2x169xf32>
    %918 = arith.addf %892, %917 : vector<2x169xf32>
    %919 = vector.broadcast %47 : f32 to vector<2x169xf32>
    %920 = arith.mulf %897, %919 : vector<2x169xf32>
    %921 = arith.addf %895, %920 : vector<2x169xf32>
    %c33 = arith.constant 33 : index
    %c0_218 = arith.constant 0 : index
    %c0_219 = arith.constant 0 : index
    %922 = vector.load %arg0[%c33, %c0_218, %c0_219] : memref<36x2x169xf32, #tpu.memory_space<vmem>>, vector<1x2x169xf32>
    %923 = vector.shape_cast %922 : vector<1x2x169xf32> to vector<2x169xf32>
    %924 = vector.broadcast %48 : f32 to vector<2x169xf32>
    %925 = arith.mulf %923, %924 : vector<2x169xf32>
    %926 = arith.addf %900, %925 : vector<2x169xf32>
    %927 = vector.broadcast %49 : f32 to vector<2x169xf32>
    %928 = arith.mulf %923, %927 : vector<2x169xf32>
    %929 = arith.addf %903, %928 : vector<2x169xf32>
    %930 = vector.broadcast %50 : f32 to vector<2x169xf32>
    %931 = arith.mulf %923, %930 : vector<2x169xf32>
    %932 = arith.addf %906, %931 : vector<2x169xf32>
    %933 = vector.broadcast %51 : f32 to vector<2x169xf32>
    %934 = arith.mulf %923, %933 : vector<2x169xf32>
    %935 = arith.addf %909, %934 : vector<2x169xf32>
    %936 = vector.broadcast %52 : f32 to vector<2x169xf32>
    %937 = arith.mulf %923, %936 : vector<2x169xf32>
    %938 = arith.addf %912, %937 : vector<2x169xf32>
    %939 = vector.broadcast %53 : f32 to vector<2x169xf32>
    %940 = arith.mulf %923, %939 : vector<2x169xf32>
    %941 = arith.addf %915, %940 : vector<2x169xf32>
    %942 = vector.broadcast %54 : f32 to vector<2x169xf32>
    %943 = arith.mulf %923, %942 : vector<2x169xf32>
    %944 = arith.addf %918, %943 : vector<2x169xf32>
    %945 = vector.broadcast %55 : f32 to vector<2x169xf32>
    %946 = arith.mulf %923, %945 : vector<2x169xf32>
    %947 = arith.addf %921, %946 : vector<2x169xf32>
    %c34 = arith.constant 34 : index
    %c0_220 = arith.constant 0 : index
    %c0_221 = arith.constant 0 : index
    %948 = vector.load %arg0[%c34, %c0_220, %c0_221] : memref<36x2x169xf32, #tpu.memory_space<vmem>>, vector<1x2x169xf32>
    %949 = vector.shape_cast %948 : vector<1x2x169xf32> to vector<2x169xf32>
    %950 = vector.broadcast %56 : f32 to vector<2x169xf32>
    %951 = arith.mulf %949, %950 : vector<2x169xf32>
    %952 = arith.addf %926, %951 : vector<2x169xf32>
    %953 = vector.broadcast %57 : f32 to vector<2x169xf32>
    %954 = arith.mulf %949, %953 : vector<2x169xf32>
    %955 = arith.addf %929, %954 : vector<2x169xf32>
    %956 = vector.broadcast %58 : f32 to vector<2x169xf32>
    %957 = arith.mulf %949, %956 : vector<2x169xf32>
    %958 = arith.addf %932, %957 : vector<2x169xf32>
    %959 = vector.broadcast %59 : f32 to vector<2x169xf32>
    %960 = arith.mulf %949, %959 : vector<2x169xf32>
    %961 = arith.addf %935, %960 : vector<2x169xf32>
    %962 = vector.broadcast %60 : f32 to vector<2x169xf32>
    %963 = arith.mulf %949, %962 : vector<2x169xf32>
    %964 = arith.addf %938, %963 : vector<2x169xf32>
    %965 = vector.broadcast %61 : f32 to vector<2x169xf32>
    %966 = arith.mulf %949, %965 : vector<2x169xf32>
    %967 = arith.addf %941, %966 : vector<2x169xf32>
    %968 = vector.broadcast %62 : f32 to vector<2x169xf32>
    %969 = arith.mulf %949, %968 : vector<2x169xf32>
    %970 = arith.addf %944, %969 : vector<2x169xf32>
    %971 = vector.broadcast %63 : f32 to vector<2x169xf32>
    %972 = arith.mulf %949, %971 : vector<2x169xf32>
    %973 = arith.addf %947, %972 : vector<2x169xf32>
    %c35 = arith.constant 35 : index
    %c0_222 = arith.constant 0 : index
    %c0_223 = arith.constant 0 : index
    %974 = vector.load %arg0[%c35, %c0_222, %c0_223] : memref<36x2x169xf32, #tpu.memory_space<vmem>>, vector<1x2x169xf32>
    %975 = vector.shape_cast %974 : vector<1x2x169xf32> to vector<2x169xf32>
    %976 = vector.broadcast %64 : f32 to vector<2x169xf32>
    %977 = arith.mulf %975, %976 : vector<2x169xf32>
    %978 = arith.addf %952, %977 : vector<2x169xf32>
    %979 = vector.broadcast %65 : f32 to vector<2x169xf32>
    %980 = arith.mulf %975, %979 : vector<2x169xf32>
    %981 = arith.addf %955, %980 : vector<2x169xf32>
    %982 = vector.broadcast %66 : f32 to vector<2x169xf32>
    %983 = arith.mulf %975, %982 : vector<2x169xf32>
    %984 = arith.addf %958, %983 : vector<2x169xf32>
    %985 = vector.broadcast %67 : f32 to vector<2x169xf32>
    %986 = arith.mulf %975, %985 : vector<2x169xf32>
    %987 = arith.addf %961, %986 : vector<2x169xf32>
    %988 = vector.broadcast %68 : f32 to vector<2x169xf32>
    %989 = arith.mulf %975, %988 : vector<2x169xf32>
    %990 = arith.addf %964, %989 : vector<2x169xf32>
    %991 = vector.broadcast %69 : f32 to vector<2x169xf32>
    %992 = arith.mulf %975, %991 : vector<2x169xf32>
    %993 = arith.addf %967, %992 : vector<2x169xf32>
    %994 = vector.broadcast %70 : f32 to vector<2x169xf32>
    %995 = arith.mulf %975, %994 : vector<2x169xf32>
    %996 = arith.addf %970, %995 : vector<2x169xf32>
    %997 = vector.broadcast %71 : f32 to vector<2x169xf32>
    %998 = arith.mulf %975, %997 : vector<2x169xf32>
    %999 = arith.addf %973, %998 : vector<2x169xf32>
    %1000 = arith.maximumf %766, %978 : vector<2x169xf32>
    %1001 = arith.maximumf %767, %981 : vector<2x169xf32>
    %1002 = arith.maximumf %768, %984 : vector<2x169xf32>
    %1003 = arith.maximumf %769, %987 : vector<2x169xf32>
    %1004 = arith.maximumf %770, %990 : vector<2x169xf32>
    %1005 = arith.maximumf %771, %993 : vector<2x169xf32>
    %1006 = arith.maximumf %772, %996 : vector<2x169xf32>
    %1007 = arith.maximumf %773, %999 : vector<2x169xf32>
    %1008 = vector.broadcast %72 : f32 to vector<2x169xf32>
    %1009 = arith.addf %1000, %1008 : vector<2x169xf32>
    %cst = arith.constant 0.000000e+00 : f32
    %1010 = vector.broadcast %cst : f32 to vector<2x169xf32>
    %1011 = arith.maximumf %1009, %1010 : vector<2x169xf32>
    %1012 = vector.broadcast %73 : f32 to vector<2x169xf32>
    %1013 = arith.addf %1001, %1012 : vector<2x169xf32>
    %cst_224 = arith.constant 0.000000e+00 : f32
    %1014 = vector.broadcast %cst_224 : f32 to vector<2x169xf32>
    %1015 = arith.maximumf %1013, %1014 : vector<2x169xf32>
    %1016 = vector.broadcast %74 : f32 to vector<2x169xf32>
    %1017 = arith.addf %1002, %1016 : vector<2x169xf32>
    %cst_225 = arith.constant 0.000000e+00 : f32
    %1018 = vector.broadcast %cst_225 : f32 to vector<2x169xf32>
    %1019 = arith.maximumf %1017, %1018 : vector<2x169xf32>
    %1020 = vector.broadcast %75 : f32 to vector<2x169xf32>
    %1021 = arith.addf %1003, %1020 : vector<2x169xf32>
    %cst_226 = arith.constant 0.000000e+00 : f32
    %1022 = vector.broadcast %cst_226 : f32 to vector<2x169xf32>
    %1023 = arith.maximumf %1021, %1022 : vector<2x169xf32>
    %1024 = vector.broadcast %76 : f32 to vector<2x169xf32>
    %1025 = arith.addf %1004, %1024 : vector<2x169xf32>
    %cst_227 = arith.constant 0.000000e+00 : f32
    %1026 = vector.broadcast %cst_227 : f32 to vector<2x169xf32>
    %1027 = arith.maximumf %1025, %1026 : vector<2x169xf32>
    %1028 = vector.broadcast %77 : f32 to vector<2x169xf32>
    %1029 = arith.addf %1005, %1028 : vector<2x169xf32>
    %cst_228 = arith.constant 0.000000e+00 : f32
    %1030 = vector.broadcast %cst_228 : f32 to vector<2x169xf32>
    %1031 = arith.maximumf %1029, %1030 : vector<2x169xf32>
    %1032 = vector.broadcast %78 : f32 to vector<2x169xf32>
    %1033 = arith.addf %1006, %1032 : vector<2x169xf32>
    %cst_229 = arith.constant 0.000000e+00 : f32
    %1034 = vector.broadcast %cst_229 : f32 to vector<2x169xf32>
    %1035 = arith.maximumf %1033, %1034 : vector<2x169xf32>
    %1036 = vector.broadcast %79 : f32 to vector<2x169xf32>
    %1037 = arith.addf %1007, %1036 : vector<2x169xf32>
    %cst_230 = arith.constant 0.000000e+00 : f32
    %1038 = vector.broadcast %cst_230 : f32 to vector<2x169xf32>
    %1039 = arith.maximumf %1037, %1038 : vector<2x169xf32>
    %c0_231 = arith.constant 0 : index
    %c0_232 = arith.constant 0 : index
    %c0_233 = arith.constant 0 : index
    %1040 = vector.load %arg3[%c0_231, %c0_232, %c0_233] : memref<8x169x676xf32, #tpu.memory_space<vmem>>, vector<1x169x676xf32>
    %1041 = vector.shape_cast %1040 : vector<1x169x676xf32> to vector<169x676xf32>
    %cst_234 = arith.constant dense<0.000000e+00> : vector<2x676xf32>
    %1042 = tpu.matmul %1011, %1041, %cst_234 {dimension_numbers = #tpu.dot_dimension_numbers<[1], [0], [0], [1], [0, 0, 1, 1], [], []>} : vector<2x169xf32>, vector<169x676xf32>, vector<2x676xf32> -> vector<2x676xf32>
    %c1_235 = arith.constant 1 : index
    %c0_236 = arith.constant 0 : index
    %c0_237 = arith.constant 0 : index
    %1043 = vector.load %arg3[%c1_235, %c0_236, %c0_237] : memref<8x169x676xf32, #tpu.memory_space<vmem>>, vector<1x169x676xf32>
    %1044 = vector.shape_cast %1043 : vector<1x169x676xf32> to vector<169x676xf32>
    %cst_238 = arith.constant dense<0.000000e+00> : vector<2x676xf32>
    %1045 = tpu.matmul %1015, %1044, %cst_238 {dimension_numbers = #tpu.dot_dimension_numbers<[1], [0], [0], [1], [0, 0, 1, 1], [], []>} : vector<2x169xf32>, vector<169x676xf32>, vector<2x676xf32> -> vector<2x676xf32>
    %1046 = arith.addf %1042, %1045 : vector<2x676xf32>
    %c2_239 = arith.constant 2 : index
    %c0_240 = arith.constant 0 : index
    %c0_241 = arith.constant 0 : index
    %1047 = vector.load %arg3[%c2_239, %c0_240, %c0_241] : memref<8x169x676xf32, #tpu.memory_space<vmem>>, vector<1x169x676xf32>
    %1048 = vector.shape_cast %1047 : vector<1x169x676xf32> to vector<169x676xf32>
    %cst_242 = arith.constant dense<0.000000e+00> : vector<2x676xf32>
    %1049 = tpu.matmul %1019, %1048, %cst_242 {dimension_numbers = #tpu.dot_dimension_numbers<[1], [0], [0], [1], [0, 0, 1, 1], [], []>} : vector<2x169xf32>, vector<169x676xf32>, vector<2x676xf32> -> vector<2x676xf32>
    %1050 = arith.addf %1046, %1049 : vector<2x676xf32>
    %c3_243 = arith.constant 3 : index
    %c0_244 = arith.constant 0 : index
    %c0_245 = arith.constant 0 : index
    %1051 = vector.load %arg3[%c3_243, %c0_244, %c0_245] : memref<8x169x676xf32, #tpu.memory_space<vmem>>, vector<1x169x676xf32>
    %1052 = vector.shape_cast %1051 : vector<1x169x676xf32> to vector<169x676xf32>
    %cst_246 = arith.constant dense<0.000000e+00> : vector<2x676xf32>
    %1053 = tpu.matmul %1023, %1052, %cst_246 {dimension_numbers = #tpu.dot_dimension_numbers<[1], [0], [0], [1], [0, 0, 1, 1], [], []>} : vector<2x169xf32>, vector<169x676xf32>, vector<2x676xf32> -> vector<2x676xf32>
    %1054 = arith.addf %1050, %1053 : vector<2x676xf32>
    %c4_247 = arith.constant 4 : index
    %c0_248 = arith.constant 0 : index
    %c0_249 = arith.constant 0 : index
    %1055 = vector.load %arg3[%c4_247, %c0_248, %c0_249] : memref<8x169x676xf32, #tpu.memory_space<vmem>>, vector<1x169x676xf32>
    %1056 = vector.shape_cast %1055 : vector<1x169x676xf32> to vector<169x676xf32>
    %cst_250 = arith.constant dense<0.000000e+00> : vector<2x676xf32>
    %1057 = tpu.matmul %1027, %1056, %cst_250 {dimension_numbers = #tpu.dot_dimension_numbers<[1], [0], [0], [1], [0, 0, 1, 1], [], []>} : vector<2x169xf32>, vector<169x676xf32>, vector<2x676xf32> -> vector<2x676xf32>
    %1058 = arith.addf %1054, %1057 : vector<2x676xf32>
    %c5_251 = arith.constant 5 : index
    %c0_252 = arith.constant 0 : index
    %c0_253 = arith.constant 0 : index
    %1059 = vector.load %arg3[%c5_251, %c0_252, %c0_253] : memref<8x169x676xf32, #tpu.memory_space<vmem>>, vector<1x169x676xf32>
    %1060 = vector.shape_cast %1059 : vector<1x169x676xf32> to vector<169x676xf32>
    %cst_254 = arith.constant dense<0.000000e+00> : vector<2x676xf32>
    %1061 = tpu.matmul %1031, %1060, %cst_254 {dimension_numbers = #tpu.dot_dimension_numbers<[1], [0], [0], [1], [0, 0, 1, 1], [], []>} : vector<2x169xf32>, vector<169x676xf32>, vector<2x676xf32> -> vector<2x676xf32>
    %1062 = arith.addf %1058, %1061 : vector<2x676xf32>
    %c6_255 = arith.constant 6 : index
    %c0_256 = arith.constant 0 : index
    %c0_257 = arith.constant 0 : index
    %1063 = vector.load %arg3[%c6_255, %c0_256, %c0_257] : memref<8x169x676xf32, #tpu.memory_space<vmem>>, vector<1x169x676xf32>
    %1064 = vector.shape_cast %1063 : vector<1x169x676xf32> to vector<169x676xf32>
    %cst_258 = arith.constant dense<0.000000e+00> : vector<2x676xf32>
    %1065 = tpu.matmul %1035, %1064, %cst_258 {dimension_numbers = #tpu.dot_dimension_numbers<[1], [0], [0], [1], [0, 0, 1, 1], [], []>} : vector<2x169xf32>, vector<169x676xf32>, vector<2x676xf32> -> vector<2x676xf32>
    %1066 = arith.addf %1062, %1065 : vector<2x676xf32>
    %c7_259 = arith.constant 7 : index
    %c0_260 = arith.constant 0 : index
    %c0_261 = arith.constant 0 : index
    %1067 = vector.load %arg3[%c7_259, %c0_260, %c0_261] : memref<8x169x676xf32, #tpu.memory_space<vmem>>, vector<1x169x676xf32>
    %1068 = vector.shape_cast %1067 : vector<1x169x676xf32> to vector<169x676xf32>
    %cst_262 = arith.constant dense<0.000000e+00> : vector<2x676xf32>
    %1069 = tpu.matmul %1039, %1068, %cst_262 {dimension_numbers = #tpu.dot_dimension_numbers<[1], [0], [0], [1], [0, 0, 1, 1], [], []>} : vector<2x169xf32>, vector<169x676xf32>, vector<2x676xf32> -> vector<2x676xf32>
    %1070 = arith.addf %1066, %1069 : vector<2x676xf32>
    %c0_263 = arith.constant 0 : index
    %c0_264 = arith.constant 0 : index
    %1071 = vector.load %arg4[%c0_263, %c0_264] : memref<1x676xf32, #tpu.memory_space<vmem>>, vector<1x676xf32>
    %1072 = vector.broadcast %1071 : vector<1x676xf32> to vector<2x676xf32>
    %1073 = arith.addf %1070, %1072 : vector<2x676xf32>
    %cst_265 = arith.constant 0.000000e+00 : f32
    %1074 = vector.broadcast %cst_265 : f32 to vector<2x676xf32>
    %1075 = arith.maximumf %1073, %1074 : vector<2x676xf32>
    %c0_266 = arith.constant 0 : index
    %c0_267 = arith.constant 0 : index
    %1076 = vector.load %arg5[%c0_266, %c0_267] : memref<676x84xf32, #tpu.memory_space<vmem>>, vector<676x84xf32>
    %cst_268 = arith.constant dense<0.000000e+00> : vector<2x84xf32>
    %1077 = tpu.matmul %1075, %1076, %cst_268 {dimension_numbers = #tpu.dot_dimension_numbers<[1], [0], [0], [1], [0, 0, 1, 1], [], []>} : vector<2x676xf32>, vector<676x84xf32>, vector<2x84xf32> -> vector<2x84xf32>
    %c0_269 = arith.constant 0 : index
    %c0_270 = arith.constant 0 : index
    %1078 = vector.load %arg6[%c0_269, %c0_270] : memref<1x84xf32, #tpu.memory_space<vmem>>, vector<1x84xf32>
    %1079 = vector.broadcast %1078 : vector<1x84xf32> to vector<2x84xf32>
    %1080 = arith.addf %1077, %1079 : vector<2x84xf32>
    %cst_271 = arith.constant 0.000000e+00 : f32
    %1081 = vector.broadcast %cst_271 : f32 to vector<2x84xf32>
    %1082 = arith.maximumf %1080, %1081 : vector<2x84xf32>
    %c0_272 = arith.constant 0 : index
    %c0_273 = arith.constant 0 : index
    %1083 = vector.load %arg7[%c0_272, %c0_273] : memref<84x10xf32, #tpu.memory_space<vmem>>, vector<84x10xf32>
    %cst_274 = arith.constant dense<0.000000e+00> : vector<2x10xf32>
    %1084 = tpu.matmul %1082, %1083, %cst_274 {dimension_numbers = #tpu.dot_dimension_numbers<[1], [0], [0], [1], [0, 0, 1, 1], [], []>} : vector<2x84xf32>, vector<84x10xf32>, vector<2x10xf32> -> vector<2x10xf32>
    %c0_275 = arith.constant 0 : index
    %c0_276 = arith.constant 0 : index
    %1085 = vector.load %arg8[%c0_275, %c0_276] : memref<1x10xf32, #tpu.memory_space<vmem>>, vector<1x10xf32>
    %1086 = vector.broadcast %1085 : vector<1x10xf32> to vector<2x10xf32>
    %1087 = arith.addf %1084, %1086 : vector<2x10xf32>
    %c0_277 = arith.constant 0 : index
    %c0_278 = arith.constant 0 : index
    %1088 = vector.load %arg9[%c0_277, %c0_278] : memref<2x10xf32, #tpu.memory_space<vmem>>, vector<2x10xf32>
    tpu.vector_store %arg9[%c0_277, %c0_278], %1087 {strides = array<i32>} : memref<2x10xf32, #tpu.memory_space<vmem>>, vector<2x10xf32>,
    return
  }
}

</mosaic_0001>

<llo_original>
// kernel: forward.1
$region0: #{forward.1}
  #allocation0 [shape = 'u32[]', space=smem, size = 0x4, offset = 0x4, fixed_abs, tag = 'smem constant byte address 0x4 - core index']
  #allocation1 [shape = 'u32[144,128]{1,0:T(1,128)}', space=vmem, size = 0x12000, scoped, tag = 'internal scratch']
  %s0 = inlined_call_operand.vmem [shape: f32[36,2,169], index: 0, kind: input, shape index: {}]
  %s1 = inlined_call_operand.vmem [shape: f32[9,8], index: 1, kind: input, shape index: {}]
  %s2 = inlined_call_operand.vmem [shape: f32[8], index: 2, kind: input, shape index: {}]
  %s3 = inlined_call_operand.vmem [shape: f32[8,169,676], index: 3, kind: input, shape index: {}]
  %s4 = inlined_call_operand.vmem [shape: f32[1,676], index: 4, kind: input, shape index: {}]
  %s5 = inlined_call_operand.vmem [shape: f32[676,84], index: 5, kind: input, shape index: {}]
  %s6 = inlined_call_operand.vmem [shape: f32[1,84], index: 6, kind: input, shape index: {}]
  %s7 = inlined_call_operand.vmem [shape: f32[84,10], index: 7, kind: input, shape index: {}]
  %s8 = inlined_call_operand.vmem [shape: f32[1,10], index: 8, kind: input, shape index: {}]
  %s9 = inlined_call_operand.hbm [shape: f32[2,10], index: 9, kind: output, shape index: {}]
  %s10 = sld [smem:[#allocation0]]
  $region54: #{forward.1} parent=0
    _
  %s12 = ssub.s32 1, %s10
  %s13 = scalar_select 0, %s12, %s10
  $region1: #{forward.1} parent=0
    #allocation2 [shape = 'u8[8192]{0}', space=smem, size = 0x2000, scoped, tag = 'input window, operand 1, single buffered']
    #allocation3 [shape = 's32[1]{0}', space=sflag, size = 0x4, scoped, tag = 'scoped memory for forward.1']
    #allocation4 [shape = 's32[1]{0}', space=sflag, size = 0x4, scoped, tag = 'scoped memory for forward.1']
    #allocation5 [shape = 'u8[512]{0}', space=smem, size = 0x200, scoped, tag = 'input window, operand 2, single buffered']
    #allocation6 [shape = 's32[1]{0}', space=sflag, size = 0x4, scoped, tag = 'scoped memory for forward.1']
    #allocation7 [shape = 'u8[1024]{0}', space=vmem, size = 0x400, scoped, tag = 'output window, operand 0, single buffered']
    %14 = vsyncpa [#allocation4], 0
    %15 = vsyncpa [#allocation6], 0
    %16 = vsyncpa [#allocation3], 0
    // Predicated region
    $region2: #{forward.1} parent=1 // pred_check
      _
    $region3: #{forward.1} parent=1 // pred_check_branch
      %18 = sbr.rel (0) target = $region5
    $region4: #{forward.1} parent=1 // pred_region
      _
    $region5: #{forward.1} parent=1 // pred_fallthru
      _
    // Predicated region
    $region6: #{forward.1} parent=1 // pred_check
      _
    $region7: #{forward.1} parent=1 // pred_check_branch
      %20 = sbr.rel (0) target = $region9
    $region8: #{forward.1} parent=1 // pred_region
      %s22 = ssub.s32 256, 256
      %23 = vsyncadd [#allocation4], %s22
      %s24 = sshll.u32 %s1, 4
      %s25 = int_to_ptr.vmem [resolvable:$true] %s24
      %30 = dma.vmem_to_smem %s25, 256, [#allocation2], [#allocation4], 128, 128, 8
    $region9: #{forward.1} parent=1 // pred_fallthru
      _
    // Predicated region
    $region10: #{forward.1} parent=1 // pred_check
      _
    $region11: #{forward.1} parent=1 // pred_check_branch
      %32 = sbr.rel (0) target = $region13
    $region12: #{forward.1} parent=1 // pred_region
      %s34 = ssub.s32 16, 16
      %35 = vsyncadd [#allocation6], %s34
      %s37 = sshll.u32 %s2, 4
      %s38 = int_to_ptr.vmem [resolvable:$true] %s37
      %40 = dma.vmem_to_smem %s38, 16, [#allocation5], [#allocation6]
    $region13: #{forward.1} parent=1 // pred_fallthru
      _
    // Predicated region
    $region14: #{forward.1} parent=1 // pred_check
      _
    $region15: #{forward.1} parent=1 // pred_check_branch
      %42 = sbr.rel (0) target = $region17
    $region16: #{forward.1} parent=1 // pred_region
      _
    $region17: #{forward.1} parent=1 // pred_fallthru
      _
    // Predicated region
    $region18: #{forward.1} parent=1 // pred_check
      _
    $region19: #{forward.1} parent=1 // pred_check_branch
      %44 = sbr.rel (0) target = $region21
    $region20: #{forward.1} parent=1 // pred_region
      _
    $region21: #{forward.1} parent=1 // pred_fallthru
      _
    // Predicated region
    $region22: #{forward.1} parent=1 // pred_check
      _
    $region23: #{forward.1} parent=1 // pred_check_branch
      %46 = sbr.rel (0) target = $region25
    $region24: #{forward.1} parent=1 // pred_region
      _
    $region25: #{forward.1} parent=1 // pred_fallthru
      _
    // Predicated region
    $region26: #{forward.1} parent=1 // pred_check
      _
    $region27: #{forward.1} parent=1 // pred_check_branch
      %48 = sbr.rel (0) target = $region29
    $region28: #{forward.1} parent=1 // pred_region
      _
    $region29: #{forward.1} parent=1 // pred_fallthru
      _
    // Predicated region
    $region30: #{forward.1} parent=1 // pred_check
      _
    $region31: #{forward.1} parent=1 // pred_check_branch
      %50 = sbr.rel (0) target = $region33
    $region32: #{forward.1} parent=1 // pred_region
      _
    $region33: #{forward.1} parent=1 // pred_fallthru
      _
    // Predicated region
    $region34: #{forward.1} parent=1 // pred_check
      _
    $region35: #{forward.1} parent=1 // pred_check_branch
      %52 = sbr.rel (0) target = $region37
    $region36: #{forward.1} parent=1 // pred_region
      _
    $region37: #{forward.1} parent=1 // pred_fallthru
      _
    // Predicated region
    $region38: #{forward.1} parent=1 // pred_check
      _
    $region39: #{forward.1} parent=1 // pred_check_branch
      %54 = sbr.rel (0) target = $region41
    $region40: #{forward.1} parent=1 // pred_region
      %55 = dma.done [#allocation4], 256
    $region41: #{forward.1} parent=1 // pred_fallthru
      _
    // Predicated region
    $region42: #{forward.1} parent=1 // pred_check
      _
    $region43: #{forward.1} parent=1 // pred_check_branch
      %57 = sbr.rel (0) target = $region45
    $region44: #{forward.1} parent=1 // pred_region
      %58 = dma.done [#allocation6], 16
    $region45: #{forward.1} parent=1 // pred_fallthru
      _
    %59 = sfence
    %s60 = sld [smem:[#allocation2]]
    %s61 = sld [smem:[#allocation2 + $0x1]]
    %s62 = sld [smem:[#allocation2 + $0x2]]
    %s63 = sld [smem:[#allocation2 + $0x3]]
    %s64 = sld [smem:[#allocation2 + $0x4]]
    %s65 = sld [smem:[#allocation2 + $0x5]]
    %s66 = sld [smem:[#allocation2 + $0x6]]
    %s67 = sld [smem:[#allocation2 + $0x7]]
    %s68 = sld [smem:[#allocation2 + $0x80]]
    %s69 = sld [smem:[#allocation2 + $0x81]]
    %s70 = sld [smem:[#allocation2 + $0x82]]
    %s71 = sld [smem:[#allocation2 + $0x83]]
    %s72 = sld [smem:[#allocation2 + $0x84]]
    %s73 = sld [smem:[#allocation2 + $0x85]]
    %s74 = sld [smem:[#allocation2 + $0x86]]
    %s75 = sld [smem:[#allocation2 + $0x87]]
    %s76 = sld [smem:[#allocation2 + $0x100]]
    %s77 = sld [smem:[#allocation2 + $0x101]]
    %s78 = sld [smem:[#allocation2 + $0x102]]
    %s79 = sld [smem:[#allocation2 + $0x103]]
    %s80 = sld [smem:[#allocation2 + $0x104]]
    %s81 = sld [smem:[#allocation2 + $0x105]]
    %s82 = sld [smem:[#allocation2 + $0x106]]
    %s83 = sld [smem:[#allocation2 + $0x107]]
    %s84 = sld [smem:[#allocation2 + $0x180]]
    %s85 = sld [smem:[#allocation2 + $0x181]]
    %s86 = sld [smem:[#allocation2 + $0x182]]
    %s87 = sld [smem:[#allocation2 + $0x183]]
    %s88 = sld [smem:[#allocation2 + $0x184]]
    %s89 = sld [smem:[#allocation2 + $0x185]]
    %s90 = sld [smem:[#allocation2 + $0x186]]
    %s91 = sld [smem:[#allocation2 + $0x187]]
    %s92 = sld [smem:[#allocation2 + $0x200]]
    %s93 = sld [smem:[#allocation2 + $0x201]]
    %s94 = sld [smem:[#allocation2 + $0x202]]
    %s95 = sld [smem:[#allocation2 + $0x203]]
    %s96 = sld [smem:[#allocation2 + $0x204]]
    %s97 = sld [smem:[#allocation2 + $0x205]]
    %s98 = sld [smem:[#allocation2 + $0x206]]
    %s99 = sld [smem:[#allocation2 + $0x207]]
    %s100 = sld [smem:[#allocation2 + $0x280]]
    %s101 = sld [smem:[#allocation2 + $0x281]]
    %s102 = sld [smem:[#allocation2 + $0x282]]
    %s103 = sld [smem:[#allocation2 + $0x283]]
    %s104 = sld [smem:[#allocation2 + $0x284]]
    %s105 = sld [smem:[#allocation2 + $0x285]]
    %s106 = sld [smem:[#allocation2 + $0x286]]
    %s107 = sld [smem:[#allocation2 + $0x287]]
    %s108 = sld [smem:[#allocation2 + $0x300]]
    %s109 = sld [smem:[#allocation2 + $0x301]]
    %s110 = sld [smem:[#allocation2 + $0x302]]
    %s111 = sld [smem:[#allocation2 + $0x303]]
    %s112 = sld [smem:[#allocation2 + $0x304]]
    %s113 = sld [smem:[#allocation2 + $0x305]]
    %s114 = sld [smem:[#allocation2 + $0x306]]
    %s115 = sld [smem:[#allocation2 + $0x307]]
    %s116 = sld [smem:[#allocation2 + $0x380]]
    %s117 = sld [smem:[#allocation2 + $0x381]]
    %s118 = sld [smem:[#allocation2 + $0x382]]
    %s119 = sld [smem:[#allocation2 + $0x383]]
    %s120 = sld [smem:[#allocation2 + $0x384]]
    %s121 = sld [smem:[#allocation2 + $0x385]]
    %s122 = sld [smem:[#allocation2 + $0x386]]
    %s123 = sld [smem:[#allocation2 + $0x387]]
    %s124 = sld [smem:[#allocation2 + $0x400]]
    %s125 = sld [smem:[#allocation2 + $0x401]]
    %s126 = sld [smem:[#allocation2 + $0x402]]
    %s127 = sld [smem:[#allocation2 + $0x403]]
    %s128 = sld [smem:[#allocation2 + $0x404]]
    %s129 = sld [smem:[#allocation2 + $0x405]]
    %s130 = sld [smem:[#allocation2 + $0x406]]
    %s131 = sld [smem:[#allocation2 + $0x407]]
    %s132 = sld [smem:[#allocation5]]
    %s133 = sld [smem:[#allocation5 + $0x1]]
    %s134 = sld [smem:[#allocation5 + $0x2]]
    %s135 = sld [smem:[#allocation5 + $0x3]]
    %s136 = sld [smem:[#allocation5 + $0x4]]
    %s137 = sld [smem:[#allocation5 + $0x5]]
    %s138 = sld [smem:[#allocation5 + $0x6]]
    %s139 = sld [smem:[#allocation5 + $0x7]]
    %v140 = vld [vmem:[%s0] sm:$0xf]
    %v141 = vstv %s60
    %v142 = vmul.f32 %v140, %v141
    %v143 = vstv %s61
    %v144 = vmul.f32 %v140, %v143
    %v145 = vstv %s62
    %v146 = vmul.f32 %v140, %v145
    %v147 = vstv %s63
    %v148 = vmul.f32 %v140, %v147
    %v149 = vstv %s64
    %v150 = vmul.f32 %v140, %v149
    %v151 = vstv %s65
    %v152 = vmul.f32 %v140, %v151
    %v153 = vstv %s66
    %v154 = vmul.f32 %v140, %v153
    %v155 = vstv %s67
    %v156 = vmul.f32 %v140, %v155
    %s157 = scalar_lea.vmem %s0, 4
    %v158 = vld [vmem:[%s157] sm:$0xf]
    %v159 = vstv %s68
    %v160 = vmul.f32 %v158, %v159
    %v161 = vadd.f32 %v142, %v160
    %v162 = vstv %s69
    %v163 = vmul.f32 %v158, %v162
    %v164 = vadd.f32 %v144, %v163
    %v165 = vstv %s70
    %v166 = vmul.f32 %v158, %v165
    %v167 = vadd.f32 %v146, %v166
    %v168 = vstv %s71
    %v169 = vmul.f32 %v158, %v168
    %v170 = vadd.f32 %v148, %v169
    %v171 = vstv %s72
    %v172 = vmul.f32 %v158, %v171
    %v173 = vadd.f32 %v150, %v172
    %v174 = vstv %s73
    %v175 = vmul.f32 %v158, %v174
    %v176 = vadd.f32 %v152, %v175
    %v177 = vstv %s74
    %v178 = vmul.f32 %v158, %v177
    %v179 = vadd.f32 %v154, %v178
    %v180 = vstv %s75
    %v181 = vmul.f32 %v158, %v180
    %v182 = vadd.f32 %v156, %v181
    %s183 = scalar_lea.vmem %s0, 8
    %v184 = vld [vmem:[%s183] sm:$0xf]
    %v185 = vstv %s76
    %v186 = vmul.f32 %v184, %v185
    %v187 = vadd.f32 %v161, %v186
    %v188 = vstv %s77
    %v189 = vmul.f32 %v184, %v188
    %v190 = vadd.f32 %v164, %v189
    %v191 = vstv %s78
    %v192 = vmul.f32 %v184, %v191
    %v193 = vadd.f32 %v167, %v192
    %v194 = vstv %s79
    %v195 = vmul.f32 %v184, %v194
    %v196 = vadd.f32 %v170, %v195
    %v197 = vstv %s80
    %v198 = vmul.f32 %v184, %v197
    %v199 = vadd.f32 %v173, %v198
    %v200 = vstv %s81
    %v201 = vmul.f32 %v184, %v200
    %v202 = vadd.f32 %v176, %v201
    %v203 = vstv %s82
    %v204 = vmul.f32 %v184, %v203
    %v205 = vadd.f32 %v179, %v204
    %v206 = vstv %s83
    %v207 = vmul.f32 %v184, %v206
    %v208 = vadd.f32 %v182, %v207
    %s209 = scalar_lea.vmem %s0, 12
    %v210 = vld [vmem:[%s209] sm:$0xf]
    %v211 = vstv %s84
    %v212 = vmul.f32 %v210, %v211
    %v213 = vadd.f32 %v187, %v212
    %v214 = vstv %s85
    %v215 = vmul.f32 %v210, %v214
    %v216 = vadd.f32 %v190, %v215
    %v217 = vstv %s86
    %v218 = vmul.f32 %v210, %v217
    %v219 = vadd.f32 %v193, %v218
    %v220 = vstv %s87
    %v221 = vmul.f32 %v210, %v220
    %v222 = vadd.f32 %v196, %v221
    %v223 = vstv %s88
    %v224 = vmul.f32 %v210, %v223
    %v225 = vadd.f32 %v199, %v224
    %v226 = vstv %s89
    %v227 = vmul.f32 %v210, %v226
    %v228 = vadd.f32 %v202, %v227
    %v229 = vstv %s90
    %v230 = vmul.f32 %v210, %v229
    %v231 = vadd.f32 %v205, %v230
    %v232 = vstv %s91
    %v233 = vmul.f32 %v210, %v232
    %v234 = vadd.f32 %v208, %v233
    %s235 = scalar_lea.vmem %s0, 16
    %v236 = vld [vmem:[%s235] sm:$0xf]
    %v237 = vstv %s92
    %v238 = vmul.f32 %v236, %v237
    %v239 = vadd.f32 %v213, %v238
    %v240 = vstv %s93
    %v241 = vmul.f32 %v236, %v240
    %v242 = vadd.f32 %v216, %v241
    %v243 = vstv %s94
    %v244 = vmul.f32 %v236, %v243
    %v245 = vadd.f32 %v219, %v244
    %v246 = vstv %s95
    %v247 = vmul.f32 %v236, %v246
    %v248 = vadd.f32 %v222, %v247
    %v249 = vstv %s96
    %v250 = vmul.f32 %v236, %v249
    %v251 = vadd.f32 %v225, %v250
    %v252 = vstv %s97
    %v253 = vmul.f32 %v236, %v252
    %v254 = vadd.f32 %v228, %v253
    %v255 = vstv %s98
    %v256 = vmul.f32 %v236, %v255
    %v257 = vadd.f32 %v231, %v256
    %v258 = vstv %s99
    %v259 = vmul.f32 %v236, %v258
    %v260 = vadd.f32 %v234, %v259
    %s261 = scalar_lea.vmem %s0, 20
    %v262 = vld [vmem:[%s261] sm:$0xf]
    %v263 = vstv %s100
    %v264 = vmul.f32 %v262, %v263
    %v265 = vadd.f32 %v239, %v264
    %v266 = vstv %s101
    %v267 = vmul.f32 %v262, %v266
    %v268 = vadd.f32 %v242, %v267
    %v269 = vstv %s102
    %v270 = vmul.f32 %v262, %v269
    %v271 = vadd.f32 %v245, %v270
    %v272 = vstv %s103
    %v273 = vmul.f32 %v262, %v272
    %v274 = vadd.f32 %v248, %v273
    %v275 = vstv %s104
    %v276 = vmul.f32 %v262, %v275
    %v277 = vadd.f32 %v251, %v276
    %v278 = vstv %s105
    %v279 = vmul.f32 %v262, %v278
    %v280 = vadd.f32 %v254, %v279
    %v281 = vstv %s106
    %v282 = vmul.f32 %v262, %v281
    %v283 = vadd.f32 %v257, %v282
    %v284 = vstv %s107
    %v285 = vmul.f32 %v262, %v284
    %v286 = vadd.f32 %v260, %v285
    %s287 = scalar_lea.vmem %s0, 24
    %v288 = vld [vmem:[%s287] sm:$0xf]
    %v289 = vstv %s108
    %v290 = vmul.f32 %v288, %v289
    %v291 = vadd.f32 %v265, %v290
    %v292 = vstv %s109
    %v293 = vmul.f32 %v288, %v292
    %v294 = vadd.f32 %v268, %v293
    %v295 = vstv %s110
    %v296 = vmul.f32 %v288, %v295
    %v297 = vadd.f32 %v271, %v296
    %v298 = vstv %s111
    %v299 = vmul.f32 %v288, %v298
    %v300 = vadd.f32 %v274, %v299
    %v301 = vstv %s112
    %v302 = vmul.f32 %v288, %v301
    %v303 = vadd.f32 %v277, %v302
    %v304 = vstv %s113
    %v305 = vmul.f32 %v288, %v304
    %v306 = vadd.f32 %v280, %v305
    %v307 = vstv %s114
    %v308 = vmul.f32 %v288, %v307
    %v309 = vadd.f32 %v283, %v308
    %v310 = vstv %s115
    %v311 = vmul.f32 %v288, %v310
    %v312 = vadd.f32 %v286, %v311
    %s313 = scalar_lea.vmem %s0, 28
    %v314 = vld [vmem:[%s313] sm:$0xf]
    %v315 = vstv %s116
    %v316 = vmul.f32 %v314, %v315
    %v317 = vadd.f32 %v291, %v316
    %v318 = vstv %s117
    %v319 = vmul.f32 %v314, %v318
    %v320 = vadd.f32 %v294, %v319
    %v321 = vstv %s118
    %v322 = vmul.f32 %v314, %v321
    %v323 = vadd.f32 %v297, %v322
    %v324 = vstv %s119
    %v325 = vmul.f32 %v314, %v324
    %v326 = vadd.f32 %v300, %v325
    %v327 = vstv %s120
    %v328 = vmul.f32 %v314, %v327
    %v329 = vadd.f32 %v303, %v328
    %v330 = vstv %s121
    %v331 = vmul.f32 %v314, %v330
    %v332 = vadd.f32 %v306, %v331
    %v333 = vstv %s122
    %v334 = vmul.f32 %v314, %v333
    %v335 = vadd.f32 %v309, %v334
    %v336 = vstv %s123
    %v337 = vmul.f32 %v314, %v336
    %v338 = vadd.f32 %v312, %v337
    %s339 = scalar_lea.vmem %s0, 32
    %v340 = vld [vmem:[%s339] sm:$0xf]
    %v341 = vstv %s124
    %v342 = vmul.f32 %v340, %v341
    %v343 = vadd.f32 %v317, %v342
    %v344 = vstv %s125
    %v345 = vmul.f32 %v340, %v344
    %v346 = vadd.f32 %v320, %v345
    %v347 = vstv %s126
    %v348 = vmul.f32 %v340, %v347
    %v349 = vadd.f32 %v323, %v348
    %v350 = vstv %s127
    %v351 = vmul.f32 %v340, %v350
    %v352 = vadd.f32 %v326, %v351
    %v353 = vstv %s128
    %v354 = vmul.f32 %v340, %v353
    %v355 = vadd.f32 %v329, %v354
    %v356 = vstv %s129
    %v357 = vmul.f32 %v340, %v356
    %v358 = vadd.f32 %v332, %v357
    %v359 = vstv %s130
    %v360 = vmul.f32 %v340, %v359
    %v361 = vadd.f32 %v335, %v360
    %v362 = vstv %s131
    %v363 = vmul.f32 %v340, %v362
    %v364 = vadd.f32 %v338, %v363
    %s365 = scalar_lea.vmem %s0, 36
    %v366 = vld [vmem:[%s365] sm:$0xf]
    %v367 = vmul.f32 %v366, %v141
    %v368 = vmul.f32 %v366, %v143
    %v369 = vmul.f32 %v366, %v145
    %v370 = vmul.f32 %v366, %v147
    %v371 = vmul.f32 %v366, %v149
    %v372 = vmul.f32 %v366, %v151
    %v373 = vmul.f32 %v366, %v153
    %v374 = vmul.f32 %v366, %v155
    %s375 = scalar_lea.vmem %s0, 40
    %v376 = vld [vmem:[%s375] sm:$0xf]
    %v377 = vmul.f32 %v376, %v159
    %v378 = vadd.f32 %v367, %v377
    %v379 = vmul.f32 %v376, %v162
    %v380 = vadd.f32 %v368, %v379
    %v381 = vmul.f32 %v376, %v165
    %v382 = vadd.f32 %v369, %v381
    %v383 = vmul.f32 %v376, %v168
    %v384 = vadd.f32 %v370, %v383
    %v385 = vmul.f32 %v376, %v171
    %v386 = vadd.f32 %v371, %v385
    %v387 = vmul.f32 %v376, %v174
    %v388 = vadd.f32 %v372, %v387
    %v389 = vmul.f32 %v376, %v177
    %v390 = vadd.f32 %v373, %v389
    %v391 = vmul.f32 %v376, %v180
    %v392 = vadd.f32 %v374, %v391
    %s393 = scalar_lea.vmem %s0, 44
    %v394 = vld [vmem:[%s393] sm:$0xf]
    %v395 = vmul.f32 %v394, %v185
    %v396 = vadd.f32 %v378, %v395
    %v397 = vmul.f32 %v394, %v188
    %v398 = vadd.f32 %v380, %v397
    %v399 = vmul.f32 %v394, %v191
    %v400 = vadd.f32 %v382, %v399
    %v401 = vmul.f32 %v394, %v194
    %v402 = vadd.f32 %v384, %v401
    %v403 = vmul.f32 %v394, %v197
    %v404 = vadd.f32 %v386, %v403
    %v405 = vmul.f32 %v394, %v200
    %v406 = vadd.f32 %v388, %v405
    %v407 = vmul.f32 %v394, %v203
    %v408 = vadd.f32 %v390, %v407
    %v409 = vmul.f32 %v394, %v206
    %v410 = vadd.f32 %v392, %v409
    %s411 = scalar_lea.vmem %s0, 48
    %v412 = vld [vmem:[%s411] sm:$0xf]
    %v413 = vmul.f32 %v412, %v211
    %v414 = vadd.f32 %v396, %v413
    %v415 = vmul.f32 %v412, %v214
    %v416 = vadd.f32 %v398, %v415
    %v417 = vmul.f32 %v412, %v217
    %v418 = vadd.f32 %v400, %v417
    %v419 = vmul.f32 %v412, %v220
    %v420 = vadd.f32 %v402, %v419
    %v421 = vmul.f32 %v412, %v223
    %v422 = vadd.f32 %v404, %v421
    %v423 = vmul.f32 %v412, %v226
    %v424 = vadd.f32 %v406, %v423
    %v425 = vmul.f32 %v412, %v229
    %v426 = vadd.f32 %v408, %v425
    %v427 = vmul.f32 %v412, %v232
    %v428 = vadd.f32 %v410, %v427
    %s429 = scalar_lea.vmem %s0, 52
    %v430 = vld [vmem:[%s429] sm:$0xf]
    %v431 = vmul.f32 %v430, %v237
    %v432 = vadd.f32 %v414, %v431
    %v433 = vmul.f32 %v430, %v240
    %v434 = vadd.f32 %v416, %v433
    %v435 = vmul.f32 %v430, %v243
    %v436 = vadd.f32 %v418, %v435
    %v437 = vmul.f32 %v430, %v246
    %v438 = vadd.f32 %v420, %v437
    %v439 = vmul.f32 %v430, %v249
    %v440 = vadd.f32 %v422, %v439
    %v441 = vmul.f32 %v430, %v252
    %v442 = vadd.f32 %v424, %v441
    %v443 = vmul.f32 %v430, %v255
    %v444 = vadd.f32 %v426, %v443
    %v445 = vmul.f32 %v430, %v258
    %v446 = vadd.f32 %v428, %v445
    %s447 = scalar_lea.vmem %s0, 56
    %v448 = vld [vmem:[%s447] sm:$0xf]
    %v449 = vmul.f32 %v448, %v263
    %v450 = vadd.f32 %v432, %v449
    %v451 = vmul.f32 %v448, %v266
    %v452 = vadd.f32 %v434, %v451
    %v453 = vmul.f32 %v448, %v269
    %v454 = vadd.f32 %v436, %v453
    %v455 = vmul.f32 %v448, %v272
    %v456 = vadd.f32 %v438, %v455
    %v457 = vmul.f32 %v448, %v275
    %v458 = vadd.f32 %v440, %v457
    %v459 = vmul.f32 %v448, %v278
    %v460 = vadd.f32 %v442, %v459
    %v461 = vmul.f32 %v448, %v281
    %v462 = vadd.f32 %v444, %v461
    %v463 = vmul.f32 %v448, %v284
    %v464 = vadd.f32 %v446, %v463
    %s465 = scalar_lea.vmem %s0, 60
    %v466 = vld [vmem:[%s465] sm:$0xf]
    %v467 = vmul.f32 %v466, %v289
    %v468 = vadd.f32 %v450, %v467
    %v469 = vmul.f32 %v466, %v292
    %v470 = vadd.f32 %v452, %v469
    %v471 = vmul.f32 %v466, %v295
    %v472 = vadd.f32 %v454, %v471
    %v473 = vmul.f32 %v466, %v298
    %v474 = vadd.f32 %v456, %v473
    %v475 = vmul.f32 %v466, %v301
    %v476 = vadd.f32 %v458, %v475
    %v477 = vmul.f32 %v466, %v304
    %v478 = vadd.f32 %v460, %v477
    %v479 = vmul.f32 %v466, %v307
    %v480 = vadd.f32 %v462, %v479
    %v481 = vmul.f32 %v466, %v310
    %v482 = vadd.f32 %v464, %v481
    %s483 = scalar_lea.vmem %s0, 64
    %v484 = vld [vmem:[%s483] sm:$0xf]
    %v485 = vmul.f32 %v484, %v315
    %v486 = vadd.f32 %v468, %v485
    %v487 = vmul.f32 %v484, %v318
    %v488 = vadd.f32 %v470, %v487
    %v489 = vmul.f32 %v484, %v321
    %v490 = vadd.f32 %v472, %v489
    %v491 = vmul.f32 %v484, %v324
    %v492 = vadd.f32 %v474, %v491
    %v493 = vmul.f32 %v484, %v327
    %v494 = vadd.f32 %v476, %v493
    %v495 = vmul.f32 %v484, %v330
    %v496 = vadd.f32 %v478, %v495
    %v497 = vmul.f32 %v484, %v333
    %v498 = vadd.f32 %v480, %v497
    %v499 = vmul.f32 %v484, %v336
    %v500 = vadd.f32 %v482, %v499
    %s501 = scalar_lea.vmem %s0, 68
    %v502 = vld [vmem:[%s501] sm:$0xf]
    %v503 = vmul.f32 %v502, %v341
    %v504 = vadd.f32 %v486, %v503
    %v505 = vmul.f32 %v502, %v344
    %v506 = vadd.f32 %v488, %v505
    %v507 = vmul.f32 %v502, %v347
    %v508 = vadd.f32 %v490, %v507
    %v509 = vmul.f32 %v502, %v350
    %v510 = vadd.f32 %v492, %v509
    %v511 = vmul.f32 %v502, %v353
    %v512 = vadd.f32 %v494, %v511
    %v513 = vmul.f32 %v502, %v356
    %v514 = vadd.f32 %v496, %v513
    %v515 = vmul.f32 %v502, %v359
    %v516 = vadd.f32 %v498, %v515
    %v517 = vmul.f32 %v502, %v362
    %v518 = vadd.f32 %v500, %v517
    %v519 = vmax.f32 %v343, %v504
    %v520 = vmax.f32 %v346, %v506
    %v521 = vmax.f32 %v349, %v508
    %v522 = vmax.f32 %v352, %v510
    %v523 = vmax.f32 %v355, %v512
    %v524 = vmax.f32 %v358, %v514
    %v525 = vmax.f32 %v361, %v516
    %v526 = vmax.f32 %v364, %v518
    %s527 = scalar_lea.vmem %s0, 72
    %v528 = vld [vmem:[%s527] sm:$0xf]
    %v529 = vmul.f32 %v528, %v141
    %v530 = vmul.f32 %v528, %v143
    %v531 = vmul.f32 %v528, %v145
    %v532 = vmul.f32 %v528, %v147
    %v533 = vmul.f32 %v528, %v149
    %v534 = vmul.f32 %v528, %v151
    %v535 = vmul.f32 %v528, %v153
    %v536 = vmul.f32 %v528, %v155
    %s537 = scalar_lea.vmem %s0, 76
    %v538 = vld [vmem:[%s537] sm:$0xf]
    %v539 = vmul.f32 %v538, %v159
    %v540 = vadd.f32 %v529, %v539
    %v541 = vmul.f32 %v538, %v162
    %v542 = vadd.f32 %v530, %v541
    %v543 = vmul.f32 %v538, %v165
    %v544 = vadd.f32 %v531, %v543
    %v545 = vmul.f32 %v538, %v168
    %v546 = vadd.f32 %v532, %v545
    %v547 = vmul.f32 %v538, %v171
    %v548 = vadd.f32 %v533, %v547
    %v549 = vmul.f32 %v538, %v174
    %v550 = vadd.f32 %v534, %v549
    %v551 = vmul.f32 %v538, %v177
    %v552 = vadd.f32 %v535, %v551
    %v553 = vmul.f32 %v538, %v180
    %v554 = vadd.f32 %v536, %v553
    %s555 = scalar_lea.vmem %s0, 80
    %v556 = vld [vmem:[%s555] sm:$0xf]
    %v557 = vmul.f32 %v556, %v185
    %v558 = vadd.f32 %v540, %v557
    %v559 = vmul.f32 %v556, %v188
    %v560 = vadd.f32 %v542, %v559
    %v561 = vmul.f32 %v556, %v191
    %v562 = vadd.f32 %v544, %v561
    %v563 = vmul.f32 %v556, %v194
    %v564 = vadd.f32 %v546, %v563
    %v565 = vmul.f32 %v556, %v197
    %v566 = vadd.f32 %v548, %v565
    %v567 = vmul.f32 %v556, %v200
    %v568 = vadd.f32 %v550, %v567
    %v569 = vmul.f32 %v556, %v203
    %v570 = vadd.f32 %v552, %v569
    %v571 = vmul.f32 %v556, %v206
    %v572 = vadd.f32 %v554, %v571
    %s573 = scalar_lea.vmem %s0, 84
    %v574 = vld [vmem:[%s573] sm:$0xf]
    %v575 = vmul.f32 %v574, %v211
    %v576 = vadd.f32 %v558, %v575
    %v577 = vmul.f32 %v574, %v214
    %v578 = vadd.f32 %v560, %v577
    %v579 = vmul.f32 %v574, %v217
    %v580 = vadd.f32 %v562, %v579
    %v581 = vmul.f32 %v574, %v220
    %v582 = vadd.f32 %v564, %v581
    %v583 = vmul.f32 %v574, %v223
    %v584 = vadd.f32 %v566, %v583
    %v585 = vmul.f32 %v574, %v226
    %v586 = vadd.f32 %v568, %v585
    %v587 = vmul.f32 %v574, %v229
    %v588 = vadd.f32 %v570, %v587
    %v589 = vmul.f32 %v574, %v232
    %v590 = vadd.f32 %v572, %v589
    %s591 = scalar_lea.vmem %s0, 88
    %v592 = vld [vmem:[%s591] sm:$0xf]
    %v593 = vmul.f32 %v592, %v237
    %v594 = vadd.f32 %v576, %v593
    %v595 = vmul.f32 %v592, %v240
    %v596 = vadd.f32 %v578, %v595
    %v597 = vmul.f32 %v592, %v243
    %v598 = vadd.f32 %v580, %v597
    %v599 = vmul.f32 %v592, %v246
    %v600 = vadd.f32 %v582, %v599
    %v601 = vmul.f32 %v592, %v249
    %v602 = vadd.f32 %v584, %v601
    %v603 = vmul.f32 %v592, %v252
    %v604 = vadd.f32 %v586, %v603
    %v605 = vmul.f32 %v592, %v255
    %v606 = vadd.f32 %v588, %v605
    %v607 = vmul.f32 %v592, %v258
    %v608 = vadd.f32 %v590, %v607
    %s609 = scalar_lea.vmem %s0, 92
    %v610 = vld [vmem:[%s609] sm:$0xf]
    %v611 = vmul.f32 %v610, %v263
    %v612 = vadd.f32 %v594, %v611
    %v613 = vmul.f32 %v610, %v266
    %v614 = vadd.f32 %v596, %v613
    %v615 = vmul.f32 %v610, %v269
    %v616 = vadd.f32 %v598, %v615
    %v617 = vmul.f32 %v610, %v272
    %v618 = vadd.f32 %v600, %v617
    %v619 = vmul.f32 %v610, %v275
    %v620 = vadd.f32 %v602, %v619
    %v621 = vmul.f32 %v610, %v278
    %v622 = vadd.f32 %v604, %v621
    %v623 = vmul.f32 %v610, %v281
    %v624 = vadd.f32 %v606, %v623
    %v625 = vmul.f32 %v610, %v284
    %v626 = vadd.f32 %v608, %v625
    %s627 = scalar_lea.vmem %s0, 96
    %v628 = vld [vmem:[%s627] sm:$0xf]
    %v629 = vmul.f32 %v628, %v289
    %v630 = vadd.f32 %v612, %v629
    %v631 = vmul.f32 %v628, %v292
    %v632 = vadd.f32 %v614, %v631
    %v633 = vmul.f32 %v628, %v295
    %v634 = vadd.f32 %v616, %v633
    %v635 = vmul.f32 %v628, %v298
    %v636 = vadd.f32 %v618, %v635
    %v637 = vmul.f32 %v628, %v301
    %v638 = vadd.f32 %v620, %v637
    %v639 = vmul.f32 %v628, %v304
    %v640 = vadd.f32 %v622, %v639
    %v641 = vmul.f32 %v628, %v307
    %v642 = vadd.f32 %v624, %v641
    %v643 = vmul.f32 %v628, %v310
    %v644 = vadd.f32 %v626, %v643
    %s645 = scalar_lea.vmem %s0, 100
    %v646 = vld [vmem:[%s645] sm:$0xf]
    %v647 = vmul.f32 %v646, %v315
    %v648 = vadd.f32 %v630, %v647
    %v649 = vmul.f32 %v646, %v318
    %v650 = vadd.f32 %v632, %v649
    %v651 = vmul.f32 %v646, %v321
    %v652 = vadd.f32 %v634, %v651
    %v653 = vmul.f32 %v646, %v324
    %v654 = vadd.f32 %v636, %v653
    %v655 = vmul.f32 %v646, %v327
    %v656 = vadd.f32 %v638, %v655
    %v657 = vmul.f32 %v646, %v330
    %v658 = vadd.f32 %v640, %v657
    %v659 = vmul.f32 %v646, %v333
    %v660 = vadd.f32 %v642, %v659
    %v661 = vmul.f32 %v646, %v336
    %v662 = vadd.f32 %v644, %v661
    %s663 = scalar_lea.vmem %s0, 104
    %v664 = vld [vmem:[%s663] sm:$0xf]
    %v665 = vmul.f32 %v664, %v341
    %v666 = vadd.f32 %v648, %v665
    %v667 = vmul.f32 %v664, %v344
    %v668 = vadd.f32 %v650, %v667
    %v669 = vmul.f32 %v664, %v347
    %v670 = vadd.f32 %v652, %v669
    %v671 = vmul.f32 %v664, %v350
    %v672 = vadd.f32 %v654, %v671
    %v673 = vmul.f32 %v664, %v353
    %v674 = vadd.f32 %v656, %v673
    %v675 = vmul.f32 %v664, %v356
    %v676 = vadd.f32 %v658, %v675
    %v677 = vmul.f32 %v664, %v359
    %v678 = vadd.f32 %v660, %v677
    %v679 = vmul.f32 %v664, %v362
    %v680 = vadd.f32 %v662, %v679
    %v681 = vmax.f32 %v519, %v666
    %v682 = vmax.f32 %v520, %v668
    %v683 = vmax.f32 %v521, %v670
    %v684 = vmax.f32 %v522, %v672
    %v685 = vmax.f32 %v523, %v674
    %v686 = vmax.f32 %v524, %v676
    %v687 = vmax.f32 %v525, %v678
    %v688 = vmax.f32 %v526, %v680
    %s689 = scalar_lea.vmem %s0, 108
    %v690 = vld [vmem:[%s689] sm:$0xf]
    %v691 = vmul.f32 %v690, %v141
    %v692 = vmul.f32 %v690, %v143
    %v693 = vmul.f32 %v690, %v145
    %v694 = vmul.f32 %v690, %v147
    %v695 = vmul.f32 %v690, %v149
    %v696 = vmul.f32 %v690, %v151
    %v697 = vmul.f32 %v690, %v153
    %v698 = vmul.f32 %v690, %v155
    %s699 = scalar_lea.vmem %s0, 112
    %v700 = vld [vmem:[%s699] sm:$0xf]
    %v701 = vmul.f32 %v700, %v159
    %v702 = vadd.f32 %v691, %v701
    %v703 = vmul.f32 %v700, %v162
    %v704 = vadd.f32 %v692, %v703
    %v705 = vmul.f32 %v700, %v165
    %v706 = vadd.f32 %v693, %v705
    %v707 = vmul.f32 %v700, %v168
    %v708 = vadd.f32 %v694, %v707
    %v709 = vmul.f32 %v700, %v171
    %v710 = vadd.f32 %v695, %v709
    %v711 = vmul.f32 %v700, %v174
    %v712 = vadd.f32 %v696, %v711
    %v713 = vmul.f32 %v700, %v177
    %v714 = vadd.f32 %v697, %v713
    %v715 = vmul.f32 %v700, %v180
    %v716 = vadd.f32 %v698, %v715
    %s717 = scalar_lea.vmem %s0, 116
    %v718 = vld [vmem:[%s717] sm:$0xf]
    %v719 = vmul.f32 %v718, %v185
    %v720 = vadd.f32 %v702, %v719
    %v721 = vmul.f32 %v718, %v188
    %v722 = vadd.f32 %v704, %v721
    %v723 = vmul.f32 %v718, %v191
    %v724 = vadd.f32 %v706, %v723
    %v725 = vmul.f32 %v718, %v194
    %v726 = vadd.f32 %v708, %v725
    %v727 = vmul.f32 %v718, %v197
    %v728 = vadd.f32 %v710, %v727
    %v729 = vmul.f32 %v718, %v200
    %v730 = vadd.f32 %v712, %v729
    %v731 = vmul.f32 %v718, %v203
    %v732 = vadd.f32 %v714, %v731
    %v733 = vmul.f32 %v718, %v206
    %v734 = vadd.f32 %v716, %v733
    %s735 = scalar_lea.vmem %s0, 120
    %v736 = vld [vmem:[%s735] sm:$0xf]
    %v737 = vmul.f32 %v736, %v211
    %v738 = vadd.f32 %v720, %v737
    %v739 = vmul.f32 %v736, %v214
    %v740 = vadd.f32 %v722, %v739
    %v741 = vmul.f32 %v736, %v217
    %v742 = vadd.f32 %v724, %v741
    %v743 = vmul.f32 %v736, %v220
    %v744 = vadd.f32 %v726, %v743
    %v745 = vmul.f32 %v736, %v223
    %v746 = vadd.f32 %v728, %v745
    %v747 = vmul.f32 %v736, %v226
    %v748 = vadd.f32 %v730, %v747
    %v749 = vmul.f32 %v736, %v229
    %v750 = vadd.f32 %v732, %v749
    %v751 = vmul.f32 %v736, %v232
    %v752 = vadd.f32 %v734, %v751
    %s753 = scalar_lea.vmem %s0, 124
    %v754 = vld [vmem:[%s753] sm:$0xf]
    %v755 = vmul.f32 %v754, %v237
    %v756 = vadd.f32 %v738, %v755
    %v757 = vmul.f32 %v754, %v240
    %v758 = vadd.f32 %v740, %v757
    %v759 = vmul.f32 %v754, %v243
    %v760 = vadd.f32 %v742, %v759
    %v761 = vmul.f32 %v754, %v246
    %v762 = vadd.f32 %v744, %v761
    %v763 = vmul.f32 %v754, %v249
    %v764 = vadd.f32 %v746, %v763
    %v765 = vmul.f32 %v754, %v252
    %v766 = vadd.f32 %v748, %v765
    %v767 = vmul.f32 %v754, %v255
    %v768 = vadd.f32 %v750, %v767
    %v769 = vmul.f32 %v754, %v258
    %v770 = vadd.f32 %v752, %v769
    %s771 = scalar_lea.vmem %s0, 128
    %v772 = vld [vmem:[%s771] sm:$0xf]
    %v773 = vmul.f32 %v772, %v263
    %v774 = vadd.f32 %v756, %v773
    %v775 = vmul.f32 %v772, %v266
    %v776 = vadd.f32 %v758, %v775
    %v777 = vmul.f32 %v772, %v269
    %v778 = vadd.f32 %v760, %v777
    %v779 = vmul.f32 %v772, %v272
    %v780 = vadd.f32 %v762, %v779
    %v781 = vmul.f32 %v772, %v275
    %v782 = vadd.f32 %v764, %v781
    %v783 = vmul.f32 %v772, %v278
    %v784 = vadd.f32 %v766, %v783
    %v785 = vmul.f32 %v772, %v281
    %v786 = vadd.f32 %v768, %v785
    %v787 = vmul.f32 %v772, %v284
    %v788 = vadd.f32 %v770, %v787
    %s789 = scalar_lea.vmem %s0, 132
    %v790 = vld [vmem:[%s789] sm:$0xf]
    %v791 = vmul.f32 %v790, %v289
    %v792 = vadd.f32 %v774, %v791
    %v793 = vmul.f32 %v790, %v292
    %v794 = vadd.f32 %v776, %v793
    %v795 = vmul.f32 %v790, %v295
    %v796 = vadd.f32 %v778, %v795
    %v797 = vmul.f32 %v790, %v298
    %v798 = vadd.f32 %v780, %v797
    %v799 = vmul.f32 %v790, %v301
    %v800 = vadd.f32 %v782, %v799
    %v801 = vmul.f32 %v790, %v304
    %v802 = vadd.f32 %v784, %v801
    %v803 = vmul.f32 %v790, %v307
    %v804 = vadd.f32 %v786, %v803
    %v805 = vmul.f32 %v790, %v310
    %v806 = vadd.f32 %v788, %v805
    %s807 = scalar_lea.vmem %s0, 136
    %v808 = vld [vmem:[%s807] sm:$0xf]
    %v809 = vmul.f32 %v808, %v315
    %v810 = vadd.f32 %v792, %v809
    %v811 = vmul.f32 %v808, %v318
    %v812 = vadd.f32 %v794, %v811
    %v813 = vmul.f32 %v808, %v321
    %v814 = vadd.f32 %v796, %v813
    %v815 = vmul.f32 %v808, %v324
    %v816 = vadd.f32 %v798, %v815
    %v817 = vmul.f32 %v808, %v327
    %v818 = vadd.f32 %v800, %v817
    %v819 = vmul.f32 %v808, %v330
    %v820 = vadd.f32 %v802, %v819
    %v821 = vmul.f32 %v808, %v333
    %v822 = vadd.f32 %v804, %v821
    %v823 = vmul.f32 %v808, %v336
    %v824 = vadd.f32 %v806, %v823
    %s825 = scalar_lea.vmem %s0, 140
    %v826 = vld [vmem:[%s825] sm:$0xf]
    %v827 = vmul.f32 %v826, %v341
    %v828 = vadd.f32 %v810, %v827
    %v829 = vmul.f32 %v826, %v344
    %v830 = vadd.f32 %v812, %v829
    %v831 = vmul.f32 %v826, %v347
    %v832 = vadd.f32 %v814, %v831
    %v833 = vmul.f32 %v826, %v350
    %v834 = vadd.f32 %v816, %v833
    %v835 = vmul.f32 %v826, %v353
    %v836 = vadd.f32 %v818, %v835
    %v837 = vmul.f32 %v826, %v356
    %v838 = vadd.f32 %v820, %v837
    %v839 = vmul.f32 %v826, %v359
    %v840 = vadd.f32 %v822, %v839
    %v841 = vmul.f32 %v826, %v362
    %v842 = vadd.f32 %v824, %v841
    %v843 = vmax.f32 %v681, %v828
    %v844 = vmax.f32 %v682, %v830
    %v845 = vmax.f32 %v683, %v832
    %v846 = vmax.f32 %v684, %v834
    %v847 = vmax.f32 %v685, %v836
    %v848 = vmax.f32 %v686, %v838
    %v849 = vmax.f32 %v687, %v840
    %v850 = vmax.f32 %v688, %v842
    %v851 = vstv %s132
    %v852 = vadd.f32 %v843, %v851
    %v853 = vmax.f32 %v852, 0.0
    %v854 = vstv %s133
    %v855 = vadd.f32 %v844, %v854
    %v856 = vmax.f32 %v855, 0.0
    %v857 = vstv %s134
    %v858 = vadd.f32 %v845, %v857
    %v859 = vmax.f32 %v858, 0.0
    %v860 = vstv %s135
    %v861 = vadd.f32 %v846, %v860
    %v862 = vmax.f32 %v861, 0.0
    %v863 = vstv %s136
    %v864 = vadd.f32 %v847, %v863
    %v865 = vmax.f32 %v864, 0.0
    %v866 = vstv %s137
    %v867 = vadd.f32 %v848, %v866
    %v868 = vmax.f32 %v867, 0.0
    %v869 = vstv %s138
    %v870 = vadd.f32 %v849, %v869
    %v871 = vmax.f32 %v870, 0.0
    %v872 = vstv %s139
    %v873 = vadd.f32 %v850, %v872
    %v874 = vmax.f32 %v873, 0.0
    %v875 = vld [vmem:[%s3] sm:$0xff]
    %v876 = vld [vmem:[%s3 + $0x8] sm:$0xff]
    %v877 = vld [vmem:[%s3 + $0x10] sm:$0xff]
    %v878 = vld [vmem:[%s3 + $0x18] sm:$0xff]
    %v879 = vld [vmem:[%s3 + $0x20] sm:$0xff]
    %v880 = vld [vmem:[%s3 + $0x28] sm:$0xff]
    %v881 = vld [vmem:[%s3 + $0x30] sm:$0xff]
    %v882 = vld [vmem:[%s3 + $0x38] sm:$0xff]
    %v883 = vld [vmem:[%s3 + $0x40] sm:$0xff]
    %v884 = vld [vmem:[%s3 + $0x48] sm:$0xff]
    %v885 = vld [vmem:[%s3 + $0x50] sm:$0xff]
    %v886 = vld [vmem:[%s3 + $0x58] sm:$0xff]
    %v887 = vld [vmem:[%s3 + $0x60] sm:$0xff]
    %v888 = vld [vmem:[%s3 + $0x68] sm:$0xff]
    %v889 = vld [vmem:[%s3 + $0x70] sm:$0xff]
    %v890 = vld [vmem:[%s3 + $0x78] sm:$0xff]
    %v891 = vld [vmem:[%s3 + $0x80] sm:$0xff]
    %v892 = vld [vmem:[%s3 + $0x88] sm:$0xff]
    %v893 = vld [vmem:[%s3 + $0x90] sm:$0xff]
    %v894 = vld [vmem:[%s3 + $0x98] sm:$0xff]
    %v895 = vld [vmem:[%s3 + $0xa0] sm:$0xff]
    %v896 = vld [vmem:[%s3 + $0xa8] sm:$0xff]
    %v897 = vld [vmem:[%s3 + $0xb0] sm:$0xff]
    %v898 = vld [vmem:[%s3 + $0xb8] sm:$0xff]
    %v899 = vld [vmem:[%s3 + $0xc0] sm:$0xff]
    %v900 = vld [vmem:[%s3 + $0xc8] sm:$0xff]
    %v901 = vld [vmem:[%s3 + $0xd0] sm:$0xff]
    %v902 = vld [vmem:[%s3 + $0xd8] sm:$0xff]
    %v903 = vld [vmem:[%s3 + $0xe0] sm:$0xff]
    %v904 = vld [vmem:[%s3 + $0xe8] sm:$0xff]
    %v905 = vld [vmem:[%s3 + $0xf0] sm:$0xff]
    %v906 = vld [vmem:[%s3 + $0xf8] sm:$0xff]
    %v907 = vld [vmem:[%s3 + $0x100] sm:$0xff]
    %v908 = vld [vmem:[%s3 + $0x108] sm:$0xff]
    %v909 = vld [vmem:[%s3 + $0x110] sm:$0xff]
    %v910 = vld [vmem:[%s3 + $0x118] sm:$0xff]
    %v911 = vld [vmem:[%s3 + $0x120] sm:$0xff]
    %v912 = vld [vmem:[%s3 + $0x128] sm:$0xff]
    %v913 = vld [vmem:[%s3 + $0x130] sm:$0xff]
    %v914 = vld [vmem:[%s3 + $0x138] sm:$0xff]
    %v915 = vld [vmem:[%s3 + $0x140] sm:$0xff]
    %v916 = vld [vmem:[%s3 + $0x148] sm:$0xff]
    %v917 = vld [vmem:[%s3 + $0x150] sm:$0xff]
    %v918 = vld [vmem:[%s3 + $0x158] sm:$0xff]
    %v919 = vld [vmem:[%s3 + $0x160] sm:$0xff]
    %v920 = vld [vmem:[%s3 + $0x168] sm:$0xff]
    %v921 = vld [vmem:[%s3 + $0x170] sm:$0xff]
    %v922 = vld [vmem:[%s3 + $0x178] sm:$0xff]
    %v923 = vld [vmem:[%s3 + $0x180] sm:$0xff]
    %v924 = vld [vmem:[%s3 + $0x188] sm:$0xff]
    %v925 = vld [vmem:[%s3 + $0x190] sm:$0xff]
    %v926 = vld [vmem:[%s3 + $0x198] sm:$0xff]
    %v927 = vld [vmem:[%s3 + $0x1a0] sm:$0xff]
    %v928 = vld [vmem:[%s3 + $0x1a8] sm:$0xff]
    %v929 = vld [vmem:[%s3 + $0x1b0] sm:$0xff]
    %v930 = vld [vmem:[%s3 + $0x1b8] sm:$0xff]
    %v931 = vld [vmem:[%s3 + $0x1c0] sm:$0xff]
    %v932 = vld [vmem:[%s3 + $0x1c8] sm:$0xff]
    %v933 = vld [vmem:[%s3 + $0x1d0] sm:$0xff]
    %v934 = vld [vmem:[%s3 + $0x1d8] sm:$0xff]
    %v935 = vld [vmem:[%s3 + $0x1e0] sm:$0xff]
    %v936 = vld [vmem:[%s3 + $0x1e8] sm:$0xff]
    %v937 = vld [vmem:[%s3 + $0x1f0] sm:$0xff]
    %v938 = vld [vmem:[%s3 + $0x1f8] sm:$0xff]
    %v939 = vld [vmem:[%s3 + $0x200] sm:$0xff]
    %v940 = vld [vmem:[%s3 + $0x208] sm:$0xff]
    %v941 = vld [vmem:[%s3 + $0x210] sm:$0xff]
    %v942 = vld [vmem:[%s3 + $0x218] sm:$0xff]
    %v943 = vld [vmem:[%s3 + $0x220] sm:$0xff]
    %v944 = vld [vmem:[%s3 + $0x228] sm:$0xff]
    %v945 = vld [vmem:[%s3 + $0x230] sm:$0xff]
    %v946 = vld [vmem:[%s3 + $0x238] sm:$0xff]
    %v947 = vld [vmem:[%s3 + $0x240] sm:$0xff]
    %v948 = vld [vmem:[%s3 + $0x248] sm:$0xff]
    %v949 = vld [vmem:[%s3 + $0x250] sm:$0xff]
    %v950 = vld [vmem:[%s3 + $0x258] sm:$0xff]
    %v951 = vld [vmem:[%s3 + $0x260] sm:$0xff]
    %v952 = vld [vmem:[%s3 + $0x268] sm:$0xff]
    %v953 = vld [vmem:[%s3 + $0x270] sm:$0xff]
    %v954 = vld [vmem:[%s3 + $0x278] sm:$0xff]
    %v955 = vld [vmem:[%s3 + $0x280] sm:$0xff]
    %v956 = vld [vmem:[%s3 + $0x288] sm:$0xff]
    %v957 = vld [vmem:[%s3 + $0x290] sm:$0xff]
    %v958 = vld [vmem:[%s3 + $0x298] sm:$0xff]
    %v959 = vld [vmem:[%s3 + $0x2a0] sm:$0xff]
    %v960 = vld [vmem:[%s3 + $0x2a8] sm:$0xff]
    %v961 = vld [vmem:[%s3 + $0x2b0] sm:$0xff]
    %v962 = vld [vmem:[%s3 + $0x2b8] sm:$0xff]
    %v963 = vld [vmem:[%s3 + $0x2c0] sm:$0xff]
    %v964 = vld [vmem:[%s3 + $0x2c8] sm:$0xff]
    %v965 = vld [vmem:[%s3 + $0x2d0] sm:$0xff]
    %v966 = vld [vmem:[%s3 + $0x2d8] sm:$0xff]
    %v967 = vld [vmem:[%s3 + $0x2e0] sm:$0xff]
    %v968 = vld [vmem:[%s3 + $0x2e8] sm:$0xff]
    %v969 = vld [vmem:[%s3 + $0x2f0] sm:$0xff]
    %v970 = vld [vmem:[%s3 + $0x2f8] sm:$0xff]
    %v971 = vld [vmem:[%s3 + $0x300] sm:$0xff]
    %v972 = vld [vmem:[%s3 + $0x308] sm:$0xff]
    %v973 = vld [vmem:[%s3 + $0x310] sm:$0xff]
    %v974 = vld [vmem:[%s3 + $0x318] sm:$0xff]
    %v975 = vld [vmem:[%s3 + $0x320] sm:$0xff]
    %v976 = vld [vmem:[%s3 + $0x328] sm:$0xff]
    %v977 = vld [vmem:[%s3 + $0x330] sm:$0xff]
    %v978 = vld [vmem:[%s3 + $0x338] sm:$0xff]
    %v979 = vld [vmem:[%s3 + $0x340] sm:$0xff]
    %v980 = vld [vmem:[%s3 + $0x348] sm:$0xff]
    %v981 = vld [vmem:[%s3 + $0x350] sm:$0xff]
    %v982 = vld [vmem:[%s3 + $0x358] sm:$0xff]
    %v983 = vld [vmem:[%s3 + $0x360] sm:$0xff]
    %v984 = vld [vmem:[%s3 + $0x368] sm:$0xff]
    %v985 = vld [vmem:[%s3 + $0x370] sm:$0xff]
    %v986 = vld [vmem:[%s3 + $0x378] sm:$0xff]
    %v987 = vld [vmem:[%s3 + $0x380] sm:$0xff]
    %v988 = vld [vmem:[%s3 + $0x388] sm:$0xff]
    %v989 = vld [vmem:[%s3 + $0x390] sm:$0xff]
    %v990 = vld [vmem:[%s3 + $0x398] sm:$0xff]
    %v991 = vld [vmem:[%s3 + $0x3a0] sm:$0xff]
    %v992 = vld [vmem:[%s3 + $0x3a8] sm:$0xff]
    %v993 = vld [vmem:[%s3 + $0x3b0] sm:$0xff]
    %v994 = vld [vmem:[%s3 + $0x3b8] sm:$0xff]
    %v995 = vld [vmem:[%s3 + $0x3c0] sm:$0xff]
    %v996 = vld [vmem:[%s3 + $0x3c8] sm:$0xff]
    %v997 = vld [vmem:[%s3 + $0x3d0] sm:$0xff]
    %v998 = vld [vmem:[%s3 + $0x3d8] sm:$0xff]
    %v999 = vld [vmem:[%s3 + $0x3e0] sm:$0xff]
    %v1000 = vld [vmem:[%s3 + $0x3e8] sm:$0xff]
    %v1001 = vld [vmem:[%s3 + $0x3f0] sm:$0x1]
    %v1002 = vld [vmem:[%s3 + $0x3f8] sm:$0x1]
    %v1003 = vld [vmem:[%s3 + $0x400] sm:$0x1]
    %v1004 = vld [vmem:[%s3 + $0x408] sm:$0x1]
    %v1005 = vld [vmem:[%s3 + $0x410] sm:$0x1]
    %v1006 = vld [vmem:[%s3 + $0x418] sm:$0x1]
    %s1007 = scalar_lea.vmem %s3, 1056
    %v1008 = vld [vmem:[%s1007] sm:$0xff]
    %v1009 = vld [vmem:[%s1007 + $0x8] sm:$0xff]
    %v1010 = vld [vmem:[%s1007 + $0x10] sm:$0xff]
    %v1011 = vld [vmem:[%s1007 + $0x18] sm:$0xff]
    %v1012 = vld [vmem:[%s1007 + $0x20] sm:$0xff]
    %v1013 = vld [vmem:[%s1007 + $0x28] sm:$0xff]
    %v1014 = vld [vmem:[%s1007 + $0x30] sm:$0xff]
    %v1015 = vld [vmem:[%s1007 + $0x38] sm:$0xff]
    %v1016 = vld [vmem:[%s1007 + $0x40] sm:$0xff]
    %v1017 = vld [vmem:[%s1007 + $0x48] sm:$0xff]
    %v1018 = vld [vmem:[%s1007 + $0x50] sm:$0xff]
    %v1019 = vld [vmem:[%s1007 + $0x58] sm:$0xff]
    %v1020 = vld [vmem:[%s1007 + $0x60] sm:$0xff]
    %v1021 = vld [vmem:[%s1007 + $0x68] sm:$0xff]
    %v1022 = vld [vmem:[%s1007 + $0x70] sm:$0xff]
    %v1023 = vld [vmem:[%s1007 + $0x78] sm:$0xff]
    %v1024 = vld [vmem:[%s1007 + $0x80] sm:$0xff]
    %v1025 = vld [vmem:[%s1007 + $0x88] sm:$0xff]
    %v1026 = vld [vmem:[%s1007 + $0x90] sm:$0xff]
    %v1027 = vld [vmem:[%s1007 + $0x98] sm:$0xff]
    %v1028 = vld [vmem:[%s1007 + $0xa0] sm:$0xff]
    %v1029 = vld [vmem:[%s1007 + $0xa8] sm:$0xff]
    %v1030 = vld [vmem:[%s1007 + $0xb0] sm:$0xff]
    %v1031 = vld [vmem:[%s1007 + $0xb8] sm:$0xff]
    %v1032 = vld [vmem:[%s1007 + $0xc0] sm:$0xff]
    %v1033 = vld [vmem:[%s1007 + $0xc8] sm:$0xff]
    %v1034 = vld [vmem:[%s1007 + $0xd0] sm:$0xff]
    %v1035 = vld [vmem:[%s1007 + $0xd8] sm:$0xff]
    %v1036 = vld [vmem:[%s1007 + $0xe0] sm:$0xff]
    %v1037 = vld [vmem:[%s1007 + $0xe8] sm:$0xff]
    %v1038 = vld [vmem:[%s1007 + $0xf0] sm:$0xff]
    %v1039 = vld [vmem:[%s1007 + $0xf8] sm:$0xff]
    %v1040 = vld [vmem:[%s1007 + $0x100] sm:$0xff]
    %v1041 = vld [vmem:[%s1007 + $0x108] sm:$0xff]
    %v1042 = vld [vmem:[%s1007 + $0x110] sm:$0xff]
    %v1043 = vld [vmem:[%s1007 + $0x118] sm:$0xff]
    %v1044 = vld [vmem:[%s1007 + $0x120] sm:$0xff]
    %v1045 = vld [vmem:[%s1007 + $0x128] sm:$0xff]
    %v1046 = vld [vmem:[%s1007 + $0x130] sm:$0xff]
    %v1047 = vld [vmem:[%s1007 + $0x138] sm:$0xff]
    %v1048 = vld [vmem:[%s1007 + $0x140] sm:$0xff]
    %v1049 = vld [vmem:[%s1007 + $0x148] sm:$0xff]
    %v1050 = vld [vmem:[%s1007 + $0x150] sm:$0xff]
    %v1051 = vld [vmem:[%s1007 + $0x158] sm:$0xff]
    %v1052 = vld [vmem:[%s1007 + $0x160] sm:$0xff]
    %v1053 = vld [vmem:[%s1007 + $0x168] sm:$0xff]
    %v1054 = vld [vmem:[%s1007 + $0x170] sm:$0xff]
    %v1055 = vld [vmem:[%s1007 + $0x178] sm:$0xff]
    %v1056 = vld [vmem:[%s1007 + $0x180] sm:$0xff]
    %v1057 = vld [vmem:[%s1007 + $0x188] sm:$0xff]
    %v1058 = vld [vmem:[%s1007 + $0x190] sm:$0xff]
    %v1059 = vld [vmem:[%s1007 + $0x198] sm:$0xff]
    %v1060 = vld [vmem:[%s1007 + $0x1a0] sm:$0xff]
    %v1061 = vld [vmem:[%s1007 + $0x1a8] sm:$0xff]
    %v1062 = vld [vmem:[%s1007 + $0x1b0] sm:$0xff]
    %v1063 = vld [vmem:[%s1007 + $0x1b8] sm:$0xff]
    %v1064 = vld [vmem:[%s1007 + $0x1c0] sm:$0xff]
    %v1065 = vld [vmem:[%s1007 + $0x1c8] sm:$0xff]
    %v1066 = vld [vmem:[%s1007 + $0x1d0] sm:$0xff]
    %v1067 = vld [vmem:[%s1007 + $0x1d8] sm:$0xff]
    %v1068 = vld [vmem:[%s1007 + $0x1e0] sm:$0xff]
    %v1069 = vld [vmem:[%s1007 + $0x1e8] sm:$0xff]
    %v1070 = vld [vmem:[%s1007 + $0x1f0] sm:$0xff]
    %v1071 = vld [vmem:[%s1007 + $0x1f8] sm:$0xff]
    %v1072 = vld [vmem:[%s1007 + $0x200] sm:$0xff]
    %v1073 = vld [vmem:[%s1007 + $0x208] sm:$0xff]
    %v1074 = vld [vmem:[%s1007 + $0x210] sm:$0xff]
    %v1075 = vld [vmem:[%s1007 + $0x218] sm:$0xff]
    %v1076 = vld [vmem:[%s1007 + $0x220] sm:$0xff]
    %v1077 = vld [vmem:[%s1007 + $0x228] sm:$0xff]
    %v1078 = vld [vmem:[%s1007 + $0x230] sm:$0xff]
    %v1079 = vld [vmem:[%s1007 + $0x238] sm:$0xff]
    %v1080 = vld [vmem:[%s1007 + $0x240] sm:$0xff]
    %v1081 = vld [vmem:[%s1007 + $0x248] sm:$0xff]
    %v1082 = vld [vmem:[%s1007 + $0x250] sm:$0xff]
    %v1083 = vld [vmem:[%s1007 + $0x258] sm:$0xff]
    %v1084 = vld [vmem:[%s1007 + $0x260] sm:$0xff]
    %v1085 = vld [vmem:[%s1007 + $0x268] sm:$0xff]
    %v1086 = vld [vmem:[%s1007 + $0x270] sm:$0xff]
    %v1087 = vld [vmem:[%s1007 + $0x278] sm:$0xff]
    %v1088 = vld [vmem:[%s1007 + $0x280] sm:$0xff]
    %v1089 = vld [vmem:[%s1007 + $0x288] sm:$0xff]
    %v1090 = vld [vmem:[%s1007 + $0x290] sm:$0xff]
    %v1091 = vld [vmem:[%s1007 + $0x298] sm:$0xff]
    %v1092 = vld [vmem:[%s1007 + $0x2a0] sm:$0xff]
    %v1093 = vld [vmem:[%s1007 + $0x2a8] sm:$0xff]
    %v1094 = vld [vmem:[%s1007 + $0x2b0] sm:$0xff]
    %v1095 = vld [vmem:[%s1007 + $0x2b8] sm:$0xff]
    %v1096 = vld [vmem:[%s1007 + $0x2c0] sm:$0xff]
    %v1097 = vld [vmem:[%s1007 + $0x2c8] sm:$0xff]
    %v1098 = vld [vmem:[%s1007 + $0x2d0] sm:$0xff]
    %v1099 = vld [vmem:[%s1007 + $0x2d8] sm:$0xff]
    %v1100 = vld [vmem:[%s1007 + $0x2e0] sm:$0xff]
    %v1101 = vld [vmem:[%s1007 + $0x2e8] sm:$0xff]
    %v1102 = vld [vmem:[%s1007 + $0x2f0] sm:$0xff]
    %v1103 = vld [vmem:[%s1007 + $0x2f8] sm:$0xff]
    %v1104 = vld [vmem:[%s1007 + $0x300] sm:$0xff]
    %v1105 = vld [vmem:[%s1007 + $0x308] sm:$0xff]
    %v1106 = vld [vmem:[%s1007 + $0x310] sm:$0xff]
    %v1107 = vld [vmem:[%s1007 + $0x318] sm:$0xff]
    %v1108 = vld [vmem:[%s1007 + $0x320] sm:$0xff]
    %v1109 = vld [vmem:[%s1007 + $0x328] sm:$0xff]
    %v1110 = vld [vmem:[%s1007 + $0x330] sm:$0xff]
    %v1111 = vld [vmem:[%s1007 + $0x338] sm:$0xff]
    %v1112 = vld [vmem:[%s1007 + $0x340] sm:$0xff]
    %v1113 = vld [vmem:[%s1007 + $0x348] sm:$0xff]
    %v1114 = vld [vmem:[%s1007 + $0x350] sm:$0xff]
    %v1115 = vld [vmem:[%s1007 + $0x358] sm:$0xff]
    %v1116 = vld [vmem:[%s1007 + $0x360] sm:$0xff]
    %v1117 = vld [vmem:[%s1007 + $0x368] sm:$0xff]
    %v1118 = vld [vmem:[%s1007 + $0x370] sm:$0xff]
    %v1119 = vld [vmem:[%s1007 + $0x378] sm:$0xff]
    %v1120 = vld [vmem:[%s1007 + $0x380] sm:$0xff]
    %v1121 = vld [vmem:[%s1007 + $0x388] sm:$0xff]
    %v1122 = vld [vmem:[%s1007 + $0x390] sm:$0xff]
    %v1123 = vld [vmem:[%s1007 + $0x398] sm:$0xff]
    %v1124 = vld [vmem:[%s1007 + $0x3a0] sm:$0xff]
    %v1125 = vld [vmem:[%s1007 + $0x3a8] sm:$0xff]
    %v1126 = vld [vmem:[%s1007 + $0x3b0] sm:$0xff]
    %v1127 = vld [vmem:[%s1007 + $0x3b8] sm:$0xff]
    %v1128 = vld [vmem:[%s1007 + $0x3c0] sm:$0xff]
    %v1129 = vld [vmem:[%s1007 + $0x3c8] sm:$0xff]
    %v1130 = vld [vmem:[%s1007 + $0x3d0] sm:$0xff]
    %v1131 = vld [vmem:[%s1007 + $0x3d8] sm:$0xff]
    %v1132 = vld [vmem:[%s1007 + $0x3e0] sm:$0xff]
    %v1133 = vld [vmem:[%s1007 + $0x3e8] sm:$0xff]
    %v1134 = vld [vmem:[%s1007 + $0x3f0] sm:$0x1]
    %v1135 = vld [vmem:[%s1007 + $0x3f8] sm:$0x1]
    %v1136 = vld [vmem:[%s1007 + $0x400] sm:$0x1]
    %v1137 = vld [vmem:[%s1007 + $0x408] sm:$0x1]
    %v1138 = vld [vmem:[%s1007 + $0x410] sm:$0x1]
    %v1139 = vld [vmem:[%s1007 + $0x418] sm:$0x1]
    %v1142 = vunpack.c.l.s4 1983009808
    %v1143 = vunpack.c.0.s8 %v1142
    %v1144 = vlaneseq
    %v1145 = vshrl.u32 %v1144, 7
    %v1146 = vsub.s32 %v1143, %v1145
    %v1147 = vrot.slane %v856, %v1146
    %v1148 = vcombine.high %v1147, %v1147
    %vm1150 = vcmask 334848
    %v1151 = vsel %vm1150, %v1148, 0
    %vm1153 = vcmask 1040384
    %v1155 = vsel %vm1153, %v1134, 0
    %v1158 = vsel %vm1153, %v1135, 0
    %v1161 = vsel %vm1153, %v1136, 0
    %v1164 = vsel %vm1153, %v1137, 0
    %v1167 = vsel %vm1153, %v1138, 0
    %v1170 = vsel %vm1153, %v1139, 0
    %1172 = vmatprep.subr.mxu0 %v1009
    %1173 = vmatpush1.msra.mxu0 %v1008
    %1174 = vmatprep.subr.mxu0 %v1015
    %1175 = vmatpush1.msra.mxu0 %v1014
    %1176 = vmatprep.subr.mxu0 %v1021
    %1177 = vmatpush1.msra.mxu0 %v1020
    %1178 = vmatprep.subr.mxu0 %v1027
    %1179 = vmatpush1.msra.mxu0 %v1026
    %1180 = vmatprep.subr.mxu0 %v1033
    %1181 = vmatpush1.msra.mxu0 %v1032
    %1182 = vmatprep.subr.mxu0 %v1039
    %1183 = vmatpush1.msra.mxu0 %v1038
    %1184 = vmatprep.subr.mxu0 %v1045
    %1185 = vmatpush1.msra.mxu0 %v1044
    %1186 = vmatprep.subr.mxu0 %v1051
    %1187 = vmatpush1.msra.mxu0 %v1050
    %1188 = vmatprep.subr.mxu0 %v1057
    %1189 = vmatpush1.msra.mxu0 %v1056
    %1190 = vmatprep.subr.mxu0 %v1063
    %1191 = vmatpush1.msra.mxu0 %v1062
    %1192 = vmatprep.subr.mxu0 %v1069
    %1193 = vmatpush1.msra.mxu0 %v1068
    %1194 = vmatprep.subr.mxu0 %v1075
    %1195 = vmatpush1.msra.mxu0 %v1074
    %1196 = vmatprep.subr.mxu0 %v1081
    %1197 = vmatpush1.msra.mxu0 %v1080
    %1198 = vmatprep.subr.mxu0 %v1087
    %1199 = vmatpush1.msra.mxu0 %v1086
    %1200 = vmatprep.subr.mxu0 %v1093
    %1201 = vmatpush1.msra.mxu0 %v1092
    %1202 = vmatprep.subr.mxu0 %v1099
    %1203 = vmatpush1.msra.mxu0 %v1098
    %1204 = vmatprep.subr.mxu0 %v1105
    %1205 = vmatpush1.msra.mxu0 %v1104
    %1206 = vmatprep.subr.mxu0 %v1111
    %1207 = vmatpush1.msra.mxu0 %v1110
    %1208 = vmatprep.subr.mxu0 %v1117
    %1209 = vmatpush1.msra.mxu0 %v1116
    %1210 = vmatprep.subr.mxu0 %v1123
    %1211 = vmatpush1.msra.mxu0 %v1122
    %1212 = vmatprep.subr.mxu0 %v1129
    %1213 = vmatpush1.msra.mxu0 %v1128
    %1214 = vmatprep.subr.mxu0 %v1158
    %1215 = vmatpush1.msra.mxu0 %v1155
    %1216 = vmatprep.subr.mxu0 0.0
    %1217 = vmatpush1.msra.mxu0 0.0
    %1218 = vmatprep.subr.mxu0 0.0
    %1219 = vmatpush1.msra.mxu0 0.0
    %1220 = vmatprep.subr.mxu0 0.0
    %1221 = vmatpush1.msra.mxu0 0.0
    %1222 = vmatprep.subr.mxu0 0.0
    %1223 = vmatpush1.msra.mxu0 0.0
    %1224 = vmatprep.subr.mxu0 0.0
    %1225 = vmatpush1.msra.mxu0 0.0
    %1226 = vmatprep.subr.mxu0 0.0
    %1227 = vmatpush1.msra.mxu0 0.0
    %1228 = vmatprep.subr.mxu0 0.0
    %1229 = vmatpush1.msra.mxu0 0.0
    %1230 = vmatprep.subr.mxu0 0.0
    %1231 = vmatpush1.msra.mxu0 0.0
    %1232 = vmatprep.subr.mxu0 0.0
    %1233 = vmatpush1.msra.mxu0 0.0
    %1234 = vmatprep.subr.mxu0 0.0
    %1235 = vmatpush1.msra.mxu0 0.0
    %1236 = vmatprep.mubr.f32.mxu0 %v1151
    %1237 = vmatmul.mubr.f32.gmra.mrb[0].mxu0 %v1147
    %v1238 = vpop.f32.mrb[0].mxu0
    %v1239 = vadd.f32 0.0, %v1238
    %v1240 = vpop.f32.mrb[0].mxu0
    %v1241 = vadd.f32 0.0, %v1240
    %1242 = vdwg.mxu0
    %1243 = vmatprep.subr.mxu0 %v1011
    %1244 = vmatpush1.msra.mxu0 %v1010
    %1245 = vmatprep.subr.mxu0 %v1017
    %1246 = vmatpush1.msra.mxu0 %v1016
    %1247 = vmatprep.subr.mxu0 %v1023
    %1248 = vmatpush1.msra.mxu0 %v1022
    %1249 = vmatprep.subr.mxu0 %v1029
    %1250 = vmatpush1.msra.mxu0 %v1028
    %1251 = vmatprep.subr.mxu0 %v1035
    %1252 = vmatpush1.msra.mxu0 %v1034
    %1253 = vmatprep.subr.mxu0 %v1041
    %1254 = vmatpush1.msra.mxu0 %v1040
    %1255 = vmatprep.subr.mxu0 %v1047
    %1256 = vmatpush1.msra.mxu0 %v1046
    %1257 = vmatprep.subr.mxu0 %v1053
    %1258 = vmatpush1.msra.mxu0 %v1052
    %1259 = vmatprep.subr.mxu0 %v1059
    %1260 = vmatpush1.msra.mxu0 %v1058
    %1261 = vmatprep.subr.mxu0 %v1065
    %1262 = vmatpush1.msra.mxu0 %v1064
    %1263 = vmatprep.subr.mxu0 %v1071
    %1264 = vmatpush1.msra.mxu0 %v1070
    %1265 = vmatprep.subr.mxu0 %v1077
    %1266 = vmatpush1.msra.mxu0 %v1076
    %1267 = vmatprep.subr.mxu0 %v1083
    %1268 = vmatpush1.msra.mxu0 %v1082
    %1269 = vmatprep.subr.mxu0 %v1089
    %1270 = vmatpush1.msra.mxu0 %v1088
    %1271 = vmatprep.subr.mxu0 %v1095
    %1272 = vmatpush1.msra.mxu0 %v1094
    %1273 = vmatprep.subr.mxu0 %v1101
    %1274 = vmatpush1.msra.mxu0 %v1100
    %1275 = vmatprep.subr.mxu0 %v1107
    %1276 = vmatpush1.msra.mxu0 %v1106
    %1277 = vmatprep.subr.mxu0 %v1113
    %1278 = vmatpush1.msra.mxu0 %v1112
    %1279 = vmatprep.subr.mxu0 %v1119
    %1280 = vmatpush1.msra.mxu0 %v1118
    %1281 = vmatprep.subr.mxu0 %v1125
    %1282 = vmatpush1.msra.mxu0 %v1124
    %1283 = vmatprep.subr.mxu0 %v1131
    %1284 = vmatpush1.msra.mxu0 %v1130
    %1285 = vmatprep.subr.mxu0 %v1164
    %1286 = vmatpush1.msra.mxu0 %v1161
    %1287 = vmatprep.subr.mxu0 0.0
    %1288 = vmatpush1.msra.mxu0 0.0
    %1289 = vmatprep.subr.mxu0 0.0
    %1290 = vmatpush1.msra.mxu0 0.0
    %1291 = vmatprep.subr.mxu0 0.0
    %1292 = vmatpush1.msra.mxu0 0.0
    %1293 = vmatprep.subr.mxu0 0.0
    %1294 = vmatpush1.msra.mxu0 0.0
    %1295 = vmatprep.subr.mxu0 0.0
    %1296 = vmatpush1.msra.mxu0 0.0
    %1297 = vmatprep.subr.mxu0 0.0
    %1298 = vmatpush1.msra.mxu0 0.0
    %1299 = vmatprep.subr.mxu0 0.0
    %1300 = vmatpush1.msra.mxu0 0.0
    %1301 = vmatprep.subr.mxu0 0.0
    %1302 = vmatpush1.msra.mxu0 0.0
    %1303 = vmatprep.subr.mxu0 0.0
    %1304 = vmatpush1.msra.mxu0 0.0
    %1305 = vmatprep.subr.mxu0 0.0
    %1306 = vmatpush1.msra.mxu0 0.0
    %1307 = vmatprep.mubr.f32.mxu0 %v1151
    %1308 = vmatmul.mubr.f32.gmra.mrb[0].mxu0 %v1147
    %v1309 = vpop.f32.mrb[0].mxu0
    %v1310 = vadd.f32 0.0, %v1309
    %v1311 = vpop.f32.mrb[0].mxu0
    %v1312 = vadd.f32 0.0, %v1311
    %1313 = vdwg.mxu0
    %1314 = vmatprep.subr.mxu0 %v1013
    %1315 = vmatpush1.msra.mxu0 %v1012
    %1316 = vmatprep.subr.mxu0 %v1019
    %1317 = vmatpush1.msra.mxu0 %v1018
    %1318 = vmatprep.subr.mxu0 %v1025
    %1319 = vmatpush1.msra.mxu0 %v1024
    %1320 = vmatprep.subr.mxu0 %v1031
    %1321 = vmatpush1.msra.mxu0 %v1030
    %1322 = vmatprep.subr.mxu0 %v1037
    %1323 = vmatpush1.msra.mxu0 %v1036
    %1324 = vmatprep.subr.mxu0 %v1043
    %1325 = vmatpush1.msra.mxu0 %v1042
    %1326 = vmatprep.subr.mxu0 %v1049
    %1327 = vmatpush1.msra.mxu0 %v1048
    %1328 = vmatprep.subr.mxu0 %v1055
    %1329 = vmatpush1.msra.mxu0 %v1054
    %1330 = vmatprep.subr.mxu0 %v1061
    %1331 = vmatpush1.msra.mxu0 %v1060
    %1332 = vmatprep.subr.mxu0 %v1067
    %1333 = vmatpush1.msra.mxu0 %v1066
    %1334 = vmatprep.subr.mxu0 %v1073
    %1335 = vmatpush1.msra.mxu0 %v1072
    %1336 = vmatprep.subr.mxu0 %v1079
    %1337 = vmatpush1.msra.mxu0 %v1078
    %1338 = vmatprep.subr.mxu0 %v1085
    %1339 = vmatpush1.msra.mxu0 %v1084
    %1340 = vmatprep.subr.mxu0 %v1091
    %1341 = vmatpush1.msra.mxu0 %v1090
    %1342 = vmatprep.subr.mxu0 %v1097
    %1343 = vmatpush1.msra.mxu0 %v1096
    %1344 = vmatprep.subr.mxu0 %v1103
    %1345 = vmatpush1.msra.mxu0 %v1102
    %1346 = vmatprep.subr.mxu0 %v1109
    %1347 = vmatpush1.msra.mxu0 %v1108
    %1348 = vmatprep.subr.mxu0 %v1115
    %1349 = vmatpush1.msra.mxu0 %v1114
    %1350 = vmatprep.subr.mxu0 %v1121
    %1351 = vmatpush1.msra.mxu0 %v1120
    %1352 = vmatprep.subr.mxu0 %v1127
    %1353 = vmatpush1.msra.mxu0 %v1126
    %1354 = vmatprep.subr.mxu0 %v1133
    %1355 = vmatpush1.msra.mxu0 %v1132
    %1356 = vmatprep.subr.mxu0 %v1170
    %1357 = vmatpush1.msra.mxu0 %v1167
    %1358 = vmatprep.subr.mxu0 0.0
    %1359 = vmatpush1.msra.mxu0 0.0
    %1360 = vmatprep.subr.mxu0 0.0
    %1361 = vmatpush1.msra.mxu0 0.0
    %1362 = vmatprep.subr.mxu0 0.0
    %1363 = vmatpush1.msra.mxu0 0.0
    %1364 = vmatprep.subr.mxu0 0.0
    %1365 = vmatpush1.msra.mxu0 0.0
    %1366 = vmatprep.subr.mxu0 0.0
    %1367 = vmatpush1.msra.mxu0 0.0
    %1368 = vmatprep.subr.mxu0 0.0
    %1369 = vmatpush1.msra.mxu0 0.0
    %1370 = vmatprep.subr.mxu0 0.0
    %1371 = vmatpush1.msra.mxu0 0.0
    %1372 = vmatprep.subr.mxu0 0.0
    %1373 = vmatpush1.msra.mxu0 0.0
    %1374 = vmatprep.subr.mxu0 0.0
    %1375 = vmatpush1.msra.mxu0 0.0
    %1376 = vmatprep.subr.mxu0 0.0
    %1377 = vmatpush1.msra.mxu0 0.0
    %1378 = vmatprep.mubr.f32.mxu0 %v1151
    %1379 = vmatmul.mubr.f32.gmra.mrb[0].mxu0 %v1147
    %v1380 = vpop.f32.mrb[0].mxu0
    %v1381 = vadd.f32 0.0, %v1380
    %v1382 = vpop.f32.mrb[0].mxu0
    %v1383 = vadd.f32 0.0, %v1382
    %1384 = vdwg.mxu0
    %v1387 = vunpack.c.l.s4 1983009808
    %v1388 = vunpack.c.0.s8 %v1387
    %v1389 = vlaneseq
    %v1390 = vshrl.u32 %v1389, 7
    %v1391 = vsub.s32 %v1388, %v1390
    %v1392 = vrot.slane %v853, %v1391
    %v1393 = vcombine.high %v1392, %v1392
    %v1395 = vsel %vm1150, %v1393, 0
    %v1398 = vsel %vm1153, %v1001, 0
    %v1401 = vsel %vm1153, %v1002, 0
    %v1404 = vsel %vm1153, %v1003, 0
    %v1407 = vsel %vm1153, %v1004, 0
    %v1410 = vsel %vm1153, %v1005, 0
    %v1413 = vsel %vm1153, %v1006, 0
    %1415 = vmatprep.subr.mxu0 %v876
    %1416 = vmatpush1.msra.mxu0 %v875
    %1417 = vmatprep.subr.mxu0 %v882
    %1418 = vmatpush1.msra.mxu0 %v881
    %1419 = vmatprep.subr.mxu0 %v888
    %1420 = vmatpush1.msra.mxu0 %v887
    %1421 = vmatprep.subr.mxu0 %v894
    %1422 = vmatpush1.msra.mxu0 %v893
    %1423 = vmatprep.subr.mxu0 %v900
    %1424 = vmatpush1.msra.mxu0 %v899
    %1425 = vmatprep.subr.mxu0 %v906
    %1426 = vmatpush1.msra.mxu0 %v905
    %1427 = vmatprep.subr.mxu0 %v912
    %1428 = vmatpush1.msra.mxu0 %v911
    %1429 = vmatprep.subr.mxu0 %v918
    %1430 = vmatpush1.msra.mxu0 %v917
    %1431 = vmatprep.subr.mxu0 %v924
    %1432 = vmatpush1.msra.mxu0 %v923
    %1433 = vmatprep.subr.mxu0 %v930
    %1434 = vmatpush1.msra.mxu0 %v929
    %1435 = vmatprep.subr.mxu0 %v936
    %1436 = vmatpush1.msra.mxu0 %v935
    %1437 = vmatprep.subr.mxu0 %v942
    %1438 = vmatpush1.msra.mxu0 %v941
    %1439 = vmatprep.subr.mxu0 %v948
    %1440 = vmatpush1.msra.mxu0 %v947
    %1441 = vmatprep.subr.mxu0 %v954
    %1442 = vmatpush1.msra.mxu0 %v953
    %1443 = vmatprep.subr.mxu0 %v960
    %1444 = vmatpush1.msra.mxu0 %v959
    %1445 = vmatprep.subr.mxu0 %v966
    %1446 = vmatpush1.msra.mxu0 %v965
    %1447 = vmatprep.subr.mxu0 %v972
    %1448 = vmatpush1.msra.mxu0 %v971
    %1449 = vmatprep.subr.mxu0 %v978
    %1450 = vmatpush1.msra.mxu0 %v977
    %1451 = vmatprep.subr.mxu0 %v984
    %1452 = vmatpush1.msra.mxu0 %v983
    %1453 = vmatprep.subr.mxu0 %v990
    %1454 = vmatpush1.msra.mxu0 %v989
    %1455 = vmatprep.subr.mxu0 %v996
    %1456 = vmatpush1.msra.mxu0 %v995
    %1457 = vmatprep.subr.mxu0 %v1401
    %1458 = vmatpush1.msra.mxu0 %v1398
    %1459 = vmatprep.subr.mxu0 0.0
    %1460 = vmatpush1.msra.mxu0 0.0
    %1461 = vmatprep.subr.mxu0 0.0
    %1462 = vmatpush1.msra.mxu0 0.0
    %1463 = vmatprep.subr.mxu0 0.0
    %1464 = vmatpush1.msra.mxu0 0.0
    %1465 = vmatprep.subr.mxu0 0.0
    %1466 = vmatpush1.msra.mxu0 0.0
    %1467 = vmatprep.subr.mxu0 0.0
    %1468 = vmatpush1.msra.mxu0 0.0
    %1469 = vmatprep.subr.mxu0 0.0
    %1470 = vmatpush1.msra.mxu0 0.0
    %1471 = vmatprep.subr.mxu0 0.0
    %1472 = vmatpush1.msra.mxu0 0.0
    %1473 = vmatprep.subr.mxu0 0.0
    %1474 = vmatpush1.msra.mxu0 0.0
    %1475 = vmatprep.subr.mxu0 0.0
    %1476 = vmatpush1.msra.mxu0 0.0
    %1477 = vmatprep.subr.mxu0 0.0
    %1478 = vmatpush1.msra.mxu0 0.0
    %1479 = vmatprep.mubr.f32.mxu0 %v1395
    %1480 = vmatmul.mubr.f32.gmra.mrb[0].mxu0 %v1392
    %v1481 = vpop.f32.mrb[0].mxu0
    %v1482 = vadd.f32 %v1239, %v1481
    %v1483 = vpop.f32.mrb[0].mxu0
    %v1484 = vadd.f32 %v1241, %v1483
    %1485 = vdwg.mxu0
    %1486 = vmatprep.subr.mxu0 %v878
    %1487 = vmatpush1.msra.mxu0 %v877
    %1488 = vmatprep.subr.mxu0 %v884
    %1489 = vmatpush1.msra.mxu0 %v883
    %1490 = vmatprep.subr.mxu0 %v890
    %1491 = vmatpush1.msra.mxu0 %v889
    %1492 = vmatprep.subr.mxu0 %v896
    %1493 = vmatpush1.msra.mxu0 %v895
    %1494 = vmatprep.subr.mxu0 %v902
    %1495 = vmatpush1.msra.mxu0 %v901
    %1496 = vmatprep.subr.mxu0 %v908
    %1497 = vmatpush1.msra.mxu0 %v907
    %1498 = vmatprep.subr.mxu0 %v914
    %1499 = vmatpush1.msra.mxu0 %v913
    %1500 = vmatprep.subr.mxu0 %v920
    %1501 = vmatpush1.msra.mxu0 %v919
    %1502 = vmatprep.subr.mxu0 %v926
    %1503 = vmatpush1.msra.mxu0 %v925
    %1504 = vmatprep.subr.mxu0 %v932
    %1505 = vmatpush1.msra.mxu0 %v931
    %1506 = vmatprep.subr.mxu0 %v938
    %1507 = vmatpush1.msra.mxu0 %v937
    %1508 = vmatprep.subr.mxu0 %v944
    %1509 = vmatpush1.msra.mxu0 %v943
    %1510 = vmatprep.subr.mxu0 %v950
    %1511 = vmatpush1.msra.mxu0 %v949
    %1512 = vmatprep.subr.mxu0 %v956
    %1513 = vmatpush1.msra.mxu0 %v955
    %1514 = vmatprep.subr.mxu0 %v962
    %1515 = vmatpush1.msra.mxu0 %v961
    %1516 = vmatprep.subr.mxu0 %v968
    %1517 = vmatpush1.msra.mxu0 %v967
    %1518 = vmatprep.subr.mxu0 %v974
    %1519 = vmatpush1.msra.mxu0 %v973
    %1520 = vmatprep.subr.mxu0 %v980
    %1521 = vmatpush1.msra.mxu0 %v979
    %1522 = vmatprep.subr.mxu0 %v986
    %1523 = vmatpush1.msra.mxu0 %v985
    %1524 = vmatprep.subr.mxu0 %v992
    %1525 = vmatpush1.msra.mxu0 %v991
    %1526 = vmatprep.subr.mxu0 %v998
    %1527 = vmatpush1.msra.mxu0 %v997
    %1528 = vmatprep.subr.mxu0 %v1407
    %1529 = vmatpush1.msra.mxu0 %v1404
    %1530 = vmatprep.subr.mxu0 0.0
    %1531 = vmatpush1.msra.mxu0 0.0
    %1532 = vmatprep.subr.mxu0 0.0
    %1533 = vmatpush1.msra.mxu0 0.0
    %1534 = vmatprep.subr.mxu0 0.0
    %1535 = vmatpush1.msra.mxu0 0.0
    %1536 = vmatprep.subr.mxu0 0.0
    %1537 = vmatpush1.msra.mxu0 0.0
    %1538 = vmatprep.subr.mxu0 0.0
    %1539 = vmatpush1.msra.mxu0 0.0
    %1540 = vmatprep.subr.mxu0 0.0
    %1541 = vmatpush1.msra.mxu0 0.0
    %1542 = vmatprep.subr.mxu0 0.0
    %1543 = vmatpush1.msra.mxu0 0.0
    %1544 = vmatprep.subr.mxu0 0.0
    %1545 = vmatpush1.msra.mxu0 0.0
    %1546 = vmatprep.subr.mxu0 0.0
    %1547 = vmatpush1.msra.mxu0 0.0
    %1548 = vmatprep.subr.mxu0 0.0
    %1549 = vmatpush1.msra.mxu0 0.0
    %1550 = vmatprep.mubr.f32.mxu0 %v1395
    %1551 = vmatmul.mubr.f32.gmra.mrb[0].mxu0 %v1392
    %v1552 = vpop.f32.mrb[0].mxu0
    %v1553 = vadd.f32 %v1310, %v1552
    %v1554 = vpop.f32.mrb[0].mxu0
    %v1555 = vadd.f32 %v1312, %v1554
    %1556 = vdwg.mxu0
    %1557 = vmatprep.subr.mxu0 %v880
    %1558 = vmatpush1.msra.mxu0 %v879
    %1559 = vmatprep.subr.mxu0 %v886
    %1560 = vmatpush1.msra.mxu0 %v885
    %1561 = vmatprep.subr.mxu0 %v892
    %1562 = vmatpush1.msra.mxu0 %v891
    %1563 = vmatprep.subr.mxu0 %v898
    %1564 = vmatpush1.msra.mxu0 %v897
    %1565 = vmatprep.subr.mxu0 %v904
    %1566 = vmatpush1.msra.mxu0 %v903
    %1567 = vmatprep.subr.mxu0 %v910
    %1568 = vmatpush1.msra.mxu0 %v909
    %1569 = vmatprep.subr.mxu0 %v916
    %1570 = vmatpush1.msra.mxu0 %v915
    %1571 = vmatprep.subr.mxu0 %v922
    %1572 = vmatpush1.msra.mxu0 %v921
    %1573 = vmatprep.subr.mxu0 %v928
    %1574 = vmatpush1.msra.mxu0 %v927
    %1575 = vmatprep.subr.mxu0 %v934
    %1576 = vmatpush1.msra.mxu0 %v933
    %1577 = vmatprep.subr.mxu0 %v940
    %1578 = vmatpush1.msra.mxu0 %v939
    %1579 = vmatprep.subr.mxu0 %v946
    %1580 = vmatpush1.msra.mxu0 %v945
    %1581 = vmatprep.subr.mxu0 %v952
    %1582 = vmatpush1.msra.mxu0 %v951
    %1583 = vmatprep.subr.mxu0 %v958
    %1584 = vmatpush1.msra.mxu0 %v957
    %1585 = vmatprep.subr.mxu0 %v964
    %1586 = vmatpush1.msra.mxu0 %v963
    %1587 = vmatprep.subr.mxu0 %v970
    %1588 = vmatpush1.msra.mxu0 %v969
    %1589 = vmatprep.subr.mxu0 %v976
    %1590 = vmatpush1.msra.mxu0 %v975
    %1591 = vmatprep.subr.mxu0 %v982
    %1592 = vmatpush1.msra.mxu0 %v981
    %1593 = vmatprep.subr.mxu0 %v988
    %1594 = vmatpush1.msra.mxu0 %v987
    %1595 = vmatprep.subr.mxu0 %v994
    %1596 = vmatpush1.msra.mxu0 %v993
    %1597 = vmatprep.subr.mxu0 %v1000
    %1598 = vmatpush1.msra.mxu0 %v999
    %1599 = vmatprep.subr.mxu0 %v1413
    %1600 = vmatpush1.msra.mxu0 %v1410
    %1601 = vmatprep.subr.mxu0 0.0
    %1602 = vmatpush1.msra.mxu0 0.0
    %1603 = vmatprep.subr.mxu0 0.0
    %1604 = vmatpush1.msra.mxu0 0.0
    %1605 = vmatprep.subr.mxu0 0.0
    %1606 = vmatpush1.msra.mxu0 0.0
    %1607 = vmatprep.subr.mxu0 0.0
    %1608 = vmatpush1.msra.mxu0 0.0
    %1609 = vmatprep.subr.mxu0 0.0
    %1610 = vmatpush1.msra.mxu0 0.0
    %1611 = vmatprep.subr.mxu0 0.0
    %1612 = vmatpush1.msra.mxu0 0.0
    %1613 = vmatprep.subr.mxu0 0.0
    %1614 = vmatpush1.msra.mxu0 0.0
    %1615 = vmatprep.subr.mxu0 0.0
    %1616 = vmatpush1.msra.mxu0 0.0
    %1617 = vmatprep.subr.mxu0 0.0
    %1618 = vmatpush1.msra.mxu0 0.0
    %1619 = vmatprep.subr.mxu0 0.0
    %1620 = vmatpush1.msra.mxu0 0.0
    %1621 = vmatprep.mubr.f32.mxu0 %v1395
    %1622 = vmatmul.mubr.f32.gmra.mrb[0].mxu0 %v1392
    %v1623 = vpop.f32.mrb[0].mxu0
    %v1624 = vadd.f32 %v1381, %v1623
    %v1625 = vpop.f32.mrb[0].mxu0
    %v1626 = vadd.f32 %v1383, %v1625
    %1627 = vdwg.mxu0
    %s1628 = scalar_lea.vmem %s3, 2112
    %v1629 = vld [vmem:[%s1628] sm:$0xff]
    %v1630 = vld [vmem:[%s1628 + $0x8] sm:$0xff]
    %v1631 = vld [vmem:[%s1628 + $0x10] sm:$0xff]
    %v1632 = vld [vmem:[%s1628 + $0x18] sm:$0xff]
    %v1633 = vld [vmem:[%s1628 + $0x20] sm:$0xff]
    %v1634 = vld [vmem:[%s1628 + $0x28] sm:$0xff]
    %v1635 = vld [vmem:[%s1628 + $0x30] sm:$0xff]
    %v1636 = vld [vmem:[%s1628 + $0x38] sm:$0xff]
    %v1637 = vld [vmem:[%s1628 + $0x40] sm:$0xff]
    %v1638 = vld [vmem:[%s1628 + $0x48] sm:$0xff]
    %v1639 = vld [vmem:[%s1628 + $0x50] sm:$0xff]
    %v1640 = vld [vmem:[%s1628 + $0x58] sm:$0xff]
    %v1641 = vld [vmem:[%s1628 + $0x60] sm:$0xff]
    %v1642 = vld [vmem:[%s1628 + $0x68] sm:$0xff]
    %v1643 = vld [vmem:[%s1628 + $0x70] sm:$0xff]
    %v1644 = vld [vmem:[%s1628 + $0x78] sm:$0xff]
    %v1645 = vld [vmem:[%s1628 + $0x80] sm:$0xff]
    %v1646 = vld [vmem:[%s1628 + $0x88] sm:$0xff]
    %v1647 = vld [vmem:[%s1628 + $0x90] sm:$0xff]
    %v1648 = vld [vmem:[%s1628 + $0x98] sm:$0xff]
    %v1649 = vld [vmem:[%s1628 + $0xa0] sm:$0xff]
    %v1650 = vld [vmem:[%s1628 + $0xa8] sm:$0xff]
    %v1651 = vld [vmem:[%s1628 + $0xb0] sm:$0xff]
    %v1652 = vld [vmem:[%s1628 + $0xb8] sm:$0xff]
    %v1653 = vld [vmem:[%s1628 + $0xc0] sm:$0xff]
    %v1654 = vld [vmem:[%s1628 + $0xc8] sm:$0xff]
    %v1655 = vld [vmem:[%s1628 + $0xd0] sm:$0xff]
    %v1656 = vld [vmem:[%s1628 + $0xd8] sm:$0xff]
    %v1657 = vld [vmem:[%s1628 + $0xe0] sm:$0xff]
    %v1658 = vld [vmem:[%s1628 + $0xe8] sm:$0xff]
    %v1659 = vld [vmem:[%s1628 + $0xf0] sm:$0xff]
    %v1660 = vld [vmem:[%s1628 + $0xf8] sm:$0xff]
    %v1661 = vld [vmem:[%s1628 + $0x100] sm:$0xff]
    %v1662 = vld [vmem:[%s1628 + $0x108] sm:$0xff]
    %v1663 = vld [vmem:[%s1628 + $0x110] sm:$0xff]
    %v1664 = vld [vmem:[%s1628 + $0x118] sm:$0xff]
    %v1665 = vld [vmem:[%s1628 + $0x120] sm:$0xff]
    %v1666 = vld [vmem:[%s1628 + $0x128] sm:$0xff]
    %v1667 = vld [vmem:[%s1628 + $0x130] sm:$0xff]
    %v1668 = vld [vmem:[%s1628 + $0x138] sm:$0xff]
    %v1669 = vld [vmem:[%s1628 + $0x140] sm:$0xff]
    %v1670 = vld [vmem:[%s1628 + $0x148] sm:$0xff]
    %v1671 = vld [vmem:[%s1628 + $0x150] sm:$0xff]
    %v1672 = vld [vmem:[%s1628 + $0x158] sm:$0xff]
    %v1673 = vld [vmem:[%s1628 + $0x160] sm:$0xff]
    %v1674 = vld [vmem:[%s1628 + $0x168] sm:$0xff]
    %v1675 = vld [vmem:[%s1628 + $0x170] sm:$0xff]
    %v1676 = vld [vmem:[%s1628 + $0x178] sm:$0xff]
    %v1677 = vld [vmem:[%s1628 + $0x180] sm:$0xff]
    %v1678 = vld [vmem:[%s1628 + $0x188] sm:$0xff]
    %v1679 = vld [vmem:[%s1628 + $0x190] sm:$0xff]
    %v1680 = vld [vmem:[%s1628 + $0x198] sm:$0xff]
    %v1681 = vld [vmem:[%s1628 + $0x1a0] sm:$0xff]
    %v1682 = vld [vmem:[%s1628 + $0x1a8] sm:$0xff]
    %v1683 = vld [vmem:[%s1628 + $0x1b0] sm:$0xff]
    %v1684 = vld [vmem:[%s1628 + $0x1b8] sm:$0xff]
    %v1685 = vld [vmem:[%s1628 + $0x1c0] sm:$0xff]
    %v1686 = vld [vmem:[%s1628 + $0x1c8] sm:$0xff]
    %v1687 = vld [vmem:[%s1628 + $0x1d0] sm:$0xff]
    %v1688 = vld [vmem:[%s1628 + $0x1d8] sm:$0xff]
    %v1689 = vld [vmem:[%s1628 + $0x1e0] sm:$0xff]
    %v1690 = vld [vmem:[%s1628 + $0x1e8] sm:$0xff]
    %v1691 = vld [vmem:[%s1628 + $0x1f0] sm:$0xff]
    %v1692 = vld [vmem:[%s1628 + $0x1f8] sm:$0xff]
    %v1693 = vld [vmem:[%s1628 + $0x200] sm:$0xff]
    %v1694 = vld [vmem:[%s1628 + $0x208] sm:$0xff]
    %v1695 = vld [vmem:[%s1628 + $0x210] sm:$0xff]
    %v1696 = vld [vmem:[%s1628 + $0x218] sm:$0xff]
    %v1697 = vld [vmem:[%s1628 + $0x220] sm:$0xff]
    %v1698 = vld [vmem:[%s1628 + $0x228] sm:$0xff]
    %v1699 = vld [vmem:[%s1628 + $0x230] sm:$0xff]
    %v1700 = vld [vmem:[%s1628 + $0x238] sm:$0xff]
    %v1701 = vld [vmem:[%s1628 + $0x240] sm:$0xff]
    %v1702 = vld [vmem:[%s1628 + $0x248] sm:$0xff]
    %v1703 = vld [vmem:[%s1628 + $0x250] sm:$0xff]
    %v1704 = vld [vmem:[%s1628 + $0x258] sm:$0xff]
    %v1705 = vld [vmem:[%s1628 + $0x260] sm:$0xff]
    %v1706 = vld [vmem:[%s1628 + $0x268] sm:$0xff]
    %v1707 = vld [vmem:[%s1628 + $0x270] sm:$0xff]
    %v1708 = vld [vmem:[%s1628 + $0x278] sm:$0xff]
    %v1709 = vld [vmem:[%s1628 + $0x280] sm:$0xff]
    %v1710 = vld [vmem:[%s1628 + $0x288] sm:$0xff]
    %v1711 = vld [vmem:[%s1628 + $0x290] sm:$0xff]
    %v1712 = vld [vmem:[%s1628 + $0x298] sm:$0xff]
    %v1713 = vld [vmem:[%s1628 + $0x2a0] sm:$0xff]
    %v1714 = vld [vmem:[%s1628 + $0x2a8] sm:$0xff]
    %v1715 = vld [vmem:[%s1628 + $0x2b0] sm:$0xff]
    %v1716 = vld [vmem:[%s1628 + $0x2b8] sm:$0xff]
    %v1717 = vld [vmem:[%s1628 + $0x2c0] sm:$0xff]
    %v1718 = vld [vmem:[%s1628 + $0x2c8] sm:$0xff]
    %v1719 = vld [vmem:[%s1628 + $0x2d0] sm:$0xff]
    %v1720 = vld [vmem:[%s1628 + $0x2d8] sm:$0xff]
    %v1721 = vld [vmem:[%s1628 + $0x2e0] sm:$0xff]
    %v1722 = vld [vmem:[%s1628 + $0x2e8] sm:$0xff]
    %v1723 = vld [vmem:[%s1628 + $0x2f0] sm:$0xff]
    %v1724 = vld [vmem:[%s1628 + $0x2f8] sm:$0xff]
    %v1725 = vld [vmem:[%s1628 + $0x300] sm:$0xff]
    %v1726 = vld [vmem:[%s1628 + $0x308] sm:$0xff]
    %v1727 = vld [vmem:[%s1628 + $0x310] sm:$0xff]
    %v1728 = vld [vmem:[%s1628 + $0x318] sm:$0xff]
    %v1729 = vld [vmem:[%s1628 + $0x320] sm:$0xff]
    %v1730 = vld [vmem:[%s1628 + $0x328] sm:$0xff]
    %v1731 = vld [vmem:[%s1628 + $0x330] sm:$0xff]
    %v1732 = vld [vmem:[%s1628 + $0x338] sm:$0xff]
    %v1733 = vld [vmem:[%s1628 + $0x340] sm:$0xff]
    %v1734 = vld [vmem:[%s1628 + $0x348] sm:$0xff]
    %v1735 = vld [vmem:[%s1628 + $0x350] sm:$0xff]
    %v1736 = vld [vmem:[%s1628 + $0x358] sm:$0xff]
    %v1737 = vld [vmem:[%s1628 + $0x360] sm:$0xff]
    %v1738 = vld [vmem:[%s1628 + $0x368] sm:$0xff]
    %v1739 = vld [vmem:[%s1628 + $0x370] sm:$0xff]
    %v1740 = vld [vmem:[%s1628 + $0x378] sm:$0xff]
    %v1741 = vld [vmem:[%s1628 + $0x380] sm:$0xff]
    %v1742 = vld [vmem:[%s1628 + $0x388] sm:$0xff]
    %v1743 = vld [vmem:[%s1628 + $0x390] sm:$0xff]
    %v1744 = vld [vmem:[%s1628 + $0x398] sm:$0xff]
    %v1745 = vld [vmem:[%s1628 + $0x3a0] sm:$0xff]
    %v1746 = vld [vmem:[%s1628 + $0x3a8] sm:$0xff]
    %v1747 = vld [vmem:[%s1628 + $0x3b0] sm:$0xff]
    %v1748 = vld [vmem:[%s1628 + $0x3b8] sm:$0xff]
    %v1749 = vld [vmem:[%s1628 + $0x3c0] sm:$0xff]
    %v1750 = vld [vmem:[%s1628 + $0x3c8] sm:$0xff]
    %v1751 = vld [vmem:[%s1628 + $0x3d0] sm:$0xff]
    %v1752 = vld [vmem:[%s1628 + $0x3d8] sm:$0xff]
    %v1753 = vld [vmem:[%s1628 + $0x3e0] sm:$0xff]
    %v1754 = vld [vmem:[%s1628 + $0x3e8] sm:$0xff]
    %v1755 = vld [vmem:[%s1628 + $0x3f0] sm:$0x1]
    %v1756 = vld [vmem:[%s1628 + $0x3f8] sm:$0x1]
    %v1757 = vld [vmem:[%s1628 + $0x400] sm:$0x1]
    %v1758 = vld [vmem:[%s1628 + $0x408] sm:$0x1]
    %v1759 = vld [vmem:[%s1628 + $0x410] sm:$0x1]
    %v1760 = vld [vmem:[%s1628 + $0x418] sm:$0x1]
    %v1763 = vunpack.c.l.s4 1983009808
    %v1764 = vunpack.c.0.s8 %v1763
    %v1765 = vlaneseq
    %v1766 = vshrl.u32 %v1765, 7
    %v1767 = vsub.s32 %v1764, %v1766
    %v1768 = vrot.slane %v859, %v1767
    %v1769 = vcombine.high %v1768, %v1768
    %v1771 = vsel %vm1150, %v1769, 0
    %v1774 = vsel %vm1153, %v1755, 0
    %v1777 = vsel %vm1153, %v1756, 0
    %v1780 = vsel %vm1153, %v1757, 0
    %v1783 = vsel %vm1153, %v1758, 0
    %v1786 = vsel %vm1153, %v1759, 0
    %v1789 = vsel %vm1153, %v1760, 0
    %1791 = vmatprep.subr.mxu0 %v1630
    %1792 = vmatpush1.msra.mxu0 %v1629
    %1793 = vmatprep.subr.mxu0 %v1636
    %1794 = vmatpush1.msra.mxu0 %v1635
    %1795 = vmatprep.subr.mxu0 %v1642
    %1796 = vmatpush1.msra.mxu0 %v1641
    %1797 = vmatprep.subr.mxu0 %v1648
    %1798 = vmatpush1.msra.mxu0 %v1647
    %1799 = vmatprep.subr.mxu0 %v1654
    %1800 = vmatpush1.msra.mxu0 %v1653
    %1801 = vmatprep.subr.mxu0 %v1660
    %1802 = vmatpush1.msra.mxu0 %v1659
    %1803 = vmatprep.subr.mxu0 %v1666
    %1804 = vmatpush1.msra.mxu0 %v1665
    %1805 = vmatprep.subr.mxu0 %v1672
    %1806 = vmatpush1.msra.mxu0 %v1671
    %1807 = vmatprep.subr.mxu0 %v1678
    %1808 = vmatpush1.msra.mxu0 %v1677
    %1809 = vmatprep.subr.mxu0 %v1684
    %1810 = vmatpush1.msra.mxu0 %v1683
    %1811 = vmatprep.subr.mxu0 %v1690
    %1812 = vmatpush1.msra.mxu0 %v1689
    %1813 = vmatprep.subr.mxu0 %v1696
    %1814 = vmatpush1.msra.mxu0 %v1695
    %1815 = vmatprep.subr.mxu0 %v1702
    %1816 = vmatpush1.msra.mxu0 %v1701
    %1817 = vmatprep.subr.mxu0 %v1708
    %1818 = vmatpush1.msra.mxu0 %v1707
    %1819 = vmatprep.subr.mxu0 %v1714
    %1820 = vmatpush1.msra.mxu0 %v1713
    %1821 = vmatprep.subr.mxu0 %v1720
    %1822 = vmatpush1.msra.mxu0 %v1719
    %1823 = vmatprep.subr.mxu0 %v1726
    %1824 = vmatpush1.msra.mxu0 %v1725
    %1825 = vmatprep.subr.mxu0 %v1732
    %1826 = vmatpush1.msra.mxu0 %v1731
    %1827 = vmatprep.subr.mxu0 %v1738
    %1828 = vmatpush1.msra.mxu0 %v1737
    %1829 = vmatprep.subr.mxu0 %v1744
    %1830 = vmatpush1.msra.mxu0 %v1743
    %1831 = vmatprep.subr.mxu0 %v1750
    %1832 = vmatpush1.msra.mxu0 %v1749
    %1833 = vmatprep.subr.mxu0 %v1777
    %1834 = vmatpush1.msra.mxu0 %v1774
    %1835 = vmatprep.subr.mxu0 0.0
    %1836 = vmatpush1.msra.mxu0 0.0
    %1837 = vmatprep.subr.mxu0 0.0
    %1838 = vmatpush1.msra.mxu0 0.0
    %1839 = vmatprep.subr.mxu0 0.0
    %1840 = vmatpush1.msra.mxu0 0.0
    %1841 = vmatprep.subr.mxu0 0.0
    %1842 = vmatpush1.msra.mxu0 0.0
    %1843 = vmatprep.subr.mxu0 0.0
    %1844 = vmatpush1.msra.mxu0 0.0
    %1845 = vmatprep.subr.mxu0 0.0
    %1846 = vmatpush1.msra.mxu0 0.0
    %1847 = vmatprep.subr.mxu0 0.0
    %1848 = vmatpush1.msra.mxu0 0.0
    %1849 = vmatprep.subr.mxu0 0.0
    %1850 = vmatpush1.msra.mxu0 0.0
    %1851 = vmatprep.subr.mxu0 0.0
    %1852 = vmatpush1.msra.mxu0 0.0
    %1853 = vmatprep.subr.mxu0 0.0
    %1854 = vmatpush1.msra.mxu0 0.0
    %1855 = vmatprep.mubr.f32.mxu0 %v1771
    %1856 = vmatmul.mubr.f32.gmra.mrb[0].mxu0 %v1768
    %v1857 = vpop.f32.mrb[0].mxu0
    %v1858 = vadd.f32 0.0, %v1857
    %v1859 = vpop.f32.mrb[0].mxu0
    %v1860 = vadd.f32 0.0, %v1859
    %1861 = vdwg.mxu0
    %1862 = vmatprep.subr.mxu0 %v1632
    %1863 = vmatpush1.msra.mxu0 %v1631
    %1864 = vmatprep.subr.mxu0 %v1638
    %1865 = vmatpush1.msra.mxu0 %v1637
    %1866 = vmatprep.subr.mxu0 %v1644
    %1867 = vmatpush1.msra.mxu0 %v1643
    %1868 = vmatprep.subr.mxu0 %v1650
    %1869 = vmatpush1.msra.mxu0 %v1649
    %1870 = vmatprep.subr.mxu0 %v1656
    %1871 = vmatpush1.msra.mxu0 %v1655
    %1872 = vmatprep.subr.mxu0 %v1662
    %1873 = vmatpush1.msra.mxu0 %v1661
    %1874 = vmatprep.subr.mxu0 %v1668
    %1875 = vmatpush1.msra.mxu0 %v1667
    %1876 = vmatprep.subr.mxu0 %v1674
    %1877 = vmatpush1.msra.mxu0 %v1673
    %1878 = vmatprep.subr.mxu0 %v1680
    %1879 = vmatpush1.msra.mxu0 %v1679
    %1880 = vmatprep.subr.mxu0 %v1686
    %1881 = vmatpush1.msra.mxu0 %v1685
    %1882 = vmatprep.subr.mxu0 %v1692
    %1883 = vmatpush1.msra.mxu0 %v1691
    %1884 = vmatprep.subr.mxu0 %v1698
    %1885 = vmatpush1.msra.mxu0 %v1697
    %1886 = vmatprep.subr.mxu0 %v1704
    %1887 = vmatpush1.msra.mxu0 %v1703
    %1888 = vmatprep.subr.mxu0 %v1710
    %1889 = vmatpush1.msra.mxu0 %v1709
    %1890 = vmatprep.subr.mxu0 %v1716
    %1891 = vmatpush1.msra.mxu0 %v1715
    %1892 = vmatprep.subr.mxu0 %v1722
    %1893 = vmatpush1.msra.mxu0 %v1721
    %1894 = vmatprep.subr.mxu0 %v1728
    %1895 = vmatpush1.msra.mxu0 %v1727
    %1896 = vmatprep.subr.mxu0 %v1734
    %1897 = vmatpush1.msra.mxu0 %v1733
    %1898 = vmatprep.subr.mxu0 %v1740
    %1899 = vmatpush1.msra.mxu0 %v1739
    %1900 = vmatprep.subr.mxu0 %v1746
    %1901 = vmatpush1.msra.mxu0 %v1745
    %1902 = vmatprep.subr.mxu0 %v1752
    %1903 = vmatpush1.msra.mxu0 %v1751
    %1904 = vmatprep.subr.mxu0 %v1783
    %1905 = vmatpush1.msra.mxu0 %v1780
    %1906 = vmatprep.subr.mxu0 0.0
    %1907 = vmatpush1.msra.mxu0 0.0
    %1908 = vmatprep.subr.mxu0 0.0
    %1909 = vmatpush1.msra.mxu0 0.0
    %1910 = vmatprep.subr.mxu0 0.0
    %1911 = vmatpush1.msra.mxu0 0.0
    %1912 = vmatprep.subr.mxu0 0.0
    %1913 = vmatpush1.msra.mxu0 0.0
    %1914 = vmatprep.subr.mxu0 0.0
    %1915 = vmatpush1.msra.mxu0 0.0
    %1916 = vmatprep.subr.mxu0 0.0
    %1917 = vmatpush1.msra.mxu0 0.0
    %1918 = vmatprep.subr.mxu0 0.0
    %1919 = vmatpush1.msra.mxu0 0.0
    %1920 = vmatprep.subr.mxu0 0.0
    %1921 = vmatpush1.msra.mxu0 0.0
    %1922 = vmatprep.subr.mxu0 0.0
    %1923 = vmatpush1.msra.mxu0 0.0
    %1924 = vmatprep.subr.mxu0 0.0
    %1925 = vmatpush1.msra.mxu0 0.0
    %1926 = vmatprep.mubr.f32.mxu0 %v1771
    %1927 = vmatmul.mubr.f32.gmra.mrb[0].mxu0 %v1768
    %v1928 = vpop.f32.mrb[0].mxu0
    %v1929 = vadd.f32 0.0, %v1928
    %v1930 = vpop.f32.mrb[0].mxu0
    %v1931 = vadd.f32 0.0, %v1930
    %1932 = vdwg.mxu0
    %1933 = vmatprep.subr.mxu0 %v1634
    %1934 = vmatpush1.msra.mxu0 %v1633
    %1935 = vmatprep.subr.mxu0 %v1640
    %1936 = vmatpush1.msra.mxu0 %v1639
    %1937 = vmatprep.subr.mxu0 %v1646
    %1938 = vmatpush1.msra.mxu0 %v1645
    %1939 = vmatprep.subr.mxu0 %v1652
    %1940 = vmatpush1.msra.mxu0 %v1651
    %1941 = vmatprep.subr.mxu0 %v1658
    %1942 = vmatpush1.msra.mxu0 %v1657
    %1943 = vmatprep.subr.mxu0 %v1664
    %1944 = vmatpush1.msra.mxu0 %v1663
    %1945 = vmatprep.subr.mxu0 %v1670
    %1946 = vmatpush1.msra.mxu0 %v1669
    %1947 = vmatprep.subr.mxu0 %v1676
    %1948 = vmatpush1.msra.mxu0 %v1675
    %1949 = vmatprep.subr.mxu0 %v1682
    %1950 = vmatpush1.msra.mxu0 %v1681
    %1951 = vmatprep.subr.mxu0 %v1688
    %1952 = vmatpush1.msra.mxu0 %v1687
    %1953 = vmatprep.subr.mxu0 %v1694
    %1954 = vmatpush1.msra.mxu0 %v1693
    %1955 = vmatprep.subr.mxu0 %v1700
    %1956 = vmatpush1.msra.mxu0 %v1699
    %1957 = vmatprep.subr.mxu0 %v1706
    %1958 = vmatpush1.msra.mxu0 %v1705
    %1959 = vmatprep.subr.mxu0 %v1712
    %1960 = vmatpush1.msra.mxu0 %v1711
    %1961 = vmatprep.subr.mxu0 %v1718
    %1962 = vmatpush1.msra.mxu0 %v1717
    %1963 = vmatprep.subr.mxu0 %v1724
    %1964 = vmatpush1.msra.mxu0 %v1723
    %1965 = vmatprep.subr.mxu0 %v1730
    %1966 = vmatpush1.msra.mxu0 %v1729
    %1967 = vmatprep.subr.mxu0 %v1736
    %1968 = vmatpush1.msra.mxu0 %v1735
    %1969 = vmatprep.subr.mxu0 %v1742
    %1970 = vmatpush1.msra.mxu0 %v1741
    %1971 = vmatprep.subr.mxu0 %v1748
    %1972 = vmatpush1.msra.mxu0 %v1747
    %1973 = vmatprep.subr.mxu0 %v1754
    %1974 = vmatpush1.msra.mxu0 %v1753
    %1975 = vmatprep.subr.mxu0 %v1789
    %1976 = vmatpush1.msra.mxu0 %v1786
    %1977 = vmatprep.subr.mxu0 0.0
    %1978 = vmatpush1.msra.mxu0 0.0
    %1979 = vmatprep.subr.mxu0 0.0
    %1980 = vmatpush1.msra.mxu0 0.0
    %1981 = vmatprep.subr.mxu0 0.0
    %1982 = vmatpush1.msra.mxu0 0.0
    %1983 = vmatprep.subr.mxu0 0.0
    %1984 = vmatpush1.msra.mxu0 0.0
    %1985 = vmatprep.subr.mxu0 0.0
    %1986 = vmatpush1.msra.mxu0 0.0
    %1987 = vmatprep.subr.mxu0 0.0
    %1988 = vmatpush1.msra.mxu0 0.0
    %1989 = vmatprep.subr.mxu0 0.0
    %1990 = vmatpush1.msra.mxu0 0.0
    %1991 = vmatprep.subr.mxu0 0.0
    %1992 = vmatpush1.msra.mxu0 0.0
    %1993 = vmatprep.subr.mxu0 0.0
    %1994 = vmatpush1.msra.mxu0 0.0
    %1995 = vmatprep.subr.mxu0 0.0
    %1996 = vmatpush1.msra.mxu0 0.0
    %1997 = vmatprep.mubr.f32.mxu0 %v1771
    %1998 = vmatmul.mubr.f32.gmra.mrb[0].mxu0 %v1768
    %v1999 = vpop.f32.mrb[0].mxu0
    %v2000 = vadd.f32 0.0, %v1999
    %v2001 = vpop.f32.mrb[0].mxu0
    %v2002 = vadd.f32 0.0, %v2001
    %2003 = vdwg.mxu0
    %v2004 = vadd.f32 %v1482, %v1858
    %v2005 = vadd.f32 %v1484, %v1860
    %v2006 = vadd.f32 %v1553, %v1929
    %v2007 = vadd.f32 %v1555, %v1931
    %v2008 = vadd.f32 %v1624, %v2000
    %v2009 = vadd.f32 %v1626, %v2002
    %s2010 = scalar_lea.vmem %s3, 3168
    %v2011 = vld [vmem:[%s2010] sm:$0xff]
    %v2012 = vld [vmem:[%s2010 + $0x8] sm:$0xff]
    %v2013 = vld [vmem:[%s2010 + $0x10] sm:$0xff]
    %v2014 = vld [vmem:[%s2010 + $0x18] sm:$0xff]
    %v2015 = vld [vmem:[%s2010 + $0x20] sm:$0xff]
    %v2016 = vld [vmem:[%s2010 + $0x28] sm:$0xff]
    %v2017 = vld [vmem:[%s2010 + $0x30] sm:$0xff]
    %v2018 = vld [vmem:[%s2010 + $0x38] sm:$0xff]
    %v2019 = vld [vmem:[%s2010 + $0x40] sm:$0xff]
    %v2020 = vld [vmem:[%s2010 + $0x48] sm:$0xff]
    %v2021 = vld [vmem:[%s2010 + $0x50] sm:$0xff]
    %v2022 = vld [vmem:[%s2010 + $0x58] sm:$0xff]
    %v2023 = vld [vmem:[%s2010 + $0x60] sm:$0xff]
    %v2024 = vld [vmem:[%s2010 + $0x68] sm:$0xff]
    %v2025 = vld [vmem:[%s2010 + $0x70] sm:$0xff]
    %v2026 = vld [vmem:[%s2010 + $0x78] sm:$0xff]
    %v2027 = vld [vmem:[%s2010 + $0x80] sm:$0xff]
    %v2028 = vld [vmem:[%s2010 + $0x88] sm:$0xff]
    %v2029 = vld [vmem:[%s2010 + $0x90] sm:$0xff]
    %v2030 = vld [vmem:[%s2010 + $0x98] sm:$0xff]
    %v2031 = vld [vmem:[%s2010 + $0xa0] sm:$0xff]
    %v2032 = vld [vmem:[%s2010 + $0xa8] sm:$0xff]
    %v2033 = vld [vmem:[%s2010 + $0xb0] sm:$0xff]
    %v2034 = vld [vmem:[%s2010 + $0xb8] sm:$0xff]
    %v2035 = vld [vmem:[%s2010 + $0xc0] sm:$0xff]
    %v2036 = vld [vmem:[%s2010 + $0xc8] sm:$0xff]
    %v2037 = vld [vmem:[%s2010 + $0xd0] sm:$0xff]
    %v2038 = vld [vmem:[%s2010 + $0xd8] sm:$0xff]
    %v2039 = vld [vmem:[%s2010 + $0xe0] sm:$0xff]
    %v2040 = vld [vmem:[%s2010 + $0xe8] sm:$0xff]
    %v2041 = vld [vmem:[%s2010 + $0xf0] sm:$0xff]
    %v2042 = vld [vmem:[%s2010 + $0xf8] sm:$0xff]
    %v2043 = vld [vmem:[%s2010 + $0x100] sm:$0xff]
    %v2044 = vld [vmem:[%s2010 + $0x108] sm:$0xff]
    %v2045 = vld [vmem:[%s2010 + $0x110] sm:$0xff]
    %v2046 = vld [vmem:[%s2010 + $0x118] sm:$0xff]
    %v2047 = vld [vmem:[%s2010 + $0x120] sm:$0xff]
    %v2048 = vld [vmem:[%s2010 + $0x128] sm:$0xff]
    %v2049 = vld [vmem:[%s2010 + $0x130] sm:$0xff]
    %v2050 = vld [vmem:[%s2010 + $0x138] sm:$0xff]
    %v2051 = vld [vmem:[%s2010 + $0x140] sm:$0xff]
    %v2052 = vld [vmem:[%s2010 + $0x148] sm:$0xff]
    %v2053 = vld [vmem:[%s2010 + $0x150] sm:$0xff]
    %v2054 = vld [vmem:[%s2010 + $0x158] sm:$0xff]
    %v2055 = vld [vmem:[%s2010 + $0x160] sm:$0xff]
    %v2056 = vld [vmem:[%s2010 + $0x168] sm:$0xff]
    %v2057 = vld [vmem:[%s2010 + $0x170] sm:$0xff]
    %v2058 = vld [vmem:[%s2010 + $0x178] sm:$0xff]
    %v2059 = vld [vmem:[%s2010 + $0x180] sm:$0xff]
    %v2060 = vld [vmem:[%s2010 + $0x188] sm:$0xff]
    %v2061 = vld [vmem:[%s2010 + $0x190] sm:$0xff]
    %v2062 = vld [vmem:[%s2010 + $0x198] sm:$0xff]
    %v2063 = vld [vmem:[%s2010 + $0x1a0] sm:$0xff]
    %v2064 = vld [vmem:[%s2010 + $0x1a8] sm:$0xff]
    %v2065 = vld [vmem:[%s2010 + $0x1b0] sm:$0xff]
    %v2066 = vld [vmem:[%s2010 + $0x1b8] sm:$0xff]
    %v2067 = vld [vmem:[%s2010 + $0x1c0] sm:$0xff]
    %v2068 = vld [vmem:[%s2010 + $0x1c8] sm:$0xff]
    %v2069 = vld [vmem:[%s2010 + $0x1d0] sm:$0xff]
    %v2070 = vld [vmem:[%s2010 + $0x1d8] sm:$0xff]
    %v2071 = vld [vmem:[%s2010 + $0x1e0] sm:$0xff]
    %v2072 = vld [vmem:[%s2010 + $0x1e8] sm:$0xff]
    %v2073 = vld [vmem:[%s2010 + $0x1f0] sm:$0xff]
    %v2074 = vld [vmem:[%s2010 + $0x1f8] sm:$0xff]
    %v2075 = vld [vmem:[%s2010 + $0x200] sm:$0xff]
    %v2076 = vld [vmem:[%s2010 + $0x208] sm:$0xff]
    %v2077 = vld [vmem:[%s2010 + $0x210] sm:$0xff]
    %v2078 = vld [vmem:[%s2010 + $0x218] sm:$0xff]
    %v2079 = vld [vmem:[%s2010 + $0x220] sm:$0xff]
    %v2080 = vld [vmem:[%s2010 + $0x228] sm:$0xff]
    %v2081 = vld [vmem:[%s2010 + $0x230] sm:$0xff]
    %v2082 = vld [vmem:[%s2010 + $0x238] sm:$0xff]
    %v2083 = vld [vmem:[%s2010 + $0x240] sm:$0xff]
    %v2084 = vld [vmem:[%s2010 + $0x248] sm:$0xff]
    %v2085 = vld [vmem:[%s2010 + $0x250] sm:$0xff]
    %v2086 = vld [vmem:[%s2010 + $0x258] sm:$0xff]
    %v2087 = vld [vmem:[%s2010 + $0x260] sm:$0xff]
    %v2088 = vld [vmem:[%s2010 + $0x268] sm:$0xff]
    %v2089 = vld [vmem:[%s2010 + $0x270] sm:$0xff]
    %v2090 = vld [vmem:[%s2010 + $0x278] sm:$0xff]
    %v2091 = vld [vmem:[%s2010 + $0x280] sm:$0xff]
    %v2092 = vld [vmem:[%s2010 + $0x288] sm:$0xff]
    %v2093 = vld [vmem:[%s2010 + $0x290] sm:$0xff]
    %v2094 = vld [vmem:[%s2010 + $0x298] sm:$0xff]
    %v2095 = vld [vmem:[%s2010 + $0x2a0] sm:$0xff]
    %v2096 = vld [vmem:[%s2010 + $0x2a8] sm:$0xff]
    %v2097 = vld [vmem:[%s2010 + $0x2b0] sm:$0xff]
    %v2098 = vld [vmem:[%s2010 + $0x2b8] sm:$0xff]
    %v2099 = vld [vmem:[%s2010 + $0x2c0] sm:$0xff]
    %v2100 = vld [vmem:[%s2010 + $0x2c8] sm:$0xff]
    %v2101 = vld [vmem:[%s2010 + $0x2d0] sm:$0xff]
    %v2102 = vld [vmem:[%s2010 + $0x2d8] sm:$0xff]
    %v2103 = vld [vmem:[%s2010 + $0x2e0] sm:$0xff]
    %v2104 = vld [vmem:[%s2010 + $0x2e8] sm:$0xff]
    %v2105 = vld [vmem:[%s2010 + $0x2f0] sm:$0xff]
    %v2106 = vld [vmem:[%s2010 + $0x2f8] sm:$0xff]
    %v2107 = vld [vmem:[%s2010 + $0x300] sm:$0xff]
    %v2108 = vld [vmem:[%s2010 + $0x308] sm:$0xff]
    %v2109 = vld [vmem:[%s2010 + $0x310] sm:$0xff]
    %v2110 = vld [vmem:[%s2010 + $0x318] sm:$0xff]
    %v2111 = vld [vmem:[%s2010 + $0x320] sm:$0xff]
    %v2112 = vld [vmem:[%s2010 + $0x328] sm:$0xff]
    %v2113 = vld [vmem:[%s2010 + $0x330] sm:$0xff]
    %v2114 = vld [vmem:[%s2010 + $0x338] sm:$0xff]
    %v2115 = vld [vmem:[%s2010 + $0x340] sm:$0xff]
    %v2116 = vld [vmem:[%s2010 + $0x348] sm:$0xff]
    %v2117 = vld [vmem:[%s2010 + $0x350] sm:$0xff]
    %v2118 = vld [vmem:[%s2010 + $0x358] sm:$0xff]
    %v2119 = vld [vmem:[%s2010 + $0x360] sm:$0xff]
    %v2120 = vld [vmem:[%s2010 + $0x368] sm:$0xff]
    %v2121 = vld [vmem:[%s2010 + $0x370] sm:$0xff]
    %v2122 = vld [vmem:[%s2010 + $0x378] sm:$0xff]
    %v2123 = vld [vmem:[%s2010 + $0x380] sm:$0xff]
    %v2124 = vld [vmem:[%s2010 + $0x388] sm:$0xff]
    %v2125 = vld [vmem:[%s2010 + $0x390] sm:$0xff]
    %v2126 = vld [vmem:[%s2010 + $0x398] sm:$0xff]
    %v2127 = vld [vmem:[%s2010 + $0x3a0] sm:$0xff]
    %v2128 = vld [vmem:[%s2010 + $0x3a8] sm:$0xff]
    %v2129 = vld [vmem:[%s2010 + $0x3b0] sm:$0xff]
    %v2130 = vld [vmem:[%s2010 + $0x3b8] sm:$0xff]
    %v2131 = vld [vmem:[%s2010 + $0x3c0] sm:$0xff]
    %v2132 = vld [vmem:[%s2010 + $0x3c8] sm:$0xff]
    %v2133 = vld [vmem:[%s2010 + $0x3d0] sm:$0xff]
    %v2134 = vld [vmem:[%s2010 + $0x3d8] sm:$0xff]
    %v2135 = vld [vmem:[%s2010 + $0x3e0] sm:$0xff]
    %v2136 = vld [vmem:[%s2010 + $0x3e8] sm:$0xff]
    %v2137 = vld [vmem:[%s2010 + $0x3f0] sm:$0x1]
    %v2138 = vld [vmem:[%s2010 + $0x3f8] sm:$0x1]
    %v2139 = vld [vmem:[%s2010 + $0x400] sm:$0x1]
    %v2140 = vld [vmem:[%s2010 + $0x408] sm:$0x1]
    %v2141 = vld [vmem:[%s2010 + $0x410] sm:$0x1]
    %v2142 = vld [vmem:[%s2010 + $0x418] sm:$0x1]
    %v2145 = vunpack.c.l.s4 1983009808
    %v2146 = vunpack.c.0.s8 %v2145
    %v2147 = vlaneseq
    %v2148 = vshrl.u32 %v2147, 7
    %v2149 = vsub.s32 %v2146, %v2148
    %v2150 = vrot.slane %v862, %v2149
    %v2151 = vcombine.high %v2150, %v2150
    %v2153 = vsel %vm1150, %v2151, 0
    %v2156 = vsel %vm1153, %v2137, 0
    %v2159 = vsel %vm1153, %v2138, 0
    %v2162 = vsel %vm1153, %v2139, 0
    %v2165 = vsel %vm1153, %v2140, 0
    %v2168 = vsel %vm1153, %v2141, 0
    %v2171 = vsel %vm1153, %v2142, 0
    %2173 = vmatprep.subr.mxu0 %v2012
    %2174 = vmatpush1.msra.mxu0 %v2011
    %2175 = vmatprep.subr.mxu0 %v2018
    %2176 = vmatpush1.msra.mxu0 %v2017
    %2177 = vmatprep.subr.mxu0 %v2024
    %2178 = vmatpush1.msra.mxu0 %v2023
    %2179 = vmatprep.subr.mxu0 %v2030
    %2180 = vmatpush1.msra.mxu0 %v2029
    %2181 = vmatprep.subr.mxu0 %v2036
    %2182 = vmatpush1.msra.mxu0 %v2035
    %2183 = vmatprep.subr.mxu0 %v2042
    %2184 = vmatpush1.msra.mxu0 %v2041
    %2185 = vmatprep.subr.mxu0 %v2048
    %2186 = vmatpush1.msra.mxu0 %v2047
    %2187 = vmatprep.subr.mxu0 %v2054
    %2188 = vmatpush1.msra.mxu0 %v2053
    %2189 = vmatprep.subr.mxu0 %v2060
    %2190 = vmatpush1.msra.mxu0 %v2059
    %2191 = vmatprep.subr.mxu0 %v2066
    %2192 = vmatpush1.msra.mxu0 %v2065
    %2193 = vmatprep.subr.mxu0 %v2072
    %2194 = vmatpush1.msra.mxu0 %v2071
    %2195 = vmatprep.subr.mxu0 %v2078
    %2196 = vmatpush1.msra.mxu0 %v2077
    %2197 = vmatprep.subr.mxu0 %v2084
    %2198 = vmatpush1.msra.mxu0 %v2083
    %2199 = vmatprep.subr.mxu0 %v2090
    %2200 = vmatpush1.msra.mxu0 %v2089
    %2201 = vmatprep.subr.mxu0 %v2096
    %2202 = vmatpush1.msra.mxu0 %v2095
    %2203 = vmatprep.subr.mxu0 %v2102
    %2204 = vmatpush1.msra.mxu0 %v2101
    %2205 = vmatprep.subr.mxu0 %v2108
    %2206 = vmatpush1.msra.mxu0 %v2107
    %2207 = vmatprep.subr.mxu0 %v2114
    %2208 = vmatpush1.msra.mxu0 %v2113
    %2209 = vmatprep.subr.mxu0 %v2120
    %2210 = vmatpush1.msra.mxu0 %v2119
    %2211 = vmatprep.subr.mxu0 %v2126
    %2212 = vmatpush1.msra.mxu0 %v2125
    %2213 = vmatprep.subr.mxu0 %v2132
    %2214 = vmatpush1.msra.mxu0 %v2131
    %2215 = vmatprep.subr.mxu0 %v2159
    %2216 = vmatpush1.msra.mxu0 %v2156
    %2217 = vmatprep.subr.mxu0 0.0
    %2218 = vmatpush1.msra.mxu0 0.0
    %2219 = vmatprep.subr.mxu0 0.0
    %2220 = vmatpush1.msra.mxu0 0.0
    %2221 = vmatprep.subr.mxu0 0.0
    %2222 = vmatpush1.msra.mxu0 0.0
    %2223 = vmatprep.subr.mxu0 0.0
    %2224 = vmatpush1.msra.mxu0 0.0
    %2225 = vmatprep.subr.mxu0 0.0
    %2226 = vmatpush1.msra.mxu0 0.0
    %2227 = vmatprep.subr.mxu0 0.0
    %2228 = vmatpush1.msra.mxu0 0.0
    %2229 = vmatprep.subr.mxu0 0.0
    %2230 = vmatpush1.msra.mxu0 0.0
    %2231 = vmatprep.subr.mxu0 0.0
    %2232 = vmatpush1.msra.mxu0 0.0
    %2233 = vmatprep.subr.mxu0 0.0
    %2234 = vmatpush1.msra.mxu0 0.0
    %2235 = vmatprep.subr.mxu0 0.0
    %2236 = vmatpush1.msra.mxu0 0.0
    %2237 = vmatprep.mubr.f32.mxu0 %v2153
    %2238 = vmatmul.mubr.f32.gmra.mrb[0].mxu0 %v2150
    %v2239 = vpop.f32.mrb[0].mxu0
    %v2240 = vadd.f32 0.0, %v2239
    %v2241 = vpop.f32.mrb[0].mxu0
    %v2242 = vadd.f32 0.0, %v2241
    %2243 = vdwg.mxu0
    %2244 = vmatprep.subr.mxu0 %v2014
    %2245 = vmatpush1.msra.mxu0 %v2013
    %2246 = vmatprep.subr.mxu0 %v2020
    %2247 = vmatpush1.msra.mxu0 %v2019
    %2248 = vmatprep.subr.mxu0 %v2026
    %2249 = vmatpush1.msra.mxu0 %v2025
    %2250 = vmatprep.subr.mxu0 %v2032
    %2251 = vmatpush1.msra.mxu0 %v2031
    %2252 = vmatprep.subr.mxu0 %v2038
    %2253 = vmatpush1.msra.mxu0 %v2037
    %2254 = vmatprep.subr.mxu0 %v2044
    %2255 = vmatpush1.msra.mxu0 %v2043
    %2256 = vmatprep.subr.mxu0 %v2050
    %2257 = vmatpush1.msra.mxu0 %v2049
    %2258 = vmatprep.subr.mxu0 %v2056
    %2259 = vmatpush1.msra.mxu0 %v2055
    %2260 = vmatprep.subr.mxu0 %v2062
    %2261 = vmatpush1.msra.mxu0 %v2061
    %2262 = vmatprep.subr.mxu0 %v2068
    %2263 = vmatpush1.msra.mxu0 %v2067
    %2264 = vmatprep.subr.mxu0 %v2074
    %2265 = vmatpush1.msra.mxu0 %v2073
    %2266 = vmatprep.subr.mxu0 %v2080
    %2267 = vmatpush1.msra.mxu0 %v2079
    %2268 = vmatprep.subr.mxu0 %v2086
    %2269 = vmatpush1.msra.mxu0 %v2085
    %2270 = vmatprep.subr.mxu0 %v2092
    %2271 = vmatpush1.msra.mxu0 %v2091
    %2272 = vmatprep.subr.mxu0 %v2098
    %2273 = vmatpush1.msra.mxu0 %v2097
    %2274 = vmatprep.subr.mxu0 %v2104
    %2275 = vmatpush1.msra.mxu0 %v2103
    %2276 = vmatprep.subr.mxu0 %v2110
    %2277 = vmatpush1.msra.mxu0 %v2109
    %2278 = vmatprep.subr.mxu0 %v2116
    %2279 = vmatpush1.msra.mxu0 %v2115
    %2280 = vmatprep.subr.mxu0 %v2122
    %2281 = vmatpush1.msra.mxu0 %v2121
    %2282 = vmatprep.subr.mxu0 %v2128
    %2283 = vmatpush1.msra.mxu0 %v2127
    %2284 = vmatprep.subr.mxu0 %v2134
    %2285 = vmatpush1.msra.mxu0 %v2133
    %2286 = vmatprep.subr.mxu0 %v2165
    %2287 = vmatpush1.msra.mxu0 %v2162
    %2288 = vmatprep.subr.mxu0 0.0
    %2289 = vmatpush1.msra.mxu0 0.0
    %2290 = vmatprep.subr.mxu0 0.0
    %2291 = vmatpush1.msra.mxu0 0.0
    %2292 = vmatprep.subr.mxu0 0.0
    %2293 = vmatpush1.msra.mxu0 0.0
    %2294 = vmatprep.subr.mxu0 0.0
    %2295 = vmatpush1.msra.mxu0 0.0
    %2296 = vmatprep.subr.mxu0 0.0
    %2297 = vmatpush1.msra.mxu0 0.0
    %2298 = vmatprep.subr.mxu0 0.0
    %2299 = vmatpush1.msra.mxu0 0.0
    %2300 = vmatprep.subr.mxu0 0.0
    %2301 = vmatpush1.msra.mxu0 0.0
    %2302 = vmatprep.subr.mxu0 0.0
    %2303 = vmatpush1.msra.mxu0 0.0
    %2304 = vmatprep.subr.mxu0 0.0
    %2305 = vmatpush1.msra.mxu0 0.0
    %2306 = vmatprep.subr.mxu0 0.0
    %2307 = vmatpush1.msra.mxu0 0.0
    %2308 = vmatprep.mubr.f32.mxu0 %v2153
    %2309 = vmatmul.mubr.f32.gmra.mrb[0].mxu0 %v2150
    %v2310 = vpop.f32.mrb[0].mxu0
    %v2311 = vadd.f32 0.0, %v2310
    %v2312 = vpop.f32.mrb[0].mxu0
    %v2313 = vadd.f32 0.0, %v2312
    %2314 = vdwg.mxu0
    %2315 = vmatprep.subr.mxu0 %v2016
    %2316 = vmatpush1.msra.mxu0 %v2015
    %2317 = vmatprep.subr.mxu0 %v2022
    %2318 = vmatpush1.msra.mxu0 %v2021
    %2319 = vmatprep.subr.mxu0 %v2028
    %2320 = vmatpush1.msra.mxu0 %v2027
    %2321 = vmatprep.subr.mxu0 %v2034
    %2322 = vmatpush1.msra.mxu0 %v2033
    %2323 = vmatprep.subr.mxu0 %v2040
    %2324 = vmatpush1.msra.mxu0 %v2039
    %2325 = vmatprep.subr.mxu0 %v2046
    %2326 = vmatpush1.msra.mxu0 %v2045
    %2327 = vmatprep.subr.mxu0 %v2052
    %2328 = vmatpush1.msra.mxu0 %v2051
    %2329 = vmatprep.subr.mxu0 %v2058
    %2330 = vmatpush1.msra.mxu0 %v2057
    %2331 = vmatprep.subr.mxu0 %v2064
    %2332 = vmatpush1.msra.mxu0 %v2063
    %2333 = vmatprep.subr.mxu0 %v2070
    %2334 = vmatpush1.msra.mxu0 %v2069
    %2335 = vmatprep.subr.mxu0 %v2076
    %2336 = vmatpush1.msra.mxu0 %v2075
    %2337 = vmatprep.subr.mxu0 %v2082
    %2338 = vmatpush1.msra.mxu0 %v2081
    %2339 = vmatprep.subr.mxu0 %v2088
    %2340 = vmatpush1.msra.mxu0 %v2087
    %2341 = vmatprep.subr.mxu0 %v2094
    %2342 = vmatpush1.msra.mxu0 %v2093
    %2343 = vmatprep.subr.mxu0 %v2100
    %2344 = vmatpush1.msra.mxu0 %v2099
    %2345 = vmatprep.subr.mxu0 %v2106
    %2346 = vmatpush1.msra.mxu0 %v2105
    %2347 = vmatprep.subr.mxu0 %v2112
    %2348 = vmatpush1.msra.mxu0 %v2111
    %2349 = vmatprep.subr.mxu0 %v2118
    %2350 = vmatpush1.msra.mxu0 %v2117
    %2351 = vmatprep.subr.mxu0 %v2124
    %2352 = vmatpush1.msra.mxu0 %v2123
    %2353 = vmatprep.subr.mxu0 %v2130
    %2354 = vmatpush1.msra.mxu0 %v2129
    %2355 = vmatprep.subr.mxu0 %v2136
    %2356 = vmatpush1.msra.mxu0 %v2135
    %2357 = vmatprep.subr.mxu0 %v2171
    %2358 = vmatpush1.msra.mxu0 %v2168
    %2359 = vmatprep.subr.mxu0 0.0
    %2360 = vmatpush1.msra.mxu0 0.0
    %2361 = vmatprep.subr.mxu0 0.0
    %2362 = vmatpush1.msra.mxu0 0.0
    %2363 = vmatprep.subr.mxu0 0.0
    %2364 = vmatpush1.msra.mxu0 0.0
    %2365 = vmatprep.subr.mxu0 0.0
    %2366 = vmatpush1.msra.mxu0 0.0
    %2367 = vmatprep.subr.mxu0 0.0
    %2368 = vmatpush1.msra.mxu0 0.0
    %2369 = vmatprep.subr.mxu0 0.0
    %2370 = vmatpush1.msra.mxu0 0.0
    %2371 = vmatprep.subr.mxu0 0.0
    %2372 = vmatpush1.msra.mxu0 0.0
    %2373 = vmatprep.subr.mxu0 0.0
    %2374 = vmatpush1.msra.mxu0 0.0
    %2375 = vmatprep.subr.mxu0 0.0
    %2376 = vmatpush1.msra.mxu0 0.0
    %2377 = vmatprep.subr.mxu0 0.0
    %2378 = vmatpush1.msra.mxu0 0.0
    %2379 = vmatprep.mubr.f32.mxu0 %v2153
    %2380 = vmatmul.mubr.f32.gmra.mrb[0].mxu0 %v2150
    %v2381 = vpop.f32.mrb[0].mxu0
    %v2382 = vadd.f32 0.0, %v2381
    %v2383 = vpop.f32.mrb[0].mxu0
    %v2384 = vadd.f32 0.0, %v2383
    %2385 = vdwg.mxu0
    %v2386 = vadd.f32 %v2004, %v2240
    %v2387 = vadd.f32 %v2005, %v2242
    %v2388 = vadd.f32 %v2006, %v2311
    %v2389 = vadd.f32 %v2007, %v2313
    %v2390 = vadd.f32 %v2008, %v2382
    %v2391 = vadd.f32 %v2009, %v2384
    %s2392 = scalar_lea.vmem %s3, 4224
    %v2393 = vld [vmem:[%s2392] sm:$0xff]
    %v2394 = vld [vmem:[%s2392 + $0x8] sm:$0xff]
    %v2395 = vld [vmem:[%s2392 + $0x10] sm:$0xff]
    %v2396 = vld [vmem:[%s2392 + $0x18] sm:$0xff]
    %v2397 = vld [vmem:[%s2392 + $0x20] sm:$0xff]
    %v2398 = vld [vmem:[%s2392 + $0x28] sm:$0xff]
    %v2399 = vld [vmem:[%s2392 + $0x30] sm:$0xff]
    %v2400 = vld [vmem:[%s2392 + $0x38] sm:$0xff]
    %v2401 = vld [vmem:[%s2392 + $0x40] sm:$0xff]
    %v2402 = vld [vmem:[%s2392 + $0x48] sm:$0xff]
    %v2403 = vld [vmem:[%s2392 + $0x50] sm:$0xff]
    %v2404 = vld [vmem:[%s2392 + $0x58] sm:$0xff]
    %v2405 = vld [vmem:[%s2392 + $0x60] sm:$0xff]
    %v2406 = vld [vmem:[%s2392 + $0x68] sm:$0xff]
    %v2407 = vld [vmem:[%s2392 + $0x70] sm:$0xff]
    %v2408 = vld [vmem:[%s2392 + $0x78] sm:$0xff]
    %v2409 = vld [vmem:[%s2392 + $0x80] sm:$0xff]
    %v2410 = vld [vmem:[%s2392 + $0x88] sm:$0xff]
    %v2411 = vld [vmem:[%s2392 + $0x90] sm:$0xff]
    %v2412 = vld [vmem:[%s2392 + $0x98] sm:$0xff]
    %v2413 = vld [vmem:[%s2392 + $0xa0] sm:$0xff]
    %v2414 = vld [vmem:[%s2392 + $0xa8] sm:$0xff]
    %v2415 = vld [vmem:[%s2392 + $0xb0] sm:$0xff]
    %v2416 = vld [vmem:[%s2392 + $0xb8] sm:$0xff]
    %v2417 = vld [vmem:[%s2392 + $0xc0] sm:$0xff]
    %v2418 = vld [vmem:[%s2392 + $0xc8] sm:$0xff]
    %v2419 = vld [vmem:[%s2392 + $0xd0] sm:$0xff]
    %v2420 = vld [vmem:[%s2392 + $0xd8] sm:$0xff]
    %v2421 = vld [vmem:[%s2392 + $0xe0] sm:$0xff]
    %v2422 = vld [vmem:[%s2392 + $0xe8] sm:$0xff]
    %v2423 = vld [vmem:[%s2392 + $0xf0] sm:$0xff]
    %v2424 = vld [vmem:[%s2392 + $0xf8] sm:$0xff]
    %v2425 = vld [vmem:[%s2392 + $0x100] sm:$0xff]
    %v2426 = vld [vmem:[%s2392 + $0x108] sm:$0xff]
    %v2427 = vld [vmem:[%s2392 + $0x110] sm:$0xff]
    %v2428 = vld [vmem:[%s2392 + $0x118] sm:$0xff]
    %v2429 = vld [vmem:[%s2392 + $0x120] sm:$0xff]
    %v2430 = vld [vmem:[%s2392 + $0x128] sm:$0xff]
    %v2431 = vld [vmem:[%s2392 + $0x130] sm:$0xff]
    %v2432 = vld [vmem:[%s2392 + $0x138] sm:$0xff]
    %v2433 = vld [vmem:[%s2392 + $0x140] sm:$0xff]
    %v2434 = vld [vmem:[%s2392 + $0x148] sm:$0xff]
    %v2435 = vld [vmem:[%s2392 + $0x150] sm:$0xff]
    %v2436 = vld [vmem:[%s2392 + $0x158] sm:$0xff]
    %v2437 = vld [vmem:[%s2392 + $0x160] sm:$0xff]
    %v2438 = vld [vmem:[%s2392 + $0x168] sm:$0xff]
    %v2439 = vld [vmem:[%s2392 + $0x170] sm:$0xff]
    %v2440 = vld [vmem:[%s2392 + $0x178] sm:$0xff]
    %v2441 = vld [vmem:[%s2392 + $0x180] sm:$0xff]
    %v2442 = vld [vmem:[%s2392 + $0x188] sm:$0xff]
    %v2443 = vld [vmem:[%s2392 + $0x190] sm:$0xff]
    %v2444 = vld [vmem:[%s2392 + $0x198] sm:$0xff]
    %v2445 = vld [vmem:[%s2392 + $0x1a0] sm:$0xff]
    %v2446 = vld [vmem:[%s2392 + $0x1a8] sm:$0xff]
    %v2447 = vld [vmem:[%s2392 + $0x1b0] sm:$0xff]
    %v2448 = vld [vmem:[%s2392 + $0x1b8] sm:$0xff]
    %v2449 = vld [vmem:[%s2392 + $0x1c0] sm:$0xff]
    %v2450 = vld [vmem:[%s2392 + $0x1c8] sm:$0xff]
    %v2451 = vld [vmem:[%s2392 + $0x1d0] sm:$0xff]
    %v2452 = vld [vmem:[%s2392 + $0x1d8] sm:$0xff]
    %v2453 = vld [vmem:[%s2392 + $0x1e0] sm:$0xff]
    %v2454 = vld [vmem:[%s2392 + $0x1e8] sm:$0xff]
    %v2455 = vld [vmem:[%s2392 + $0x1f0] sm:$0xff]
    %v2456 = vld [vmem:[%s2392 + $0x1f8] sm:$0xff]
    %v2457 = vld [vmem:[%s2392 + $0x200] sm:$0xff]
    %v2458 = vld [vmem:[%s2392 + $0x208] sm:$0xff]
    %v2459 = vld [vmem:[%s2392 + $0x210] sm:$0xff]
    %v2460 = vld [vmem:[%s2392 + $0x218] sm:$0xff]
    %v2461 = vld [vmem:[%s2392 + $0x220] sm:$0xff]
    %v2462 = vld [vmem:[%s2392 + $0x228] sm:$0xff]
    %v2463 = vld [vmem:[%s2392 + $0x230] sm:$0xff]
    %v2464 = vld [vmem:[%s2392 + $0x238] sm:$0xff]
    %v2465 = vld [vmem:[%s2392 + $0x240] sm:$0xff]
    %v2466 = vld [vmem:[%s2392 + $0x248] sm:$0xff]
    %v2467 = vld [vmem:[%s2392 + $0x250] sm:$0xff]
    %v2468 = vld [vmem:[%s2392 + $0x258] sm:$0xff]
    %v2469 = vld [vmem:[%s2392 + $0x260] sm:$0xff]
    %v2470 = vld [vmem:[%s2392 + $0x268] sm:$0xff]
    %v2471 = vld [vmem:[%s2392 + $0x270] sm:$0xff]
    %v2472 = vld [vmem:[%s2392 + $0x278] sm:$0xff]
    %v2473 = vld [vmem:[%s2392 + $0x280] sm:$0xff]
    %v2474 = vld [vmem:[%s2392 + $0x288] sm:$0xff]
    %v2475 = vld [vmem:[%s2392 + $0x290] sm:$0xff]
    %v2476 = vld [vmem:[%s2392 + $0x298] sm:$0xff]
    %v2477 = vld [vmem:[%s2392 + $0x2a0] sm:$0xff]
    %v2478 = vld [vmem:[%s2392 + $0x2a8] sm:$0xff]
    %v2479 = vld [vmem:[%s2392 + $0x2b0] sm:$0xff]
    %v2480 = vld [vmem:[%s2392 + $0x2b8] sm:$0xff]
    %v2481 = vld [vmem:[%s2392 + $0x2c0] sm:$0xff]
    %v2482 = vld [vmem:[%s2392 + $0x2c8] sm:$0xff]
    %v2483 = vld [vmem:[%s2392 + $0x2d0] sm:$0xff]
    %v2484 = vld [vmem:[%s2392 + $0x2d8] sm:$0xff]
    %v2485 = vld [vmem:[%s2392 + $0x2e0] sm:$0xff]
    %v2486 = vld [vmem:[%s2392 + $0x2e8] sm:$0xff]
    %v2487 = vld [vmem:[%s2392 + $0x2f0] sm:$0xff]
    %v2488 = vld [vmem:[%s2392 + $0x2f8] sm:$0xff]
    %v2489 = vld [vmem:[%s2392 + $0x300] sm:$0xff]
    %v2490 = vld [vmem:[%s2392 + $0x308] sm:$0xff]
    %v2491 = vld [vmem:[%s2392 + $0x310] sm:$0xff]
    %v2492 = vld [vmem:[%s2392 + $0x318] sm:$0xff]
    %v2493 = vld [vmem:[%s2392 + $0x320] sm:$0xff]
    %v2494 = vld [vmem:[%s2392 + $0x328] sm:$0xff]
    %v2495 = vld [vmem:[%s2392 + $0x330] sm:$0xff]
    %v2496 = vld [vmem:[%s2392 + $0x338] sm:$0xff]
    %v2497 = vld [vmem:[%s2392 + $0x340] sm:$0xff]
    %v2498 = vld [vmem:[%s2392 + $0x348] sm:$0xff]
    %v2499 = vld [vmem:[%s2392 + $0x350] sm:$0xff]
    %v2500 = vld [vmem:[%s2392 + $0x358] sm:$0xff]
    %v2501 = vld [vmem:[%s2392 + $0x360] sm:$0xff]
    %v2502 = vld [vmem:[%s2392 + $0x368] sm:$0xff]
    %v2503 = vld [vmem:[%s2392 + $0x370] sm:$0xff]
    %v2504 = vld [vmem:[%s2392 + $0x378] sm:$0xff]
    %v2505 = vld [vmem:[%s2392 + $0x380] sm:$0xff]
    %v2506 = vld [vmem:[%s2392 + $0x388] sm:$0xff]
    %v2507 = vld [vmem:[%s2392 + $0x390] sm:$0xff]
    %v2508 = vld [vmem:[%s2392 + $0x398] sm:$0xff]
    %v2509 = vld [vmem:[%s2392 + $0x3a0] sm:$0xff]
    %v2510 = vld [vmem:[%s2392 + $0x3a8] sm:$0xff]
    %v2511 = vld [vmem:[%s2392 + $0x3b0] sm:$0xff]
    %v2512 = vld [vmem:[%s2392 + $0x3b8] sm:$0xff]
    %v2513 = vld [vmem:[%s2392 + $0x3c0] sm:$0xff]
    %v2514 = vld [vmem:[%s2392 + $0x3c8] sm:$0xff]
    %v2515 = vld [vmem:[%s2392 + $0x3d0] sm:$0xff]
    %v2516 = vld [vmem:[%s2392 + $0x3d8] sm:$0xff]
    %v2517 = vld [vmem:[%s2392 + $0x3e0] sm:$0xff]
    %v2518 = vld [vmem:[%s2392 + $0x3e8] sm:$0xff]
    %v2519 = vld [vmem:[%s2392 + $0x3f0] sm:$0x1]
    %v2520 = vld [vmem:[%s2392 + $0x3f8] sm:$0x1]
    %v2521 = vld [vmem:[%s2392 + $0x400] sm:$0x1]
    %v2522 = vld [vmem:[%s2392 + $0x408] sm:$0x1]
    %v2523 = vld [vmem:[%s2392 + $0x410] sm:$0x1]
    %v2524 = vld [vmem:[%s2392 + $0x418] sm:$0x1]
    %v2527 = vunpack.c.l.s4 1983009808
    %v2528 = vunpack.c.0.s8 %v2527
    %v2529 = vlaneseq
    %v2530 = vshrl.u32 %v2529, 7
    %v2531 = vsub.s32 %v2528, %v2530
    %v2532 = vrot.slane %v865, %v2531
    %v2533 = vcombine.high %v2532, %v2532
    %v2535 = vsel %vm1150, %v2533, 0
    %v2538 = vsel %vm1153, %v2519, 0
    %v2541 = vsel %vm1153, %v2520, 0
    %v2544 = vsel %vm1153, %v2521, 0
    %v2547 = vsel %vm1153, %v2522, 0
    %v2550 = vsel %vm1153, %v2523, 0
    %v2553 = vsel %vm1153, %v2524, 0
    %2555 = vmatprep.subr.mxu0 %v2394
    %2556 = vmatpush1.msra.mxu0 %v2393
    %2557 = vmatprep.subr.mxu0 %v2400
    %2558 = vmatpush1.msra.mxu0 %v2399
    %2559 = vmatprep.subr.mxu0 %v2406
    %2560 = vmatpush1.msra.mxu0 %v2405
    %2561 = vmatprep.subr.mxu0 %v2412
    %2562 = vmatpush1.msra.mxu0 %v2411
    %2563 = vmatprep.subr.mxu0 %v2418
    %2564 = vmatpush1.msra.mxu0 %v2417
    %2565 = vmatprep.subr.mxu0 %v2424
    %2566 = vmatpush1.msra.mxu0 %v2423
    %2567 = vmatprep.subr.mxu0 %v2430
    %2568 = vmatpush1.msra.mxu0 %v2429
    %2569 = vmatprep.subr.mxu0 %v2436
    %2570 = vmatpush1.msra.mxu0 %v2435
    %2571 = vmatprep.subr.mxu0 %v2442
    %2572 = vmatpush1.msra.mxu0 %v2441
    %2573 = vmatprep.subr.mxu0 %v2448
    %2574 = vmatpush1.msra.mxu0 %v2447
    %2575 = vmatprep.subr.mxu0 %v2454
    %2576 = vmatpush1.msra.mxu0 %v2453
    %2577 = vmatprep.subr.mxu0 %v2460
    %2578 = vmatpush1.msra.mxu0 %v2459
    %2579 = vmatprep.subr.mxu0 %v2466
    %2580 = vmatpush1.msra.mxu0 %v2465
    %2581 = vmatprep.subr.mxu0 %v2472
    %2582 = vmatpush1.msra.mxu0 %v2471
    %2583 = vmatprep.subr.mxu0 %v2478
    %2584 = vmatpush1.msra.mxu0 %v2477
    %2585 = vmatprep.subr.mxu0 %v2484
    %2586 = vmatpush1.msra.mxu0 %v2483
    %2587 = vmatprep.subr.mxu0 %v2490
    %2588 = vmatpush1.msra.mxu0 %v2489
    %2589 = vmatprep.subr.mxu0 %v2496
    %2590 = vmatpush1.msra.mxu0 %v2495
    %2591 = vmatprep.subr.mxu0 %v2502
    %2592 = vmatpush1.msra.mxu0 %v2501
    %2593 = vmatprep.subr.mxu0 %v2508
    %2594 = vmatpush1.msra.mxu0 %v2507
    %2595 = vmatprep.subr.mxu0 %v2514
    %2596 = vmatpush1.msra.mxu0 %v2513
    %2597 = vmatprep.subr.mxu0 %v2541
    %2598 = vmatpush1.msra.mxu0 %v2538
    %2599 = vmatprep.subr.mxu0 0.0
    %2600 = vmatpush1.msra.mxu0 0.0
    %2601 = vmatprep.subr.mxu0 0.0
    %2602 = vmatpush1.msra.mxu0 0.0
    %2603 = vmatprep.subr.mxu0 0.0
    %2604 = vmatpush1.msra.mxu0 0.0
    %2605 = vmatprep.subr.mxu0 0.0
    %2606 = vmatpush1.msra.mxu0 0.0
    %2607 = vmatprep.subr.mxu0 0.0
    %2608 = vmatpush1.msra.mxu0 0.0
    %2609 = vmatprep.subr.mxu0 0.0
    %2610 = vmatpush1.msra.mxu0 0.0
    %2611 = vmatprep.subr.mxu0 0.0
    %2612 = vmatpush1.msra.mxu0 0.0
    %2613 = vmatprep.subr.mxu0 0.0
    %2614 = vmatpush1.msra.mxu0 0.0
    %2615 = vmatprep.subr.mxu0 0.0
    %2616 = vmatpush1.msra.mxu0 0.0
    %2617 = vmatprep.subr.mxu0 0.0
    %2618 = vmatpush1.msra.mxu0 0.0
    %2619 = vmatprep.mubr.f32.mxu0 %v2535
    %2620 = vmatmul.mubr.f32.gmra.mrb[0].mxu0 %v2532
    %v2621 = vpop.f32.mrb[0].mxu0
    %v2622 = vadd.f32 0.0, %v2621
    %v2623 = vpop.f32.mrb[0].mxu0
    %v2624 = vadd.f32 0.0, %v2623
    %2625 = vdwg.mxu0
    %2626 = vmatprep.subr.mxu0 %v2396
    %2627 = vmatpush1.msra.mxu0 %v2395
    %2628 = vmatprep.subr.mxu0 %v2402
    %2629 = vmatpush1.msra.mxu0 %v2401
    %2630 = vmatprep.subr.mxu0 %v2408
    %2631 = vmatpush1.msra.mxu0 %v2407
    %2632 = vmatprep.subr.mxu0 %v2414
    %2633 = vmatpush1.msra.mxu0 %v2413
    %2634 = vmatprep.subr.mxu0 %v2420
    %2635 = vmatpush1.msra.mxu0 %v2419
    %2636 = vmatprep.subr.mxu0 %v2426
    %2637 = vmatpush1.msra.mxu0 %v2425
    %2638 = vmatprep.subr.mxu0 %v2432
    %2639 = vmatpush1.msra.mxu0 %v2431
    %2640 = vmatprep.subr.mxu0 %v2438
    %2641 = vmatpush1.msra.mxu0 %v2437
    %2642 = vmatprep.subr.mxu0 %v2444
    %2643 = vmatpush1.msra.mxu0 %v2443
    %2644 = vmatprep.subr.mxu0 %v2450
    %2645 = vmatpush1.msra.mxu0 %v2449
    %2646 = vmatprep.subr.mxu0 %v2456
    %2647 = vmatpush1.msra.mxu0 %v2455
    %2648 = vmatprep.subr.mxu0 %v2462
    %2649 = vmatpush1.msra.mxu0 %v2461
    %2650 = vmatprep.subr.mxu0 %v2468
    %2651 = vmatpush1.msra.mxu0 %v2467
    %2652 = vmatprep.subr.mxu0 %v2474
    %2653 = vmatpush1.msra.mxu0 %v2473
    %2654 = vmatprep.subr.mxu0 %v2480
    %2655 = vmatpush1.msra.mxu0 %v2479
    %2656 = vmatprep.subr.mxu0 %v2486
    %2657 = vmatpush1.msra.mxu0 %v2485
    %2658 = vmatprep.subr.mxu0 %v2492
    %2659 = vmatpush1.msra.mxu0 %v2491
    %2660 = vmatprep.subr.mxu0 %v2498
    %2661 = vmatpush1.msra.mxu0 %v2497
    %2662 = vmatprep.subr.mxu0 %v2504
    %2663 = vmatpush1.msra.mxu0 %v2503
    %2664 = vmatprep.subr.mxu0 %v2510
    %2665 = vmatpush1.msra.mxu0 %v2509
    %2666 = vmatprep.subr.mxu0 %v2516
    %2667 = vmatpush1.msra.mxu0 %v2515
    %2668 = vmatprep.subr.mxu0 %v2547
    %2669 = vmatpush1.msra.mxu0 %v2544
    %2670 = vmatprep.subr.mxu0 0.0
    %2671 = vmatpush1.msra.mxu0 0.0
    %2672 = vmatprep.subr.mxu0 0.0
    %2673 = vmatpush1.msra.mxu0 0.0
    %2674 = vmatprep.subr.mxu0 0.0
    %2675 = vmatpush1.msra.mxu0 0.0
    %2676 = vmatprep.subr.mxu0 0.0
    %2677 = vmatpush1.msra.mxu0 0.0
    %2678 = vmatprep.subr.mxu0 0.0
    %2679 = vmatpush1.msra.mxu0 0.0
    %2680 = vmatprep.subr.mxu0 0.0
    %2681 = vmatpush1.msra.mxu0 0.0
    %2682 = vmatprep.subr.mxu0 0.0
    %2683 = vmatpush1.msra.mxu0 0.0
    %2684 = vmatprep.subr.mxu0 0.0
    %2685 = vmatpush1.msra.mxu0 0.0
    %2686 = vmatprep.subr.mxu0 0.0
    %2687 = vmatpush1.msra.mxu0 0.0
    %2688 = vmatprep.subr.mxu0 0.0
    %2689 = vmatpush1.msra.mxu0 0.0
    %2690 = vmatprep.mubr.f32.mxu0 %v2535
    %2691 = vmatmul.mubr.f32.gmra.mrb[0].mxu0 %v2532
    %v2692 = vpop.f32.mrb[0].mxu0
    %v2693 = vadd.f32 0.0, %v2692
    %v2694 = vpop.f32.mrb[0].mxu0
    %v2695 = vadd.f32 0.0, %v2694
    %2696 = vdwg.mxu0
    %2697 = vmatprep.subr.mxu0 %v2398
    %2698 = vmatpush1.msra.mxu0 %v2397
    %2699 = vmatprep.subr.mxu0 %v2404
    %2700 = vmatpush1.msra.mxu0 %v2403
    %2701 = vmatprep.subr.mxu0 %v2410
    %2702 = vmatpush1.msra.mxu0 %v2409
    %2703 = vmatprep.subr.mxu0 %v2416
    %2704 = vmatpush1.msra.mxu0 %v2415
    %2705 = vmatprep.subr.mxu0 %v2422
    %2706 = vmatpush1.msra.mxu0 %v2421
    %2707 = vmatprep.subr.mxu0 %v2428
    %2708 = vmatpush1.msra.mxu0 %v2427
    %2709 = vmatprep.subr.mxu0 %v2434
    %2710 = vmatpush1.msra.mxu0 %v2433
    %2711 = vmatprep.subr.mxu0 %v2440
    %2712 = vmatpush1.msra.mxu0 %v2439
    %2713 = vmatprep.subr.mxu0 %v2446
    %2714 = vmatpush1.msra.mxu0 %v2445
    %2715 = vmatprep.subr.mxu0 %v2452
    %2716 = vmatpush1.msra.mxu0 %v2451
    %2717 = vmatprep.subr.mxu0 %v2458
    %2718 = vmatpush1.msra.mxu0 %v2457
    %2719 = vmatprep.subr.mxu0 %v2464
    %2720 = vmatpush1.msra.mxu0 %v2463
    %2721 = vmatprep.subr.mxu0 %v2470
    %2722 = vmatpush1.msra.mxu0 %v2469
    %2723 = vmatprep.subr.mxu0 %v2476
    %2724 = vmatpush1.msra.mxu0 %v2475
    %2725 = vmatprep.subr.mxu0 %v2482
    %2726 = vmatpush1.msra.mxu0 %v2481
    %2727 = vmatprep.subr.mxu0 %v2488
    %2728 = vmatpush1.msra.mxu0 %v2487
    %2729 = vmatprep.subr.mxu0 %v2494
    %2730 = vmatpush1.msra.mxu0 %v2493
    %2731 = vmatprep.subr.mxu0 %v2500
    %2732 = vmatpush1.msra.mxu0 %v2499
    %2733 = vmatprep.subr.mxu0 %v2506
    %2734 = vmatpush1.msra.mxu0 %v2505
    %2735 = vmatprep.subr.mxu0 %v2512
    %2736 = vmatpush1.msra.mxu0 %v2511
    %2737 = vmatprep.subr.mxu0 %v2518
    %2738 = vmatpush1.msra.mxu0 %v2517
    %2739 = vmatprep.subr.mxu0 %v2553
    %2740 = vmatpush1.msra.mxu0 %v2550
    %2741 = vmatprep.subr.mxu0 0.0
    %2742 = vmatpush1.msra.mxu0 0.0
    %2743 = vmatprep.subr.mxu0 0.0
    %2744 = vmatpush1.msra.mxu0 0.0
    %2745 = vmatprep.subr.mxu0 0.0
    %2746 = vmatpush1.msra.mxu0 0.0
    %2747 = vmatprep.subr.mxu0 0.0
    %2748 = vmatpush1.msra.mxu0 0.0
    %2749 = vmatprep.subr.mxu0 0.0
    %2750 = vmatpush1.msra.mxu0 0.0
    %2751 = vmatprep.subr.mxu0 0.0
    %2752 = vmatpush1.msra.mxu0 0.0
    %2753 = vmatprep.subr.mxu0 0.0
    %2754 = vmatpush1.msra.mxu0 0.0
    %2755 = vmatprep.subr.mxu0 0.0
    %2756 = vmatpush1.msra.mxu0 0.0
    %2757 = vmatprep.subr.mxu0 0.0
    %2758 = vmatpush1.msra.mxu0 0.0
    %2759 = vmatprep.subr.mxu0 0.0
    %2760 = vmatpush1.msra.mxu0 0.0
    %2761 = vmatprep.mubr.f32.mxu0 %v2535
    %2762 = vmatmul.mubr.f32.gmra.mrb[0].mxu0 %v2532
    %v2763 = vpop.f32.mrb[0].mxu0
    %v2764 = vadd.f32 0.0, %v2763
    %v2765 = vpop.f32.mrb[0].mxu0
    %v2766 = vadd.f32 0.0, %v2765
    %2767 = vdwg.mxu0
    %v2768 = vadd.f32 %v2386, %v2622
    %v2769 = vadd.f32 %v2387, %v2624
    %v2770 = vadd.f32 %v2388, %v2693
    %v2771 = vadd.f32 %v2389, %v2695
    %v2772 = vadd.f32 %v2390, %v2764
    %v2773 = vadd.f32 %v2391, %v2766
    %s2774 = scalar_lea.vmem %s3, 5280
    %v2775 = vld [vmem:[%s2774] sm:$0xff]
    %v2776 = vld [vmem:[%s2774 + $0x8] sm:$0xff]
    %v2777 = vld [vmem:[%s2774 + $0x10] sm:$0xff]
    %v2778 = vld [vmem:[%s2774 + $0x18] sm:$0xff]
    %v2779 = vld [vmem:[%s2774 + $0x20] sm:$0xff]
    %v2780 = vld [vmem:[%s2774 + $0x28] sm:$0xff]
    %v2781 = vld [vmem:[%s2774 + $0x30] sm:$0xff]
    %v2782 = vld [vmem:[%s2774 + $0x38] sm:$0xff]
    %v2783 = vld [vmem:[%s2774 + $0x40] sm:$0xff]
    %v2784 = vld [vmem:[%s2774 + $0x48] sm:$0xff]
    %v2785 = vld [vmem:[%s2774 + $0x50] sm:$0xff]
    %v2786 = vld [vmem:[%s2774 + $0x58] sm:$0xff]
    %v2787 = vld [vmem:[%s2774 + $0x60] sm:$0xff]
    %v2788 = vld [vmem:[%s2774 + $0x68] sm:$0xff]
    %v2789 = vld [vmem:[%s2774 + $0x70] sm:$0xff]
    %v2790 = vld [vmem:[%s2774 + $0x78] sm:$0xff]
    %v2791 = vld [vmem:[%s2774 + $0x80] sm:$0xff]
    %v2792 = vld [vmem:[%s2774 + $0x88] sm:$0xff]
    %v2793 = vld [vmem:[%s2774 + $0x90] sm:$0xff]
    %v2794 = vld [vmem:[%s2774 + $0x98] sm:$0xff]
    %v2795 = vld [vmem:[%s2774 + $0xa0] sm:$0xff]
    %v2796 = vld [vmem:[%s2774 + $0xa8] sm:$0xff]
    %v2797 = vld [vmem:[%s2774 + $0xb0] sm:$0xff]
    %v2798 = vld [vmem:[%s2774 + $0xb8] sm:$0xff]
    %v2799 = vld [vmem:[%s2774 + $0xc0] sm:$0xff]
    %v2800 = vld [vmem:[%s2774 + $0xc8] sm:$0xff]
    %v2801 = vld [vmem:[%s2774 + $0xd0] sm:$0xff]
    %v2802 = vld [vmem:[%s2774 + $0xd8] sm:$0xff]
    %v2803 = vld [vmem:[%s2774 + $0xe0] sm:$0xff]
    %v2804 = vld [vmem:[%s2774 + $0xe8] sm:$0xff]
    %v2805 = vld [vmem:[%s2774 + $0xf0] sm:$0xff]
    %v2806 = vld [vmem:[%s2774 + $0xf8] sm:$0xff]
    %v2807 = vld [vmem:[%s2774 + $0x100] sm:$0xff]
    %v2808 = vld [vmem:[%s2774 + $0x108] sm:$0xff]
    %v2809 = vld [vmem:[%s2774 + $0x110] sm:$0xff]
    %v2810 = vld [vmem:[%s2774 + $0x118] sm:$0xff]
    %v2811 = vld [vmem:[%s2774 + $0x120] sm:$0xff]
    %v2812 = vld [vmem:[%s2774 + $0x128] sm:$0xff]
    %v2813 = vld [vmem:[%s2774 + $0x130] sm:$0xff]
    %v2814 = vld [vmem:[%s2774 + $0x138] sm:$0xff]
    %v2815 = vld [vmem:[%s2774 + $0x140] sm:$0xff]
    %v2816 = vld [vmem:[%s2774 + $0x148] sm:$0xff]
    %v2817 = vld [vmem:[%s2774 + $0x150] sm:$0xff]
    %v2818 = vld [vmem:[%s2774 + $0x158] sm:$0xff]
    %v2819 = vld [vmem:[%s2774 + $0x160] sm:$0xff]
    %v2820 = vld [vmem:[%s2774 + $0x168] sm:$0xff]
    %v2821 = vld [vmem:[%s2774 + $0x170] sm:$0xff]
    %v2822 = vld [vmem:[%s2774 + $0x178] sm:$0xff]
    %v2823 = vld [vmem:[%s2774 + $0x180] sm:$0xff]
    %v2824 = vld [vmem:[%s2774 + $0x188] sm:$0xff]
    %v2825 = vld [vmem:[%s2774 + $0x190] sm:$0xff]
    %v2826 = vld [vmem:[%s2774 + $0x198] sm:$0xff]
    %v2827 = vld [vmem:[%s2774 + $0x1a0] sm:$0xff]
    %v2828 = vld [vmem:[%s2774 + $0x1a8] sm:$0xff]
    %v2829 = vld [vmem:[%s2774 + $0x1b0] sm:$0xff]
    %v2830 = vld [vmem:[%s2774 + $0x1b8] sm:$0xff]
    %v2831 = vld [vmem:[%s2774 + $0x1c0] sm:$0xff]
    %v2832 = vld [vmem:[%s2774 + $0x1c8] sm:$0xff]
    %v2833 = vld [vmem:[%s2774 + $0x1d0] sm:$0xff]
    %v2834 = vld [vmem:[%s2774 + $0x1d8] sm:$0xff]
    %v2835 = vld [vmem:[%s2774 + $0x1e0] sm:$0xff]
    %v2836 = vld [vmem:[%s2774 + $0x1e8] sm:$0xff]
    %v2837 = vld [vmem:[%s2774 + $0x1f0] sm:$0xff]
    %v2838 = vld [vmem:[%s2774 + $0x1f8] sm:$0xff]
    %v2839 = vld [vmem:[%s2774 + $0x200] sm:$0xff]
    %v2840 = vld [vmem:[%s2774 + $0x208] sm:$0xff]
    %v2841 = vld [vmem:[%s2774 + $0x210] sm:$0xff]
    %v2842 = vld [vmem:[%s2774 + $0x218] sm:$0xff]
    %v2843 = vld [vmem:[%s2774 + $0x220] sm:$0xff]
    %v2844 = vld [vmem:[%s2774 + $0x228] sm:$0xff]
    %v2845 = vld [vmem:[%s2774 + $0x230] sm:$0xff]
    %v2846 = vld [vmem:[%s2774 + $0x238] sm:$0xff]
    %v2847 = vld [vmem:[%s2774 + $0x240] sm:$0xff]
    %v2848 = vld [vmem:[%s2774 + $0x248] sm:$0xff]
    %v2849 = vld [vmem:[%s2774 + $0x250] sm:$0xff]
    %v2850 = vld [vmem:[%s2774 + $0x258] sm:$0xff]
    %v2851 = vld [vmem:[%s2774 + $0x260] sm:$0xff]
    %v2852 = vld [vmem:[%s2774 + $0x268] sm:$0xff]
    %v2853 = vld [vmem:[%s2774 + $0x270] sm:$0xff]
    %v2854 = vld [vmem:[%s2774 + $0x278] sm:$0xff]
    %v2855 = vld [vmem:[%s2774 + $0x280] sm:$0xff]
    %v2856 = vld [vmem:[%s2774 + $0x288] sm:$0xff]
    %v2857 = vld [vmem:[%s2774 + $0x290] sm:$0xff]
    %v2858 = vld [vmem:[%s2774 + $0x298] sm:$0xff]
    %v2859 = vld [vmem:[%s2774 + $0x2a0] sm:$0xff]
    %v2860 = vld [vmem:[%s2774 + $0x2a8] sm:$0xff]
    %v2861 = vld [vmem:[%s2774 + $0x2b0] sm:$0xff]
    %v2862 = vld [vmem:[%s2774 + $0x2b8] sm:$0xff]
    %v2863 = vld [vmem:[%s2774 + $0x2c0] sm:$0xff]
    %v2864 = vld [vmem:[%s2774 + $0x2c8] sm:$0xff]
    %v2865 = vld [vmem:[%s2774 + $0x2d0] sm:$0xff]
    %v2866 = vld [vmem:[%s2774 + $0x2d8] sm:$0xff]
    %v2867 = vld [vmem:[%s2774 + $0x2e0] sm:$0xff]
    %v2868 = vld [vmem:[%s2774 + $0x2e8] sm:$0xff]
    %v2869 = vld [vmem:[%s2774 + $0x2f0] sm:$0xff]
    %v2870 = vld [vmem:[%s2774 + $0x2f8] sm:$0xff]
    %v2871 = vld [vmem:[%s2774 + $0x300] sm:$0xff]
    %v2872 = vld [vmem:[%s2774 + $0x308] sm:$0xff]
    %v2873 = vld [vmem:[%s2774 + $0x310] sm:$0xff]
    %v2874 = vld [vmem:[%s2774 + $0x318] sm:$0xff]
    %v2875 = vld [vmem:[%s2774 + $0x320] sm:$0xff]
    %v2876 = vld [vmem:[%s2774 + $0x328] sm:$0xff]
    %v2877 = vld [vmem:[%s2774 + $0x330] sm:$0xff]
    %v2878 = vld [vmem:[%s2774 + $0x338] sm:$0xff]
    %v2879 = vld [vmem:[%s2774 + $0x340] sm:$0xff]
    %v2880 = vld [vmem:[%s2774 + $0x348] sm:$0xff]
    %v2881 = vld [vmem:[%s2774 + $0x350] sm:$0xff]
    %v2882 = vld [vmem:[%s2774 + $0x358] sm:$0xff]
    %v2883 = vld [vmem:[%s2774 + $0x360] sm:$0xff]
    %v2884 = vld [vmem:[%s2774 + $0x368] sm:$0xff]
    %v2885 = vld [vmem:[%s2774 + $0x370] sm:$0xff]
    %v2886 = vld [vmem:[%s2774 + $0x378] sm:$0xff]
    %v2887 = vld [vmem:[%s2774 + $0x380] sm:$0xff]
    %v2888 = vld [vmem:[%s2774 + $0x388] sm:$0xff]
    %v2889 = vld [vmem:[%s2774 + $0x390] sm:$0xff]
    %v2890 = vld [vmem:[%s2774 + $0x398] sm:$0xff]
    %v2891 = vld [vmem:[%s2774 + $0x3a0] sm:$0xff]
    %v2892 = vld [vmem:[%s2774 + $0x3a8] sm:$0xff]
    %v2893 = vld [vmem:[%s2774 + $0x3b0] sm:$0xff]
    %v2894 = vld [vmem:[%s2774 + $0x3b8] sm:$0xff]
    %v2895 = vld [vmem:[%s2774 + $0x3c0] sm:$0xff]
    %v2896 = vld [vmem:[%s2774 + $0x3c8] sm:$0xff]
    %v2897 = vld [vmem:[%s2774 + $0x3d0] sm:$0xff]
    %v2898 = vld [vmem:[%s2774 + $0x3d8] sm:$0xff]
    %v2899 = vld [vmem:[%s2774 + $0x3e0] sm:$0xff]
    %v2900 = vld [vmem:[%s2774 + $0x3e8] sm:$0xff]
    %v2901 = vld [vmem:[%s2774 + $0x3f0] sm:$0x1]
    %v2902 = vld [vmem:[%s2774 + $0x3f8] sm:$0x1]
    %v2903 = vld [vmem:[%s2774 + $0x400] sm:$0x1]
    %v2904 = vld [vmem:[%s2774 + $0x408] sm:$0x1]
    %v2905 = vld [vmem:[%s2774 + $0x410] sm:$0x1]
    %v2906 = vld [vmem:[%s2774 + $0x418] sm:$0x1]
    %v2909 = vunpack.c.l.s4 1983009808
    %v2910 = vunpack.c.0.s8 %v2909
    %v2911 = vlaneseq
    %v2912 = vshrl.u32 %v2911, 7
    %v2913 = vsub.s32 %v2910, %v2912
    %v2914 = vrot.slane %v868, %v2913
    %v2915 = vcombine.high %v2914, %v2914
    %v2917 = vsel %vm1150, %v2915, 0
    %v2920 = vsel %vm1153, %v2901, 0
    %v2923 = vsel %vm1153, %v2902, 0
    %v2926 = vsel %vm1153, %v2903, 0
    %v2929 = vsel %vm1153, %v2904, 0
    %v2932 = vsel %vm1153, %v2905, 0
    %v2935 = vsel %vm1153, %v2906, 0
    %2937 = vmatprep.subr.mxu0 %v2776
    %2938 = vmatpush1.msra.mxu0 %v2775
    %2939 = vmatprep.subr.mxu0 %v2782
    %2940 = vmatpush1.msra.mxu0 %v2781
    %2941 = vmatprep.subr.mxu0 %v2788
    %2942 = vmatpush1.msra.mxu0 %v2787
    %2943 = vmatprep.subr.mxu0 %v2794
    %2944 = vmatpush1.msra.mxu0 %v2793
    %2945 = vmatprep.subr.mxu0 %v2800
    %2946 = vmatpush1.msra.mxu0 %v2799
    %2947 = vmatprep.subr.mxu0 %v2806
    %2948 = vmatpush1.msra.mxu0 %v2805
    %2949 = vmatprep.subr.mxu0 %v2812
    %2950 = vmatpush1.msra.mxu0 %v2811
    %2951 = vmatprep.subr.mxu0 %v2818
    %2952 = vmatpush1.msra.mxu0 %v2817
    %2953 = vmatprep.subr.mxu0 %v2824
    %2954 = vmatpush1.msra.mxu0 %v2823
    %2955 = vmatprep.subr.mxu0 %v2830
    %2956 = vmatpush1.msra.mxu0 %v2829
    %2957 = vmatprep.subr.mxu0 %v2836
    %2958 = vmatpush1.msra.mxu0 %v2835
    %2959 = vmatprep.subr.mxu0 %v2842
    %2960 = vmatpush1.msra.mxu0 %v2841
    %2961 = vmatprep.subr.mxu0 %v2848
    %2962 = vmatpush1.msra.mxu0 %v2847
    %2963 = vmatprep.subr.mxu0 %v2854
    %2964 = vmatpush1.msra.mxu0 %v2853
    %2965 = vmatprep.subr.mxu0 %v2860
    %2966 = vmatpush1.msra.mxu0 %v2859
    %2967 = vmatprep.subr.mxu0 %v2866
    %2968 = vmatpush1.msra.mxu0 %v2865
    %2969 = vmatprep.subr.mxu0 %v2872
    %2970 = vmatpush1.msra.mxu0 %v2871
    %2971 = vmatprep.subr.mxu0 %v2878
    %2972 = vmatpush1.msra.mxu0 %v2877
    %2973 = vmatprep.subr.mxu0 %v2884
    %2974 = vmatpush1.msra.mxu0 %v2883
    %2975 = vmatprep.subr.mxu0 %v2890
    %2976 = vmatpush1.msra.mxu0 %v2889
    %2977 = vmatprep.subr.mxu0 %v2896
    %2978 = vmatpush1.msra.mxu0 %v2895
    %2979 = vmatprep.subr.mxu0 %v2923
    %2980 = vmatpush1.msra.mxu0 %v2920
    %2981 = vmatprep.subr.mxu0 0.0
    %2982 = vmatpush1.msra.mxu0 0.0
    %2983 = vmatprep.subr.mxu0 0.0
    %2984 = vmatpush1.msra.mxu0 0.0
    %2985 = vmatprep.subr.mxu0 0.0
    %2986 = vmatpush1.msra.mxu0 0.0
    %2987 = vmatprep.subr.mxu0 0.0
    %2988 = vmatpush1.msra.mxu0 0.0
    %2989 = vmatprep.subr.mxu0 0.0
    %2990 = vmatpush1.msra.mxu0 0.0
    %2991 = vmatprep.subr.mxu0 0.0
    %2992 = vmatpush1.msra.mxu0 0.0
    %2993 = vmatprep.subr.mxu0 0.0
    %2994 = vmatpush1.msra.mxu0 0.0
    %2995 = vmatprep.subr.mxu0 0.0
    %2996 = vmatpush1.msra.mxu0 0.0
    %2997 = vmatprep.subr.mxu0 0.0
    %2998 = vmatpush1.msra.mxu0 0.0
    %2999 = vmatprep.subr.mxu0 0.0
    %3000 = vmatpush1.msra.mxu0 0.0
    %3001 = vmatprep.mubr.f32.mxu0 %v2917
    %3002 = vmatmul.mubr.f32.gmra.mrb[0].mxu0 %v2914
    %v3003 = vpop.f32.mrb[0].mxu0
    %v3004 = vadd.f32 0.0, %v3003
    %v3005 = vpop.f32.mrb[0].mxu0
    %v3006 = vadd.f32 0.0, %v3005
    %3007 = vdwg.mxu0
    %3008 = vmatprep.subr.mxu0 %v2778
    %3009 = vmatpush1.msra.mxu0 %v2777
    %3010 = vmatprep.subr.mxu0 %v2784
    %3011 = vmatpush1.msra.mxu0 %v2783
    %3012 = vmatprep.subr.mxu0 %v2790
    %3013 = vmatpush1.msra.mxu0 %v2789
    %3014 = vmatprep.subr.mxu0 %v2796
    %3015 = vmatpush1.msra.mxu0 %v2795
    %3016 = vmatprep.subr.mxu0 %v2802
    %3017 = vmatpush1.msra.mxu0 %v2801
    %3018 = vmatprep.subr.mxu0 %v2808
    %3019 = vmatpush1.msra.mxu0 %v2807
    %3020 = vmatprep.subr.mxu0 %v2814
    %3021 = vmatpush1.msra.mxu0 %v2813
    %3022 = vmatprep.subr.mxu0 %v2820
    %3023 = vmatpush1.msra.mxu0 %v2819
    %3024 = vmatprep.subr.mxu0 %v2826
    %3025 = vmatpush1.msra.mxu0 %v2825
    %3026 = vmatprep.subr.mxu0 %v2832
    %3027 = vmatpush1.msra.mxu0 %v2831
    %3028 = vmatprep.subr.mxu0 %v2838
    %3029 = vmatpush1.msra.mxu0 %v2837
    %3030 = vmatprep.subr.mxu0 %v2844
    %3031 = vmatpush1.msra.mxu0 %v2843
    %3032 = vmatprep.subr.mxu0 %v2850
    %3033 = vmatpush1.msra.mxu0 %v2849
    %3034 = vmatprep.subr.mxu0 %v2856
    %3035 = vmatpush1.msra.mxu0 %v2855
    %3036 = vmatprep.subr.mxu0 %v2862
    %3037 = vmatpush1.msra.mxu0 %v2861
    %3038 = vmatprep.subr.mxu0 %v2868
    %3039 = vmatpush1.msra.mxu0 %v2867
    %3040 = vmatprep.subr.mxu0 %v2874
    %3041 = vmatpush1.msra.mxu0 %v2873
    %3042 = vmatprep.subr.mxu0 %v2880
    %3043 = vmatpush1.msra.mxu0 %v2879
    %3044 = vmatprep.subr.mxu0 %v2886
    %3045 = vmatpush1.msra.mxu0 %v2885
    %3046 = vmatprep.subr.mxu0 %v2892
    %3047 = vmatpush1.msra.mxu0 %v2891
    %3048 = vmatprep.subr.mxu0 %v2898
    %3049 = vmatpush1.msra.mxu0 %v2897
    %3050 = vmatprep.subr.mxu0 %v2929
    %3051 = vmatpush1.msra.mxu0 %v2926
    %3052 = vmatprep.subr.mxu0 0.0
    %3053 = vmatpush1.msra.mxu0 0.0
    %3054 = vmatprep.subr.mxu0 0.0
    %3055 = vmatpush1.msra.mxu0 0.0
    %3056 = vmatprep.subr.mxu0 0.0
    %3057 = vmatpush1.msra.mxu0 0.0
    %3058 = vmatprep.subr.mxu0 0.0
    %3059 = vmatpush1.msra.mxu0 0.0
    %3060 = vmatprep.subr.mxu0 0.0
    %3061 = vmatpush1.msra.mxu0 0.0
    %3062 = vmatprep.subr.mxu0 0.0
    %3063 = vmatpush1.msra.mxu0 0.0
    %3064 = vmatprep.subr.mxu0 0.0
    %3065 = vmatpush1.msra.mxu0 0.0
    %3066 = vmatprep.subr.mxu0 0.0
    %3067 = vmatpush1.msra.mxu0 0.0
    %3068 = vmatprep.subr.mxu0 0.0
    %3069 = vmatpush1.msra.mxu0 0.0
    %3070 = vmatprep.subr.mxu0 0.0
    %3071 = vmatpush1.msra.mxu0 0.0
    %3072 = vmatprep.mubr.f32.mxu0 %v2917
    %3073 = vmatmul.mubr.f32.gmra.mrb[0].mxu0 %v2914
    %v3074 = vpop.f32.mrb[0].mxu0
    %v3075 = vadd.f32 0.0, %v3074
    %v3076 = vpop.f32.mrb[0].mxu0
    %v3077 = vadd.f32 0.0, %v3076
    %3078 = vdwg.mxu0
    %3079 = vmatprep.subr.mxu0 %v2780
    %3080 = vmatpush1.msra.mxu0 %v2779
    %3081 = vmatprep.subr.mxu0 %v2786
    %3082 = vmatpush1.msra.mxu0 %v2785
    %3083 = vmatprep.subr.mxu0 %v2792
    %3084 = vmatpush1.msra.mxu0 %v2791
    %3085 = vmatprep.subr.mxu0 %v2798
    %3086 = vmatpush1.msra.mxu0 %v2797
    %3087 = vmatprep.subr.mxu0 %v2804
    %3088 = vmatpush1.msra.mxu0 %v2803
    %3089 = vmatprep.subr.mxu0 %v2810
    %3090 = vmatpush1.msra.mxu0 %v2809
    %3091 = vmatprep.subr.mxu0 %v2816
    %3092 = vmatpush1.msra.mxu0 %v2815
    %3093 = vmatprep.subr.mxu0 %v2822
    %3094 = vmatpush1.msra.mxu0 %v2821
    %3095 = vmatprep.subr.mxu0 %v2828
    %3096 = vmatpush1.msra.mxu0 %v2827
    %3097 = vmatprep.subr.mxu0 %v2834
    %3098 = vmatpush1.msra.mxu0 %v2833
    %3099 = vmatprep.subr.mxu0 %v2840
    %3100 = vmatpush1.msra.mxu0 %v2839
    %3101 = vmatprep.subr.mxu0 %v2846
    %3102 = vmatpush1.msra.mxu0 %v2845
    %3103 = vmatprep.subr.mxu0 %v2852
    %3104 = vmatpush1.msra.mxu0 %v2851
    %3105 = vmatprep.subr.mxu0 %v2858
    %3106 = vmatpush1.msra.mxu0 %v2857
    %3107 = vmatprep.subr.mxu0 %v2864
    %3108 = vmatpush1.msra.mxu0 %v2863
    %3109 = vmatprep.subr.mxu0 %v2870
    %3110 = vmatpush1.msra.mxu0 %v2869
    %3111 = vmatprep.subr.mxu0 %v2876
    %3112 = vmatpush1.msra.mxu0 %v2875
    %3113 = vmatprep.subr.mxu0 %v2882
    %3114 = vmatpush1.msra.mxu0 %v2881
    %3115 = vmatprep.subr.mxu0 %v2888
    %3116 = vmatpush1.msra.mxu0 %v2887
    %3117 = vmatprep.subr.mxu0 %v2894
    %3118 = vmatpush1.msra.mxu0 %v2893
    %3119 = vmatprep.subr.mxu0 %v2900
    %3120 = vmatpush1.msra.mxu0 %v2899
    %3121 = vmatprep.subr.mxu0 %v2935
    %3122 = vmatpush1.msra.mxu0 %v2932
    %3123 = vmatprep.subr.mxu0 0.0
    %3124 = vmatpush1.msra.mxu0 0.0
    %3125 = vmatprep.subr.mxu0 0.0
    %3126 = vmatpush1.msra.mxu0 0.0
    %3127 = vmatprep.subr.mxu0 0.0
    %3128 = vmatpush1.msra.mxu0 0.0
    %3129 = vmatprep.subr.mxu0 0.0
    %3130 = vmatpush1.msra.mxu0 0.0
    %3131 = vmatprep.subr.mxu0 0.0
    %3132 = vmatpush1.msra.mxu0 0.0
    %3133 = vmatprep.subr.mxu0 0.0
    %3134 = vmatpush1.msra.mxu0 0.0
    %3135 = vmatprep.subr.mxu0 0.0
    %3136 = vmatpush1.msra.mxu0 0.0
    %3137 = vmatprep.subr.mxu0 0.0
    %3138 = vmatpush1.msra.mxu0 0.0
    %3139 = vmatprep.subr.mxu0 0.0
    %3140 = vmatpush1.msra.mxu0 0.0
    %3141 = vmatprep.subr.mxu0 0.0
    %3142 = vmatpush1.msra.mxu0 0.0
    %3143 = vmatprep.mubr.f32.mxu0 %v2917
    %3144 = vmatmul.mubr.f32.gmra.mrb[0].mxu0 %v2914
    %v3145 = vpop.f32.mrb[0].mxu0
    %v3146 = vadd.f32 0.0, %v3145
    %v3147 = vpop.f32.mrb[0].mxu0
    %v3148 = vadd.f32 0.0, %v3147
    %3149 = vdwg.mxu0
    %v3150 = vadd.f32 %v2768, %v3004
    %v3151 = vadd.f32 %v2769, %v3006
    %v3152 = vadd.f32 %v2770, %v3075
    %v3153 = vadd.f32 %v2771, %v3077
    %v3154 = vadd.f32 %v2772, %v3146
    %v3155 = vadd.f32 %v2773, %v3148
    %s3156 = scalar_lea.vmem %s3, 6336
    %v3157 = vld [vmem:[%s3156] sm:$0xff]
    %v3158 = vld [vmem:[%s3156 + $0x8] sm:$0xff]
    %v3159 = vld [vmem:[%s3156 + $0x10] sm:$0xff]
    %v3160 = vld [vmem:[%s3156 + $0x18] sm:$0xff]
    %v3161 = vld [vmem:[%s3156 + $0x20] sm:$0xff]
    %v3162 = vld [vmem:[%s3156 + $0x28] sm:$0xff]
    %v3163 = vld [vmem:[%s3156 + $0x30] sm:$0xff]
    %v3164 = vld [vmem:[%s3156 + $0x38] sm:$0xff]
    %v3165 = vld [vmem:[%s3156 + $0x40] sm:$0xff]
    %v3166 = vld [vmem:[%s3156 + $0x48] sm:$0xff]
    %v3167 = vld [vmem:[%s3156 + $0x50] sm:$0xff]
    %v3168 = vld [vmem:[%s3156 + $0x58] sm:$0xff]
    %v3169 = vld [vmem:[%s3156 + $0x60] sm:$0xff]
    %v3170 = vld [vmem:[%s3156 + $0x68] sm:$0xff]
    %v3171 = vld [vmem:[%s3156 + $0x70] sm:$0xff]
    %v3172 = vld [vmem:[%s3156 + $0x78] sm:$0xff]
    %v3173 = vld [vmem:[%s3156 + $0x80] sm:$0xff]
    %v3174 = vld [vmem:[%s3156 + $0x88] sm:$0xff]
    %v3175 = vld [vmem:[%s3156 + $0x90] sm:$0xff]
    %v3176 = vld [vmem:[%s3156 + $0x98] sm:$0xff]
    %v3177 = vld [vmem:[%s3156 + $0xa0] sm:$0xff]
    %v3178 = vld [vmem:[%s3156 + $0xa8] sm:$0xff]
    %v3179 = vld [vmem:[%s3156 + $0xb0] sm:$0xff]
    %v3180 = vld [vmem:[%s3156 + $0xb8] sm:$0xff]
    %v3181 = vld [vmem:[%s3156 + $0xc0] sm:$0xff]
    %v3182 = vld [vmem:[%s3156 + $0xc8] sm:$0xff]
    %v3183 = vld [vmem:[%s3156 + $0xd0] sm:$0xff]
    %v3184 = vld [vmem:[%s3156 + $0xd8] sm:$0xff]
    %v3185 = vld [vmem:[%s3156 + $0xe0] sm:$0xff]
    %v3186 = vld [vmem:[%s3156 + $0xe8] sm:$0xff]
    %v3187 = vld [vmem:[%s3156 + $0xf0] sm:$0xff]
    %v3188 = vld [vmem:[%s3156 + $0xf8] sm:$0xff]
    %v3189 = vld [vmem:[%s3156 + $0x100] sm:$0xff]
    %v3190 = vld [vmem:[%s3156 + $0x108] sm:$0xff]
    %v3191 = vld [vmem:[%s3156 + $0x110] sm:$0xff]
    %v3192 = vld [vmem:[%s3156 + $0x118] sm:$0xff]
    %v3193 = vld [vmem:[%s3156 + $0x120] sm:$0xff]
    %v3194 = vld [vmem:[%s3156 + $0x128] sm:$0xff]
    %v3195 = vld [vmem:[%s3156 + $0x130] sm:$0xff]
    %v3196 = vld [vmem:[%s3156 + $0x138] sm:$0xff]
    %v3197 = vld [vmem:[%s3156 + $0x140] sm:$0xff]
    %v3198 = vld [vmem:[%s3156 + $0x148] sm:$0xff]
    %v3199 = vld [vmem:[%s3156 + $0x150] sm:$0xff]
    %v3200 = vld [vmem:[%s3156 + $0x158] sm:$0xff]
    %v3201 = vld [vmem:[%s3156 + $0x160] sm:$0xff]
    %v3202 = vld [vmem:[%s3156 + $0x168] sm:$0xff]
    %v3203 = vld [vmem:[%s3156 + $0x170] sm:$0xff]
    %v3204 = vld [vmem:[%s3156 + $0x178] sm:$0xff]
    %v3205 = vld [vmem:[%s3156 + $0x180] sm:$0xff]
    %v3206 = vld [vmem:[%s3156 + $0x188] sm:$0xff]
    %v3207 = vld [vmem:[%s3156 + $0x190] sm:$0xff]
    %v3208 = vld [vmem:[%s3156 + $0x198] sm:$0xff]
    %v3209 = vld [vmem:[%s3156 + $0x1a0] sm:$0xff]
    %v3210 = vld [vmem:[%s3156 + $0x1a8] sm:$0xff]
    %v3211 = vld [vmem:[%s3156 + $0x1b0] sm:$0xff]
    %v3212 = vld [vmem:[%s3156 + $0x1b8] sm:$0xff]
    %v3213 = vld [vmem:[%s3156 + $0x1c0] sm:$0xff]
    %v3214 = vld [vmem:[%s3156 + $0x1c8] sm:$0xff]
    %v3215 = vld [vmem:[%s3156 + $0x1d0] sm:$0xff]
    %v3216 = vld [vmem:[%s3156 + $0x1d8] sm:$0xff]
    %v3217 = vld [vmem:[%s3156 + $0x1e0] sm:$0xff]
    %v3218 = vld [vmem:[%s3156 + $0x1e8] sm:$0xff]
    %v3219 = vld [vmem:[%s3156 + $0x1f0] sm:$0xff]
    %v3220 = vld [vmem:[%s3156 + $0x1f8] sm:$0xff]
    %v3221 = vld [vmem:[%s3156 + $0x200] sm:$0xff]
    %v3222 = vld [vmem:[%s3156 + $0x208] sm:$0xff]
    %v3223 = vld [vmem:[%s3156 + $0x210] sm:$0xff]
    %v3224 = vld [vmem:[%s3156 + $0x218] sm:$0xff]
    %v3225 = vld [vmem:[%s3156 + $0x220] sm:$0xff]
    %v3226 = vld [vmem:[%s3156 + $0x228] sm:$0xff]
    %v3227 = vld [vmem:[%s3156 + $0x230] sm:$0xff]
    %v3228 = vld [vmem:[%s3156 + $0x238] sm:$0xff]
    %v3229 = vld [vmem:[%s3156 + $0x240] sm:$0xff]
    %v3230 = vld [vmem:[%s3156 + $0x248] sm:$0xff]
    %v3231 = vld [vmem:[%s3156 + $0x250] sm:$0xff]
    %v3232 = vld [vmem:[%s3156 + $0x258] sm:$0xff]
    %v3233 = vld [vmem:[%s3156 + $0x260] sm:$0xff]
    %v3234 = vld [vmem:[%s3156 + $0x268] sm:$0xff]
    %v3235 = vld [vmem:[%s3156 + $0x270] sm:$0xff]
    %v3236 = vld [vmem:[%s3156 + $0x278] sm:$0xff]
    %v3237 = vld [vmem:[%s3156 + $0x280] sm:$0xff]
    %v3238 = vld [vmem:[%s3156 + $0x288] sm:$0xff]
    %v3239 = vld [vmem:[%s3156 + $0x290] sm:$0xff]
    %v3240 = vld [vmem:[%s3156 + $0x298] sm:$0xff]
    %v3241 = vld [vmem:[%s3156 + $0x2a0] sm:$0xff]
    %v3242 = vld [vmem:[%s3156 + $0x2a8] sm:$0xff]
    %v3243 = vld [vmem:[%s3156 + $0x2b0] sm:$0xff]
    %v3244 = vld [vmem:[%s3156 + $0x2b8] sm:$0xff]
    %v3245 = vld [vmem:[%s3156 + $0x2c0] sm:$0xff]
    %v3246 = vld [vmem:[%s3156 + $0x2c8] sm:$0xff]
    %v3247 = vld [vmem:[%s3156 + $0x2d0] sm:$0xff]
    %v3248 = vld [vmem:[%s3156 + $0x2d8] sm:$0xff]
    %v3249 = vld [vmem:[%s3156 + $0x2e0] sm:$0xff]
    %v3250 = vld [vmem:[%s3156 + $0x2e8] sm:$0xff]
    %v3251 = vld [vmem:[%s3156 + $0x2f0] sm:$0xff]
    %v3252 = vld [vmem:[%s3156 + $0x2f8] sm:$0xff]
    %v3253 = vld [vmem:[%s3156 + $0x300] sm:$0xff]
    %v3254 = vld [vmem:[%s3156 + $0x308] sm:$0xff]
    %v3255 = vld [vmem:[%s3156 + $0x310] sm:$0xff]
    %v3256 = vld [vmem:[%s3156 + $0x318] sm:$0xff]
    %v3257 = vld [vmem:[%s3156 + $0x320] sm:$0xff]
    %v3258 = vld [vmem:[%s3156 + $0x328] sm:$0xff]
    %v3259 = vld [vmem:[%s3156 + $0x330] sm:$0xff]
    %v3260 = vld [vmem:[%s3156 + $0x338] sm:$0xff]
    %v3261 = vld [vmem:[%s3156 + $0x340] sm:$0xff]
    %v3262 = vld [vmem:[%s3156 + $0x348] sm:$0xff]
    %v3263 = vld [vmem:[%s3156 + $0x350] sm:$0xff]
    %v3264 = vld [vmem:[%s3156 + $0x358] sm:$0xff]
    %v3265 = vld [vmem:[%s3156 + $0x360] sm:$0xff]
    %v3266 = vld [vmem:[%s3156 + $0x368] sm:$0xff]
    %v3267 = vld [vmem:[%s3156 + $0x370] sm:$0xff]
    %v3268 = vld [vmem:[%s3156 + $0x378] sm:$0xff]
    %v3269 = vld [vmem:[%s3156 + $0x380] sm:$0xff]
    %v3270 = vld [vmem:[%s3156 + $0x388] sm:$0xff]
    %v3271 = vld [vmem:[%s3156 + $0x390] sm:$0xff]
    %v3272 = vld [vmem:[%s3156 + $0x398] sm:$0xff]
    %v3273 = vld [vmem:[%s3156 + $0x3a0] sm:$0xff]
    %v3274 = vld [vmem:[%s3156 + $0x3a8] sm:$0xff]
    %v3275 = vld [vmem:[%s3156 + $0x3b0] sm:$0xff]
    %v3276 = vld [vmem:[%s3156 + $0x3b8] sm:$0xff]
    %v3277 = vld [vmem:[%s3156 + $0x3c0] sm:$0xff]
    %v3278 = vld [vmem:[%s3156 + $0x3c8] sm:$0xff]
    %v3279 = vld [vmem:[%s3156 + $0x3d0] sm:$0xff]
    %v3280 = vld [vmem:[%s3156 + $0x3d8] sm:$0xff]
    %v3281 = vld [vmem:[%s3156 + $0x3e0] sm:$0xff]
    %v3282 = vld [vmem:[%s3156 + $0x3e8] sm:$0xff]
    %v3283 = vld [vmem:[%s3156 + $0x3f0] sm:$0x1]
    %v3284 = vld [vmem:[%s3156 + $0x3f8] sm:$0x1]
    %v3285 = vld [vmem:[%s3156 + $0x400] sm:$0x1]
    %v3286 = vld [vmem:[%s3156 + $0x408] sm:$0x1]
    %v3287 = vld [vmem:[%s3156 + $0x410] sm:$0x1]
    %v3288 = vld [vmem:[%s3156 + $0x418] sm:$0x1]
    %v3291 = vunpack.c.l.s4 1983009808
    %v3292 = vunpack.c.0.s8 %v3291
    %v3293 = vlaneseq
    %v3294 = vshrl.u32 %v3293, 7
    %v3295 = vsub.s32 %v3292, %v3294
    %v3296 = vrot.slane %v871, %v3295
    %v3297 = vcombine.high %v3296, %v3296
    %v3299 = vsel %vm1150, %v3297, 0
    %v3302 = vsel %vm1153, %v3283, 0
    %v3305 = vsel %vm1153, %v3284, 0
    %v3308 = vsel %vm1153, %v3285, 0
    %v3311 = vsel %vm1153, %v3286, 0
    %v3314 = vsel %vm1153, %v3287, 0
    %v3317 = vsel %vm1153, %v3288, 0
    %3319 = vmatprep.subr.mxu0 %v3158
    %3320 = vmatpush1.msra.mxu0 %v3157
    %3321 = vmatprep.subr.mxu0 %v3164
    %3322 = vmatpush1.msra.mxu0 %v3163
    %3323 = vmatprep.subr.mxu0 %v3170
    %3324 = vmatpush1.msra.mxu0 %v3169
    %3325 = vmatprep.subr.mxu0 %v3176
    %3326 = vmatpush1.msra.mxu0 %v3175
    %3327 = vmatprep.subr.mxu0 %v3182
    %3328 = vmatpush1.msra.mxu0 %v3181
    %3329 = vmatprep.subr.mxu0 %v3188
    %3330 = vmatpush1.msra.mxu0 %v3187
    %3331 = vmatprep.subr.mxu0 %v3194
    %3332 = vmatpush1.msra.mxu0 %v3193
    %3333 = vmatprep.subr.mxu0 %v3200
    %3334 = vmatpush1.msra.mxu0 %v3199
    %3335 = vmatprep.subr.mxu0 %v3206
    %3336 = vmatpush1.msra.mxu0 %v3205
    %3337 = vmatprep.subr.mxu0 %v3212
    %3338 = vmatpush1.msra.mxu0 %v3211
    %3339 = vmatprep.subr.mxu0 %v3218
    %3340 = vmatpush1.msra.mxu0 %v3217
    %3341 = vmatprep.subr.mxu0 %v3224
    %3342 = vmatpush1.msra.mxu0 %v3223
    %3343 = vmatprep.subr.mxu0 %v3230
    %3344 = vmatpush1.msra.mxu0 %v3229
    %3345 = vmatprep.subr.mxu0 %v3236
    %3346 = vmatpush1.msra.mxu0 %v3235
    %3347 = vmatprep.subr.mxu0 %v3242
    %3348 = vmatpush1.msra.mxu0 %v3241
    %3349 = vmatprep.subr.mxu0 %v3248
    %3350 = vmatpush1.msra.mxu0 %v3247
    %3351 = vmatprep.subr.mxu0 %v3254
    %3352 = vmatpush1.msra.mxu0 %v3253
    %3353 = vmatprep.subr.mxu0 %v3260
    %3354 = vmatpush1.msra.mxu0 %v3259
    %3355 = vmatprep.subr.mxu0 %v3266
    %3356 = vmatpush1.msra.mxu0 %v3265
    %3357 = vmatprep.subr.mxu0 %v3272
    %3358 = vmatpush1.msra.mxu0 %v3271
    %3359 = vmatprep.subr.mxu0 %v3278
    %3360 = vmatpush1.msra.mxu0 %v3277
    %3361 = vmatprep.subr.mxu0 %v3305
    %3362 = vmatpush1.msra.mxu0 %v3302
    %3363 = vmatprep.subr.mxu0 0.0
    %3364 = vmatpush1.msra.mxu0 0.0
    %3365 = vmatprep.subr.mxu0 0.0
    %3366 = vmatpush1.msra.mxu0 0.0
    %3367 = vmatprep.subr.mxu0 0.0
    %3368 = vmatpush1.msra.mxu0 0.0
    %3369 = vmatprep.subr.mxu0 0.0
    %3370 = vmatpush1.msra.mxu0 0.0
    %3371 = vmatprep.subr.mxu0 0.0
    %3372 = vmatpush1.msra.mxu0 0.0
    %3373 = vmatprep.subr.mxu0 0.0
    %3374 = vmatpush1.msra.mxu0 0.0
    %3375 = vmatprep.subr.mxu0 0.0
    %3376 = vmatpush1.msra.mxu0 0.0
    %3377 = vmatprep.subr.mxu0 0.0
    %3378 = vmatpush1.msra.mxu0 0.0
    %3379 = vmatprep.subr.mxu0 0.0
    %3380 = vmatpush1.msra.mxu0 0.0
    %3381 = vmatprep.subr.mxu0 0.0
    %3382 = vmatpush1.msra.mxu0 0.0
    %3383 = vmatprep.mubr.f32.mxu0 %v3299
    %3384 = vmatmul.mubr.f32.gmra.mrb[0].mxu0 %v3296
    %v3385 = vpop.f32.mrb[0].mxu0
    %v3386 = vadd.f32 0.0, %v3385
    %v3387 = vpop.f32.mrb[0].mxu0
    %v3388 = vadd.f32 0.0, %v3387
    %3389 = vdwg.mxu0
    %3390 = vmatprep.subr.mxu0 %v3160
    %3391 = vmatpush1.msra.mxu0 %v3159
    %3392 = vmatprep.subr.mxu0 %v3166
    %3393 = vmatpush1.msra.mxu0 %v3165
    %3394 = vmatprep.subr.mxu0 %v3172
    %3395 = vmatpush1.msra.mxu0 %v3171
    %3396 = vmatprep.subr.mxu0 %v3178
    %3397 = vmatpush1.msra.mxu0 %v3177
    %3398 = vmatprep.subr.mxu0 %v3184
    %3399 = vmatpush1.msra.mxu0 %v3183
    %3400 = vmatprep.subr.mxu0 %v3190
    %3401 = vmatpush1.msra.mxu0 %v3189
    %3402 = vmatprep.subr.mxu0 %v3196
    %3403 = vmatpush1.msra.mxu0 %v3195
    %3404 = vmatprep.subr.mxu0 %v3202
    %3405 = vmatpush1.msra.mxu0 %v3201
    %3406 = vmatprep.subr.mxu0 %v3208
    %3407 = vmatpush1.msra.mxu0 %v3207
    %3408 = vmatprep.subr.mxu0 %v3214
    %3409 = vmatpush1.msra.mxu0 %v3213
    %3410 = vmatprep.subr.mxu0 %v3220
    %3411 = vmatpush1.msra.mxu0 %v3219
    %3412 = vmatprep.subr.mxu0 %v3226
    %3413 = vmatpush1.msra.mxu0 %v3225
    %3414 = vmatprep.subr.mxu0 %v3232
    %3415 = vmatpush1.msra.mxu0 %v3231
    %3416 = vmatprep.subr.mxu0 %v3238
    %3417 = vmatpush1.msra.mxu0 %v3237
    %3418 = vmatprep.subr.mxu0 %v3244
    %3419 = vmatpush1.msra.mxu0 %v3243
    %3420 = vmatprep.subr.mxu0 %v3250
    %3421 = vmatpush1.msra.mxu0 %v3249
    %3422 = vmatprep.subr.mxu0 %v3256
    %3423 = vmatpush1.msra.mxu0 %v3255
    %3424 = vmatprep.subr.mxu0 %v3262
    %3425 = vmatpush1.msra.mxu0 %v3261
    %3426 = vmatprep.subr.mxu0 %v3268
    %3427 = vmatpush1.msra.mxu0 %v3267
    %3428 = vmatprep.subr.mxu0 %v3274
    %3429 = vmatpush1.msra.mxu0 %v3273
    %3430 = vmatprep.subr.mxu0 %v3280
    %3431 = vmatpush1.msra.mxu0 %v3279
    %3432 = vmatprep.subr.mxu0 %v3311
    %3433 = vmatpush1.msra.mxu0 %v3308
    %3434 = vmatprep.subr.mxu0 0.0
    %3435 = vmatpush1.msra.mxu0 0.0
    %3436 = vmatprep.subr.mxu0 0.0
    %3437 = vmatpush1.msra.mxu0 0.0
    %3438 = vmatprep.subr.mxu0 0.0
    %3439 = vmatpush1.msra.mxu0 0.0
    %3440 = vmatprep.subr.mxu0 0.0
    %3441 = vmatpush1.msra.mxu0 0.0
    %3442 = vmatprep.subr.mxu0 0.0
    %3443 = vmatpush1.msra.mxu0 0.0
    %3444 = vmatprep.subr.mxu0 0.0
    %3445 = vmatpush1.msra.mxu0 0.0
    %3446 = vmatprep.subr.mxu0 0.0
    %3447 = vmatpush1.msra.mxu0 0.0
    %3448 = vmatprep.subr.mxu0 0.0
    %3449 = vmatpush1.msra.mxu0 0.0
    %3450 = vmatprep.subr.mxu0 0.0
    %3451 = vmatpush1.msra.mxu0 0.0
    %3452 = vmatprep.subr.mxu0 0.0
    %3453 = vmatpush1.msra.mxu0 0.0
    %3454 = vmatprep.mubr.f32.mxu0 %v3299
    %3455 = vmatmul.mubr.f32.gmra.mrb[0].mxu0 %v3296
    %v3456 = vpop.f32.mrb[0].mxu0
    %v3457 = vadd.f32 0.0, %v3456
    %v3458 = vpop.f32.mrb[0].mxu0
    %v3459 = vadd.f32 0.0, %v3458
    %3460 = vdwg.mxu0
    %3461 = vmatprep.subr.mxu0 %v3162
    %3462 = vmatpush1.msra.mxu0 %v3161
    %3463 = vmatprep.subr.mxu0 %v3168
    %3464 = vmatpush1.msra.mxu0 %v3167
    %3465 = vmatprep.subr.mxu0 %v3174
    %3466 = vmatpush1.msra.mxu0 %v3173
    %3467 = vmatprep.subr.mxu0 %v3180
    %3468 = vmatpush1.msra.mxu0 %v3179
    %3469 = vmatprep.subr.mxu0 %v3186
    %3470 = vmatpush1.msra.mxu0 %v3185
    %3471 = vmatprep.subr.mxu0 %v3192
    %3472 = vmatpush1.msra.mxu0 %v3191
    %3473 = vmatprep.subr.mxu0 %v3198
    %3474 = vmatpush1.msra.mxu0 %v3197
    %3475 = vmatprep.subr.mxu0 %v3204
    %3476 = vmatpush1.msra.mxu0 %v3203
    %3477 = vmatprep.subr.mxu0 %v3210
    %3478 = vmatpush1.msra.mxu0 %v3209
    %3479 = vmatprep.subr.mxu0 %v3216
    %3480 = vmatpush1.msra.mxu0 %v3215
    %3481 = vmatprep.subr.mxu0 %v3222
    %3482 = vmatpush1.msra.mxu0 %v3221
    %3483 = vmatprep.subr.mxu0 %v3228
    %3484 = vmatpush1.msra.mxu0 %v3227
    %3485 = vmatprep.subr.mxu0 %v3234
    %3486 = vmatpush1.msra.mxu0 %v3233
    %3487 = vmatprep.subr.mxu0 %v3240
    %3488 = vmatpush1.msra.mxu0 %v3239
    %3489 = vmatprep.subr.mxu0 %v3246
    %3490 = vmatpush1.msra.mxu0 %v3245
    %3491 = vmatprep.subr.mxu0 %v3252
    %3492 = vmatpush1.msra.mxu0 %v3251
    %3493 = vmatprep.subr.mxu0 %v3258
    %3494 = vmatpush1.msra.mxu0 %v3257
    %3495 = vmatprep.subr.mxu0 %v3264
    %3496 = vmatpush1.msra.mxu0 %v3263
    %3497 = vmatprep.subr.mxu0 %v3270
    %3498 = vmatpush1.msra.mxu0 %v3269
    %3499 = vmatprep.subr.mxu0 %v3276
    %3500 = vmatpush1.msra.mxu0 %v3275
    %3501 = vmatprep.subr.mxu0 %v3282
    %3502 = vmatpush1.msra.mxu0 %v3281
    %3503 = vmatprep.subr.mxu0 %v3317
    %3504 = vmatpush1.msra.mxu0 %v3314
    %3505 = vmatprep.subr.mxu0 0.0
    %3506 = vmatpush1.msra.mxu0 0.0
    %3507 = vmatprep.subr.mxu0 0.0
    %3508 = vmatpush1.msra.mxu0 0.0
    %3509 = vmatprep.subr.mxu0 0.0
    %3510 = vmatpush1.msra.mxu0 0.0
    %3511 = vmatprep.subr.mxu0 0.0
    %3512 = vmatpush1.msra.mxu0 0.0
    %3513 = vmatprep.subr.mxu0 0.0
    %3514 = vmatpush1.msra.mxu0 0.0
    %3515 = vmatprep.subr.mxu0 0.0
    %3516 = vmatpush1.msra.mxu0 0.0
    %3517 = vmatprep.subr.mxu0 0.0
    %3518 = vmatpush1.msra.mxu0 0.0
    %3519 = vmatprep.subr.mxu0 0.0
    %3520 = vmatpush1.msra.mxu0 0.0
    %3521 = vmatprep.subr.mxu0 0.0
    %3522 = vmatpush1.msra.mxu0 0.0
    %3523 = vmatprep.subr.mxu0 0.0
    %3524 = vmatpush1.msra.mxu0 0.0
    %3525 = vmatprep.mubr.f32.mxu0 %v3299
    %3526 = vmatmul.mubr.f32.gmra.mrb[0].mxu0 %v3296
    %v3527 = vpop.f32.mrb[0].mxu0
    %v3528 = vadd.f32 0.0, %v3527
    %v3529 = vpop.f32.mrb[0].mxu0
    %v3530 = vadd.f32 0.0, %v3529
    %3531 = vdwg.mxu0
    %v3532 = vadd.f32 %v3150, %v3386
    %v3533 = vadd.f32 %v3151, %v3388
    %v3534 = vadd.f32 %v3152, %v3457
    %v3535 = vadd.f32 %v3153, %v3459
    %v3536 = vadd.f32 %v3154, %v3528
    %v3537 = vadd.f32 %v3155, %v3530
    %s3538 = scalar_lea.vmem %s3, 7392
    %v3539 = vld [vmem:[%s3538] sm:$0xff]
    %v3540 = vld [vmem:[%s3538 + $0x8] sm:$0xff]
    %v3541 = vld [vmem:[%s3538 + $0x10] sm:$0xff]
    %v3542 = vld [vmem:[%s3538 + $0x18] sm:$0xff]
    %v3543 = vld [vmem:[%s3538 + $0x20] sm:$0xff]
    %v3544 = vld [vmem:[%s3538 + $0x28] sm:$0xff]
    %v3545 = vld [vmem:[%s3538 + $0x30] sm:$0xff]
    %v3546 = vld [vmem:[%s3538 + $0x38] sm:$0xff]
    %v3547 = vld [vmem:[%s3538 + $0x40] sm:$0xff]
    %v3548 = vld [vmem:[%s3538 + $0x48] sm:$0xff]
    %v3549 = vld [vmem:[%s3538 + $0x50] sm:$0xff]
    %v3550 = vld [vmem:[%s3538 + $0x58] sm:$0xff]
    %v3551 = vld [vmem:[%s3538 + $0x60] sm:$0xff]
    %v3552 = vld [vmem:[%s3538 + $0x68] sm:$0xff]
    %v3553 = vld [vmem:[%s3538 + $0x70] sm:$0xff]
    %v3554 = vld [vmem:[%s3538 + $0x78] sm:$0xff]
    %v3555 = vld [vmem:[%s3538 + $0x80] sm:$0xff]
    %v3556 = vld [vmem:[%s3538 + $0x88] sm:$0xff]
    %v3557 = vld [vmem:[%s3538 + $0x90] sm:$0xff]
    %v3558 = vld [vmem:[%s3538 + $0x98] sm:$0xff]
    %v3559 = vld [vmem:[%s3538 + $0xa0] sm:$0xff]
    %v3560 = vld [vmem:[%s3538 + $0xa8] sm:$0xff]
    %v3561 = vld [vmem:[%s3538 + $0xb0] sm:$0xff]
    %v3562 = vld [vmem:[%s3538 + $0xb8] sm:$0xff]
    %v3563 = vld [vmem:[%s3538 + $0xc0] sm:$0xff]
    %v3564 = vld [vmem:[%s3538 + $0xc8] sm:$0xff]
    %v3565 = vld [vmem:[%s3538 + $0xd0] sm:$0xff]
    %v3566 = vld [vmem:[%s3538 + $0xd8] sm:$0xff]
    %v3567 = vld [vmem:[%s3538 + $0xe0] sm:$0xff]
    %v3568 = vld [vmem:[%s3538 + $0xe8] sm:$0xff]
    %v3569 = vld [vmem:[%s3538 + $0xf0] sm:$0xff]
    %v3570 = vld [vmem:[%s3538 + $0xf8] sm:$0xff]
    %v3571 = vld [vmem:[%s3538 + $0x100] sm:$0xff]
    %v3572 = vld [vmem:[%s3538 + $0x108] sm:$0xff]
    %v3573 = vld [vmem:[%s3538 + $0x110] sm:$0xff]
    %v3574 = vld [vmem:[%s3538 + $0x118] sm:$0xff]
    %v3575 = vld [vmem:[%s3538 + $0x120] sm:$0xff]
    %v3576 = vld [vmem:[%s3538 + $0x128] sm:$0xff]
    %v3577 = vld [vmem:[%s3538 + $0x130] sm:$0xff]
    %v3578 = vld [vmem:[%s3538 + $0x138] sm:$0xff]
    %v3579 = vld [vmem:[%s3538 + $0x140] sm:$0xff]
    %v3580 = vld [vmem:[%s3538 + $0x148] sm:$0xff]
    %v3581 = vld [vmem:[%s3538 + $0x150] sm:$0xff]
    %v3582 = vld [vmem:[%s3538 + $0x158] sm:$0xff]
    %v3583 = vld [vmem:[%s3538 + $0x160] sm:$0xff]
    %v3584 = vld [vmem:[%s3538 + $0x168] sm:$0xff]
    %v3585 = vld [vmem:[%s3538 + $0x170] sm:$0xff]
    %v3586 = vld [vmem:[%s3538 + $0x178] sm:$0xff]
    %v3587 = vld [vmem:[%s3538 + $0x180] sm:$0xff]
    %v3588 = vld [vmem:[%s3538 + $0x188] sm:$0xff]
    %v3589 = vld [vmem:[%s3538 + $0x190] sm:$0xff]
    %v3590 = vld [vmem:[%s3538 + $0x198] sm:$0xff]
    %v3591 = vld [vmem:[%s3538 + $0x1a0] sm:$0xff]
    %v3592 = vld [vmem:[%s3538 + $0x1a8] sm:$0xff]
    %v3593 = vld [vmem:[%s3538 + $0x1b0] sm:$0xff]
    %v3594 = vld [vmem:[%s3538 + $0x1b8] sm:$0xff]
    %v3595 = vld [vmem:[%s3538 + $0x1c0] sm:$0xff]
    %v3596 = vld [vmem:[%s3538 + $0x1c8] sm:$0xff]
    %v3597 = vld [vmem:[%s3538 + $0x1d0] sm:$0xff]
    %v3598 = vld [vmem:[%s3538 + $0x1d8] sm:$0xff]
    %v3599 = vld [vmem:[%s3538 + $0x1e0] sm:$0xff]
    %v3600 = vld [vmem:[%s3538 + $0x1e8] sm:$0xff]
    %v3601 = vld [vmem:[%s3538 + $0x1f0] sm:$0xff]
    %v3602 = vld [vmem:[%s3538 + $0x1f8] sm:$0xff]
    %v3603 = vld [vmem:[%s3538 + $0x200] sm:$0xff]
    %v3604 = vld [vmem:[%s3538 + $0x208] sm:$0xff]
    %v3605 = vld [vmem:[%s3538 + $0x210] sm:$0xff]
    %v3606 = vld [vmem:[%s3538 + $0x218] sm:$0xff]
    %v3607 = vld [vmem:[%s3538 + $0x220] sm:$0xff]
    %v3608 = vld [vmem:[%s3538 + $0x228] sm:$0xff]
    %v3609 = vld [vmem:[%s3538 + $0x230] sm:$0xff]
    %v3610 = vld [vmem:[%s3538 + $0x238] sm:$0xff]
    %v3611 = vld [vmem:[%s3538 + $0x240] sm:$0xff]
    %v3612 = vld [vmem:[%s3538 + $0x248] sm:$0xff]
    %v3613 = vld [vmem:[%s3538 + $0x250] sm:$0xff]
    %v3614 = vld [vmem:[%s3538 + $0x258] sm:$0xff]
    %v3615 = vld [vmem:[%s3538 + $0x260] sm:$0xff]
    %v3616 = vld [vmem:[%s3538 + $0x268] sm:$0xff]
    %v3617 = vld [vmem:[%s3538 + $0x270] sm:$0xff]
    %v3618 = vld [vmem:[%s3538 + $0x278] sm:$0xff]
    %v3619 = vld [vmem:[%s3538 + $0x280] sm:$0xff]
    %v3620 = vld [vmem:[%s3538 + $0x288] sm:$0xff]
    %v3621 = vld [vmem:[%s3538 + $0x290] sm:$0xff]
    %v3622 = vld [vmem:[%s3538 + $0x298] sm:$0xff]
    %v3623 = vld [vmem:[%s3538 + $0x2a0] sm:$0xff]
    %v3624 = vld [vmem:[%s3538 + $0x2a8] sm:$0xff]
    %v3625 = vld [vmem:[%s3538 + $0x2b0] sm:$0xff]
    %v3626 = vld [vmem:[%s3538 + $0x2b8] sm:$0xff]
    %v3627 = vld [vmem:[%s3538 + $0x2c0] sm:$0xff]
    %v3628 = vld [vmem:[%s3538 + $0x2c8] sm:$0xff]
    %v3629 = vld [vmem:[%s3538 + $0x2d0] sm:$0xff]
    %v3630 = vld [vmem:[%s3538 + $0x2d8] sm:$0xff]
    %v3631 = vld [vmem:[%s3538 + $0x2e0] sm:$0xff]
    %v3632 = vld [vmem:[%s3538 + $0x2e8] sm:$0xff]
    %v3633 = vld [vmem:[%s3538 + $0x2f0] sm:$0xff]
    %v3634 = vld [vmem:[%s3538 + $0x2f8] sm:$0xff]
    %v3635 = vld [vmem:[%s3538 + $0x300] sm:$0xff]
    %v3636 = vld [vmem:[%s3538 + $0x308] sm:$0xff]
    %v3637 = vld [vmem:[%s3538 + $0x310] sm:$0xff]
    %v3638 = vld [vmem:[%s3538 + $0x318] sm:$0xff]
    %v3639 = vld [vmem:[%s3538 + $0x320] sm:$0xff]
    %v3640 = vld [vmem:[%s3538 + $0x328] sm:$0xff]
    %v3641 = vld [vmem:[%s3538 + $0x330] sm:$0xff]
    %v3642 = vld [vmem:[%s3538 + $0x338] sm:$0xff]
    %v3643 = vld [vmem:[%s3538 + $0x340] sm:$0xff]
    %v3644 = vld [vmem:[%s3538 + $0x348] sm:$0xff]
    %v3645 = vld [vmem:[%s3538 + $0x350] sm:$0xff]
    %v3646 = vld [vmem:[%s3538 + $0x358] sm:$0xff]
    %v3647 = vld [vmem:[%s3538 + $0x360] sm:$0xff]
    %v3648 = vld [vmem:[%s3538 + $0x368] sm:$0xff]
    %v3649 = vld [vmem:[%s3538 + $0x370] sm:$0xff]
    %v3650 = vld [vmem:[%s3538 + $0x378] sm:$0xff]
    %v3651 = vld [vmem:[%s3538 + $0x380] sm:$0xff]
    %v3652 = vld [vmem:[%s3538 + $0x388] sm:$0xff]
    %v3653 = vld [vmem:[%s3538 + $0x390] sm:$0xff]
    %v3654 = vld [vmem:[%s3538 + $0x398] sm:$0xff]
    %v3655 = vld [vmem:[%s3538 + $0x3a0] sm:$0xff]
    %v3656 = vld [vmem:[%s3538 + $0x3a8] sm:$0xff]
    %v3657 = vld [vmem:[%s3538 + $0x3b0] sm:$0xff]
    %v3658 = vld [vmem:[%s3538 + $0x3b8] sm:$0xff]
    %v3659 = vld [vmem:[%s3538 + $0x3c0] sm:$0xff]
    %v3660 = vld [vmem:[%s3538 + $0x3c8] sm:$0xff]
    %v3661 = vld [vmem:[%s3538 + $0x3d0] sm:$0xff]
    %v3662 = vld [vmem:[%s3538 + $0x3d8] sm:$0xff]
    %v3663 = vld [vmem:[%s3538 + $0x3e0] sm:$0xff]
    %v3664 = vld [vmem:[%s3538 + $0x3e8] sm:$0xff]
    %v3665 = vld [vmem:[%s3538 + $0x3f0] sm:$0x1]
    %v3666 = vld [vmem:[%s3538 + $0x3f8] sm:$0x1]
    %v3667 = vld [vmem:[%s3538 + $0x400] sm:$0x1]
    %v3668 = vld [vmem:[%s3538 + $0x408] sm:$0x1]
    %v3669 = vld [vmem:[%s3538 + $0x410] sm:$0x1]
    %v3670 = vld [vmem:[%s3538 + $0x418] sm:$0x1]
    %v3673 = vunpack.c.l.s4 1983009808
    %v3674 = vunpack.c.0.s8 %v3673
    %v3675 = vlaneseq
    %v3676 = vshrl.u32 %v3675, 7
    %v3677 = vsub.s32 %v3674, %v3676
    %v3678 = vrot.slane %v874, %v3677
    %v3679 = vcombine.high %v3678, %v3678
    %v3681 = vsel %vm1150, %v3679, 0
    %v3684 = vsel %vm1153, %v3665, 0
    %v3687 = vsel %vm1153, %v3666, 0
    %v3690 = vsel %vm1153, %v3667, 0
    %v3693 = vsel %vm1153, %v3668, 0
    %v3696 = vsel %vm1153, %v3669, 0
    %v3699 = vsel %vm1153, %v3670, 0
    %3701 = vmatprep.subr.mxu0 %v3540
    %3702 = vmatpush1.msra.mxu0 %v3539
    %3703 = vmatprep.subr.mxu0 %v3546
    %3704 = vmatpush1.msra.mxu0 %v3545
    %3705 = vmatprep.subr.mxu0 %v3552
    %3706 = vmatpush1.msra.mxu0 %v3551
    %3707 = vmatprep.subr.mxu0 %v3558
    %3708 = vmatpush1.msra.mxu0 %v3557
    %3709 = vmatprep.subr.mxu0 %v3564
    %3710 = vmatpush1.msra.mxu0 %v3563
    %3711 = vmatprep.subr.mxu0 %v3570
    %3712 = vmatpush1.msra.mxu0 %v3569
    %3713 = vmatprep.subr.mxu0 %v3576
    %3714 = vmatpush1.msra.mxu0 %v3575
    %3715 = vmatprep.subr.mxu0 %v3582
    %3716 = vmatpush1.msra.mxu0 %v3581
    %3717 = vmatprep.subr.mxu0 %v3588
    %3718 = vmatpush1.msra.mxu0 %v3587
    %3719 = vmatprep.subr.mxu0 %v3594
    %3720 = vmatpush1.msra.mxu0 %v3593
    %3721 = vmatprep.subr.mxu0 %v3600
    %3722 = vmatpush1.msra.mxu0 %v3599
    %3723 = vmatprep.subr.mxu0 %v3606
    %3724 = vmatpush1.msra.mxu0 %v3605
    %3725 = vmatprep.subr.mxu0 %v3612
    %3726 = vmatpush1.msra.mxu0 %v3611
    %3727 = vmatprep.subr.mxu0 %v3618
    %3728 = vmatpush1.msra.mxu0 %v3617
    %3729 = vmatprep.subr.mxu0 %v3624
    %3730 = vmatpush1.msra.mxu0 %v3623
    %3731 = vmatprep.subr.mxu0 %v3630
    %3732 = vmatpush1.msra.mxu0 %v3629
    %3733 = vmatprep.subr.mxu0 %v3636
    %3734 = vmatpush1.msra.mxu0 %v3635
    %3735 = vmatprep.subr.mxu0 %v3642
    %3736 = vmatpush1.msra.mxu0 %v3641
    %3737 = vmatprep.subr.mxu0 %v3648
    %3738 = vmatpush1.msra.mxu0 %v3647
    %3739 = vmatprep.subr.mxu0 %v3654
    %3740 = vmatpush1.msra.mxu0 %v3653
    %3741 = vmatprep.subr.mxu0 %v3660
    %3742 = vmatpush1.msra.mxu0 %v3659
    %3743 = vmatprep.subr.mxu0 %v3687
    %3744 = vmatpush1.msra.mxu0 %v3684
    %3745 = vmatprep.subr.mxu0 0.0
    %3746 = vmatpush1.msra.mxu0 0.0
    %3747 = vmatprep.subr.mxu0 0.0
    %3748 = vmatpush1.msra.mxu0 0.0
    %3749 = vmatprep.subr.mxu0 0.0
    %3750 = vmatpush1.msra.mxu0 0.0
    %3751 = vmatprep.subr.mxu0 0.0
    %3752 = vmatpush1.msra.mxu0 0.0
    %3753 = vmatprep.subr.mxu0 0.0
    %3754 = vmatpush1.msra.mxu0 0.0
    %3755 = vmatprep.subr.mxu0 0.0
    %3756 = vmatpush1.msra.mxu0 0.0
    %3757 = vmatprep.subr.mxu0 0.0
    %3758 = vmatpush1.msra.mxu0 0.0
    %3759 = vmatprep.subr.mxu0 0.0
    %3760 = vmatpush1.msra.mxu0 0.0
    %3761 = vmatprep.subr.mxu0 0.0
    %3762 = vmatpush1.msra.mxu0 0.0
    %3763 = vmatprep.subr.mxu0 0.0
    %3764 = vmatpush1.msra.mxu0 0.0
    %3765 = vmatprep.mubr.f32.mxu0 %v3681
    %3766 = vmatmul.mubr.f32.gmra.mrb[0].mxu0 %v3678
    %v3767 = vpop.f32.mrb[0].mxu0
    %v3768 = vadd.f32 0.0, %v3767
    %v3769 = vpop.f32.mrb[0].mxu0
    %v3770 = vadd.f32 0.0, %v3769
    %3771 = vdwg.mxu0
    %3772 = vmatprep.subr.mxu0 %v3542
    %3773 = vmatpush1.msra.mxu0 %v3541
    %3774 = vmatprep.subr.mxu0 %v3548
    %3775 = vmatpush1.msra.mxu0 %v3547
    %3776 = vmatprep.subr.mxu0 %v3554
    %3777 = vmatpush1.msra.mxu0 %v3553
    %3778 = vmatprep.subr.mxu0 %v3560
    %3779 = vmatpush1.msra.mxu0 %v3559
    %3780 = vmatprep.subr.mxu0 %v3566
    %3781 = vmatpush1.msra.mxu0 %v3565
    %3782 = vmatprep.subr.mxu0 %v3572
    %3783 = vmatpush1.msra.mxu0 %v3571
    %3784 = vmatprep.subr.mxu0 %v3578
    %3785 = vmatpush1.msra.mxu0 %v3577
    %3786 = vmatprep.subr.mxu0 %v3584
    %3787 = vmatpush1.msra.mxu0 %v3583
    %3788 = vmatprep.subr.mxu0 %v3590
    %3789 = vmatpush1.msra.mxu0 %v3589
    %3790 = vmatprep.subr.mxu0 %v3596
    %3791 = vmatpush1.msra.mxu0 %v3595
    %3792 = vmatprep.subr.mxu0 %v3602
    %3793 = vmatpush1.msra.mxu0 %v3601
    %3794 = vmatprep.subr.mxu0 %v3608
    %3795 = vmatpush1.msra.mxu0 %v3607
    %3796 = vmatprep.subr.mxu0 %v3614
    %3797 = vmatpush1.msra.mxu0 %v3613
    %3798 = vmatprep.subr.mxu0 %v3620
    %3799 = vmatpush1.msra.mxu0 %v3619
    %3800 = vmatprep.subr.mxu0 %v3626
    %3801 = vmatpush1.msra.mxu0 %v3625
    %3802 = vmatprep.subr.mxu0 %v3632
    %3803 = vmatpush1.msra.mxu0 %v3631
    %3804 = vmatprep.subr.mxu0 %v3638
    %3805 = vmatpush1.msra.mxu0 %v3637
    %3806 = vmatprep.subr.mxu0 %v3644
    %3807 = vmatpush1.msra.mxu0 %v3643
    %3808 = vmatprep.subr.mxu0 %v3650
    %3809 = vmatpush1.msra.mxu0 %v3649
    %3810 = vmatprep.subr.mxu0 %v3656
    %3811 = vmatpush1.msra.mxu0 %v3655
    %3812 = vmatprep.subr.mxu0 %v3662
    %3813 = vmatpush1.msra.mxu0 %v3661
    %3814 = vmatprep.subr.mxu0 %v3693
    %3815 = vmatpush1.msra.mxu0 %v3690
    %3816 = vmatprep.subr.mxu0 0.0
    %3817 = vmatpush1.msra.mxu0 0.0
    %3818 = vmatprep.subr.mxu0 0.0
    %3819 = vmatpush1.msra.mxu0 0.0
    %3820 = vmatprep.subr.mxu0 0.0
    %3821 = vmatpush1.msra.mxu0 0.0
    %3822 = vmatprep.subr.mxu0 0.0
    %3823 = vmatpush1.msra.mxu0 0.0
    %3824 = vmatprep.subr.mxu0 0.0
    %3825 = vmatpush1.msra.mxu0 0.0
    %3826 = vmatprep.subr.mxu0 0.0
    %3827 = vmatpush1.msra.mxu0 0.0
    %3828 = vmatprep.subr.mxu0 0.0
    %3829 = vmatpush1.msra.mxu0 0.0
    %3830 = vmatprep.subr.mxu0 0.0
    %3831 = vmatpush1.msra.mxu0 0.0
    %3832 = vmatprep.subr.mxu0 0.0
    %3833 = vmatpush1.msra.mxu0 0.0
    %3834 = vmatprep.subr.mxu0 0.0
    %3835 = vmatpush1.msra.mxu0 0.0
    %3836 = vmatprep.mubr.f32.mxu0 %v3681
    %3837 = vmatmul.mubr.f32.gmra.mrb[0].mxu0 %v3678
    %v3838 = vpop.f32.mrb[0].mxu0
    %v3839 = vadd.f32 0.0, %v3838
    %v3840 = vpop.f32.mrb[0].mxu0
    %v3841 = vadd.f32 0.0, %v3840
    %3842 = vdwg.mxu0
    %3843 = vmatprep.subr.mxu0 %v3544
    %3844 = vmatpush1.msra.mxu0 %v3543
    %3845 = vmatprep.subr.mxu0 %v3550
    %3846 = vmatpush1.msra.mxu0 %v3549
    %3847 = vmatprep.subr.mxu0 %v3556
    %3848 = vmatpush1.msra.mxu0 %v3555
    %3849 = vmatprep.subr.mxu0 %v3562
    %3850 = vmatpush1.msra.mxu0 %v3561
    %3851 = vmatprep.subr.mxu0 %v3568
    %3852 = vmatpush1.msra.mxu0 %v3567
    %3853 = vmatprep.subr.mxu0 %v3574
    %3854 = vmatpush1.msra.mxu0 %v3573
    %3855 = vmatprep.subr.mxu0 %v3580
    %3856 = vmatpush1.msra.mxu0 %v3579
    %3857 = vmatprep.subr.mxu0 %v3586
    %3858 = vmatpush1.msra.mxu0 %v3585
    %3859 = vmatprep.subr.mxu0 %v3592
    %3860 = vmatpush1.msra.mxu0 %v3591
    %3861 = vmatprep.subr.mxu0 %v3598
    %3862 = vmatpush1.msra.mxu0 %v3597
    %3863 = vmatprep.subr.mxu0 %v3604
    %3864 = vmatpush1.msra.mxu0 %v3603
    %3865 = vmatprep.subr.mxu0 %v3610
    %3866 = vmatpush1.msra.mxu0 %v3609
    %3867 = vmatprep.subr.mxu0 %v3616
    %3868 = vmatpush1.msra.mxu0 %v3615
    %3869 = vmatprep.subr.mxu0 %v3622
    %3870 = vmatpush1.msra.mxu0 %v3621
    %3871 = vmatprep.subr.mxu0 %v3628
    %3872 = vmatpush1.msra.mxu0 %v3627
    %3873 = vmatprep.subr.mxu0 %v3634
    %3874 = vmatpush1.msra.mxu0 %v3633
    %3875 = vmatprep.subr.mxu0 %v3640
    %3876 = vmatpush1.msra.mxu0 %v3639
    %3877 = vmatprep.subr.mxu0 %v3646
    %3878 = vmatpush1.msra.mxu0 %v3645
    %3879 = vmatprep.subr.mxu0 %v3652
    %3880 = vmatpush1.msra.mxu0 %v3651
    %3881 = vmatprep.subr.mxu0 %v3658
    %3882 = vmatpush1.msra.mxu0 %v3657
    %3883 = vmatprep.subr.mxu0 %v3664
    %3884 = vmatpush1.msra.mxu0 %v3663
    %3885 = vmatprep.subr.mxu0 %v3699
    %3886 = vmatpush1.msra.mxu0 %v3696
    %3887 = vmatprep.subr.mxu0 0.0
    %3888 = vmatpush1.msra.mxu0 0.0
    %3889 = vmatprep.subr.mxu0 0.0
    %3890 = vmatpush1.msra.mxu0 0.0
    %3891 = vmatprep.subr.mxu0 0.0
    %3892 = vmatpush1.msra.mxu0 0.0
    %3893 = vmatprep.subr.mxu0 0.0
    %3894 = vmatpush1.msra.mxu0 0.0
    %3895 = vmatprep.subr.mxu0 0.0
    %3896 = vmatpush1.msra.mxu0 0.0
    %3897 = vmatprep.subr.mxu0 0.0
    %3898 = vmatpush1.msra.mxu0 0.0
    %3899 = vmatprep.subr.mxu0 0.0
    %3900 = vmatpush1.msra.mxu0 0.0
    %3901 = vmatprep.subr.mxu0 0.0
    %3902 = vmatpush1.msra.mxu0 0.0
    %3903 = vmatprep.subr.mxu0 0.0
    %3904 = vmatpush1.msra.mxu0 0.0
    %3905 = vmatprep.subr.mxu0 0.0
    %3906 = vmatpush1.msra.mxu0 0.0
    %3907 = vmatprep.mubr.f32.mxu0 %v3681
    %3908 = vmatmul.mubr.f32.gmra.mrb[0].mxu0 %v3678
    %v3909 = vpop.f32.mrb[0].mxu0
    %v3910 = vadd.f32 0.0, %v3909
    %v3911 = vpop.f32.mrb[0].mxu0
    %v3912 = vadd.f32 0.0, %v3911
    %3913 = vdwg.mxu0
    %v3914 = vadd.f32 %v3532, %v3768
    %v3915 = vadd.f32 %v3533, %v3770
    %v3916 = vadd.f32 %v3534, %v3839
    %v3917 = vadd.f32 %v3535, %v3841
    %v3918 = vadd.f32 %v3536, %v3910
    %v3919 = vadd.f32 %v3537, %v3912
    %v3920 = vld [vmem:[%s4] sm:$0x3f]
    %v3922 = vlaneseq
    %v3923 = vshrl.u32 %v3922, 7
    %v3924 = vsub.s32 0, %v3923
    %v3925 = vrot.slane %v3920, %v3924
    %v3926 = vlaneseq
    %v3927 = vshrl.u32 %v3926, 7
    %v3928 = vsub.s32 1, %v3927
    %v3929 = vrot.slane %v3920, %v3928
    %v3930 = vlaneseq
    %v3931 = vshrl.u32 %v3930, 7
    %v3932 = vsub.s32 2, %v3931
    %v3933 = vrot.slane %v3920, %v3932
    %v3934 = vlaneseq
    %v3935 = vshrl.u32 %v3934, 7
    %v3936 = vsub.s32 3, %v3935
    %v3937 = vrot.slane %v3920, %v3936
    %v3938 = vlaneseq
    %v3939 = vshrl.u32 %v3938, 7
    %v3940 = vsub.s32 4, %v3939
    %v3941 = vrot.slane %v3920, %v3940
    %v3942 = vlaneseq
    %v3943 = vshrl.u32 %v3942, 7
    %v3944 = vsub.s32 5, %v3943
    %v3945 = vrot.slane %v3920, %v3944
    %v3952 = vadd.f32 %v3914, %v3925
    %v3953 = vadd.f32 %v3915, %v3929
    %v3954 = vadd.f32 %v3916, %v3933
    %v3955 = vadd.f32 %v3917, %v3937
    %v3956 = vadd.f32 %v3918, %v3941
    %v3957 = vadd.f32 %v3919, %v3945
    %v3958 = vmax.f32 %v3952, 0.0
    %v3959 = vmax.f32 %v3953, 0.0
    %v3960 = vmax.f32 %v3954, 0.0
    %v3961 = vmax.f32 %v3955, 0.0
    %v3962 = vmax.f32 %v3956, 0.0
    %v3963 = vmax.f32 %v3957, 0.0
    %v3964 = vld [vmem:[%s5] sm:$0xff]
    %v3965 = vld [vmem:[%s5 + $0x8] sm:$0xff]
    %v3966 = vld [vmem:[%s5 + $0x10] sm:$0xff]
    %v3967 = vld [vmem:[%s5 + $0x18] sm:$0xff]
    %v3968 = vld [vmem:[%s5 + $0x20] sm:$0xff]
    %v3969 = vld [vmem:[%s5 + $0x28] sm:$0xff]
    %v3970 = vld [vmem:[%s5 + $0x30] sm:$0xff]
    %v3971 = vld [vmem:[%s5 + $0x38] sm:$0xff]
    %v3972 = vld [vmem:[%s5 + $0x40] sm:$0xff]
    %v3973 = vld [vmem:[%s5 + $0x48] sm:$0xff]
    %v3974 = vld [vmem:[%s5 + $0x50] sm:$0xff]
    %v3975 = vld [vmem:[%s5 + $0x58] sm:$0xff]
    %v3976 = vld [vmem:[%s5 + $0x60] sm:$0xff]
    %v3977 = vld [vmem:[%s5 + $0x68] sm:$0xff]
    %v3978 = vld [vmem:[%s5 + $0x70] sm:$0xff]
    %v3979 = vld [vmem:[%s5 + $0x78] sm:$0xff]
    %v3980 = vld [vmem:[%s5 + $0x80] sm:$0xff]
    %v3981 = vld [vmem:[%s5 + $0x88] sm:$0xff]
    %v3982 = vld [vmem:[%s5 + $0x90] sm:$0xff]
    %v3983 = vld [vmem:[%s5 + $0x98] sm:$0xff]
    %v3984 = vld [vmem:[%s5 + $0xa0] sm:$0xff]
    %v3985 = vld [vmem:[%s5 + $0xa8] sm:$0xff]
    %v3986 = vld [vmem:[%s5 + $0xb0] sm:$0xff]
    %v3987 = vld [vmem:[%s5 + $0xb8] sm:$0xff]
    %v3988 = vld [vmem:[%s5 + $0xc0] sm:$0xff]
    %v3989 = vld [vmem:[%s5 + $0xc8] sm:$0xff]
    %v3990 = vld [vmem:[%s5 + $0xd0] sm:$0xff]
    %v3991 = vld [vmem:[%s5 + $0xd8] sm:$0xff]
    %v3992 = vld [vmem:[%s5 + $0xe0] sm:$0xff]
    %v3993 = vld [vmem:[%s5 + $0xe8] sm:$0xff]
    %v3994 = vld [vmem:[%s5 + $0xf0] sm:$0xff]
    %v3995 = vld [vmem:[%s5 + $0xf8] sm:$0xff]
    %v3996 = vld [vmem:[%s5 + $0x100] sm:$0xff]
    %v3997 = vld [vmem:[%s5 + $0x108] sm:$0xff]
    %v3998 = vld [vmem:[%s5 + $0x110] sm:$0xff]
    %v3999 = vld [vmem:[%s5 + $0x118] sm:$0xff]
    %v4000 = vld [vmem:[%s5 + $0x120] sm:$0xff]
    %v4001 = vld [vmem:[%s5 + $0x128] sm:$0xff]
    %v4002 = vld [vmem:[%s5 + $0x130] sm:$0xff]
    %v4003 = vld [vmem:[%s5 + $0x138] sm:$0xff]
    %v4004 = vld [vmem:[%s5 + $0x140] sm:$0xff]
    %v4005 = vld [vmem:[%s5 + $0x148] sm:$0xff]
    %v4006 = vld [vmem:[%s5 + $0x150] sm:$0xff]
    %v4007 = vld [vmem:[%s5 + $0x158] sm:$0xff]
    %v4008 = vld [vmem:[%s5 + $0x160] sm:$0xff]
    %v4009 = vld [vmem:[%s5 + $0x168] sm:$0xff]
    %v4010 = vld [vmem:[%s5 + $0x170] sm:$0xff]
    %v4011 = vld [vmem:[%s5 + $0x178] sm:$0xff]
    %v4012 = vld [vmem:[%s5 + $0x180] sm:$0xff]
    %v4013 = vld [vmem:[%s5 + $0x188] sm:$0xff]
    %v4014 = vld [vmem:[%s5 + $0x190] sm:$0xff]
    %v4015 = vld [vmem:[%s5 + $0x198] sm:$0xff]
    %v4016 = vld [vmem:[%s5 + $0x1a0] sm:$0xff]
    %v4017 = vld [vmem:[%s5 + $0x1a8] sm:$0xff]
    %v4018 = vld [vmem:[%s5 + $0x1b0] sm:$0xff]
    %v4019 = vld [vmem:[%s5 + $0x1b8] sm:$0xff]
    %v4020 = vld [vmem:[%s5 + $0x1c0] sm:$0xff]
    %v4021 = vld [vmem:[%s5 + $0x1c8] sm:$0xff]
    %v4022 = vld [vmem:[%s5 + $0x1d0] sm:$0xff]
    %v4023 = vld [vmem:[%s5 + $0x1d8] sm:$0xff]
    %v4024 = vld [vmem:[%s5 + $0x1e0] sm:$0xff]
    %v4025 = vld [vmem:[%s5 + $0x1e8] sm:$0xff]
    %v4026 = vld [vmem:[%s5 + $0x1f0] sm:$0xff]
    %v4027 = vld [vmem:[%s5 + $0x1f8] sm:$0xff]
    %v4028 = vld [vmem:[%s5 + $0x200] sm:$0xff]
    %v4029 = vld [vmem:[%s5 + $0x208] sm:$0xff]
    %v4030 = vld [vmem:[%s5 + $0x210] sm:$0xff]
    %v4031 = vld [vmem:[%s5 + $0x218] sm:$0xff]
    %v4032 = vld [vmem:[%s5 + $0x220] sm:$0xff]
    %v4033 = vld [vmem:[%s5 + $0x228] sm:$0xff]
    %v4034 = vld [vmem:[%s5 + $0x230] sm:$0xff]
    %v4035 = vld [vmem:[%s5 + $0x238] sm:$0xff]
    %v4036 = vld [vmem:[%s5 + $0x240] sm:$0xff]
    %v4037 = vld [vmem:[%s5 + $0x248] sm:$0xff]
    %v4038 = vld [vmem:[%s5 + $0x250] sm:$0xff]
    %v4039 = vld [vmem:[%s5 + $0x258] sm:$0xff]
    %v4040 = vld [vmem:[%s5 + $0x260] sm:$0xff]
    %v4041 = vld [vmem:[%s5 + $0x268] sm:$0xff]
    %v4042 = vld [vmem:[%s5 + $0x270] sm:$0xff]
    %v4043 = vld [vmem:[%s5 + $0x278] sm:$0xff]
    %v4044 = vld [vmem:[%s5 + $0x280] sm:$0xff]
    %v4045 = vld [vmem:[%s5 + $0x288] sm:$0xff]
    %v4046 = vld [vmem:[%s5 + $0x290] sm:$0xff]
    %v4047 = vld [vmem:[%s5 + $0x298] sm:$0xff]
    %v4048 = vld [vmem:[%s5 + $0x2a0] sm:$0xf]
    %v4049 = vld [vmem:[%s6] sm:$0x1]
    %v4051 = vlaneseq
    %v4052 = vshrl.u32 %v4051, 7
    %v4053 = vsub.s32 0, %v4052
    %v4054 = vrot.slane %v4049, %v4053
    %vm4056 = vcmask 293888
    %v4058 = vsel %vm4056, %v3963, 0
    %vm4060 = vcmask 1043456
    %v4062 = vsel %vm4060, %v4048, 0
    %4064 = vmatprep.subr.mxu0 0.0
    %4065 = vmatpush1.msra.mxu0 %v3964
    %4066 = vmatprep.subr.mxu0 0.0
    %4067 = vmatpush1.msra.mxu0 %v3965
    %4068 = vmatprep.subr.mxu0 0.0
    %4069 = vmatpush1.msra.mxu0 %v3966
    %4070 = vmatprep.subr.mxu0 0.0
    %4071 = vmatpush1.msra.mxu0 %v3967
    %4072 = vmatprep.subr.mxu0 0.0
    %4073 = vmatpush1.msra.mxu0 %v3968
    %4074 = vmatprep.subr.mxu0 0.0
    %4075 = vmatpush1.msra.mxu0 %v3969
    %4076 = vmatprep.subr.mxu0 0.0
    %4077 = vmatpush1.msra.mxu0 %v3970
    %4078 = vmatprep.subr.mxu0 0.0
    %4079 = vmatpush1.msra.mxu0 %v3971
    %4080 = vmatprep.subr.mxu0 0.0
    %4081 = vmatpush1.msra.mxu0 %v3972
    %4082 = vmatprep.subr.mxu0 0.0
    %4083 = vmatpush1.msra.mxu0 %v3973
    %4084 = vmatprep.subr.mxu0 0.0
    %4085 = vmatpush1.msra.mxu0 %v3974
    %4086 = vmatprep.subr.mxu0 0.0
    %4087 = vmatpush1.msra.mxu0 %v3975
    %4088 = vmatprep.subr.mxu0 0.0
    %4089 = vmatpush1.msra.mxu0 %v3976
    %4090 = vmatprep.subr.mxu0 0.0
    %4091 = vmatpush1.msra.mxu0 %v3977
    %4092 = vmatprep.subr.mxu0 0.0
    %4093 = vmatpush1.msra.mxu0 %v3978
    %4094 = vmatprep.subr.mxu0 0.0
    %4095 = vmatpush1.msra.mxu0 %v3979
    %4096 = vmatprep.subr.mxu0 0.0
    %4097 = vmatpush1.msra.mxu0 %v3980
    %4098 = vmatprep.subr.mxu0 0.0
    %4099 = vmatpush1.msra.mxu0 %v3981
    %4100 = vmatprep.subr.mxu0 0.0
    %4101 = vmatpush1.msra.mxu0 %v3982
    %4102 = vmatprep.subr.mxu0 0.0
    %4103 = vmatpush1.msra.mxu0 %v3983
    %4104 = vmatprep.subr.mxu0 0.0
    %4105 = vmatpush1.msra.mxu0 %v3984
    %4106 = vmatprep.subr.mxu0 0.0
    %4107 = vmatpush1.msra.mxu0 %v3985
    %4108 = vmatprep.subr.mxu0 0.0
    %4109 = vmatpush1.msra.mxu0 %v3986
    %4110 = vmatprep.subr.mxu0 0.0
    %4111 = vmatpush1.msra.mxu0 %v3987
    %4112 = vmatprep.subr.mxu0 0.0
    %4113 = vmatpush1.msra.mxu0 %v3988
    %4114 = vmatprep.subr.mxu0 0.0
    %4115 = vmatpush1.msra.mxu0 %v3989
    %4116 = vmatprep.subr.mxu0 0.0
    %4117 = vmatpush1.msra.mxu0 %v3990
    %4118 = vmatprep.subr.mxu0 0.0
    %4119 = vmatpush1.msra.mxu0 %v3991
    %4120 = vmatprep.subr.mxu0 0.0
    %4121 = vmatpush1.msra.mxu0 %v3992
    %4122 = vmatprep.subr.mxu0 0.0
    %4123 = vmatpush1.msra.mxu0 %v3993
    %4124 = vmatprep.subr.mxu0 0.0
    %4125 = vmatpush1.msra.mxu0 %v3994
    %4126 = vmatprep.subr.mxu0 0.0
    %4127 = vmatpush1.msra.mxu0 %v3995
    %4128 = vmatprep.mubr.f32.mxu0 %v3959
    %4129 = vmatmul.mubr.f32.gmra.mrb[0].mxu0 %v3958
    %v4130 = vpop.f32.mrb[0].mxu0
    %v4131 = vadd.f32 %v4054, %v4130
    %v4132 = vpop.f32.mrb[0].mxu0
    %4133 = vdwg.mxu0
    %4134 = vmatprep.subr.mxu0 0.0
    %4135 = vmatpush1.msra.mxu0 %v3996
    %4136 = vmatprep.subr.mxu0 0.0
    %4137 = vmatpush1.msra.mxu0 %v3997
    %4138 = vmatprep.subr.mxu0 0.0
    %4139 = vmatpush1.msra.mxu0 %v3998
    %4140 = vmatprep.subr.mxu0 0.0
    %4141 = vmatpush1.msra.mxu0 %v3999
    %4142 = vmatprep.subr.mxu0 0.0
    %4143 = vmatpush1.msra.mxu0 %v4000
    %4144 = vmatprep.subr.mxu0 0.0
    %4145 = vmatpush1.msra.mxu0 %v4001
    %4146 = vmatprep.subr.mxu0 0.0
    %4147 = vmatpush1.msra.mxu0 %v4002
    %4148 = vmatprep.subr.mxu0 0.0
    %4149 = vmatpush1.msra.mxu0 %v4003
    %4150 = vmatprep.subr.mxu0 0.0
    %4151 = vmatpush1.msra.mxu0 %v4004
    %4152 = vmatprep.subr.mxu0 0.0
    %4153 = vmatpush1.msra.mxu0 %v4005
    %4154 = vmatprep.subr.mxu0 0.0
    %4155 = vmatpush1.msra.mxu0 %v4006
    %4156 = vmatprep.subr.mxu0 0.0
    %4157 = vmatpush1.msra.mxu0 %v4007
    %4158 = vmatprep.subr.mxu0 0.0
    %4159 = vmatpush1.msra.mxu0 %v4008
    %4160 = vmatprep.subr.mxu0 0.0
    %4161 = vmatpush1.msra.mxu0 %v4009
    %4162 = vmatprep.subr.mxu0 0.0
    %4163 = vmatpush1.msra.mxu0 %v4010
    %4164 = vmatprep.subr.mxu0 0.0
    %4165 = vmatpush1.msra.mxu0 %v4011
    %4166 = vmatprep.subr.mxu0 0.0
    %4167 = vmatpush1.msra.mxu0 %v4012
    %4168 = vmatprep.subr.mxu0 0.0
    %4169 = vmatpush1.msra.mxu0 %v4013
    %4170 = vmatprep.subr.mxu0 0.0
    %4171 = vmatpush1.msra.mxu0 %v4014
    %4172 = vmatprep.subr.mxu0 0.0
    %4173 = vmatpush1.msra.mxu0 %v4015
    %4174 = vmatprep.subr.mxu0 0.0
    %4175 = vmatpush1.msra.mxu0 %v4016
    %4176 = vmatprep.subr.mxu0 0.0
    %4177 = vmatpush1.msra.mxu0 %v4017
    %4178 = vmatprep.subr.mxu0 0.0
    %4179 = vmatpush1.msra.mxu0 %v4018
    %4180 = vmatprep.subr.mxu0 0.0
    %4181 = vmatpush1.msra.mxu0 %v4019
    %4182 = vmatprep.subr.mxu0 0.0
    %4183 = vmatpush1.msra.mxu0 %v4020
    %4184 = vmatprep.subr.mxu0 0.0
    %4185 = vmatpush1.msra.mxu0 %v4021
    %4186 = vmatprep.subr.mxu0 0.0
    %4187 = vmatpush1.msra.mxu0 %v4022
    %4188 = vmatprep.subr.mxu0 0.0
    %4189 = vmatpush1.msra.mxu0 %v4023
    %4190 = vmatprep.subr.mxu0 0.0
    %4191 = vmatpush1.msra.mxu0 %v4024
    %4192 = vmatprep.subr.mxu0 0.0
    %4193 = vmatpush1.msra.mxu0 %v4025
    %4194 = vmatprep.subr.mxu0 0.0
    %4195 = vmatpush1.msra.mxu0 %v4026
    %4196 = vmatprep.subr.mxu0 0.0
    %4197 = vmatpush1.msra.mxu0 %v4027
    %4198 = vmatprep.mubr.f32.mxu0 %v3961
    %4199 = vmatmul.mubr.f32.gmra.mrb[0].mxu0 %v3960
    %v4200 = vpop.f32.mrb[0].mxu0
    %v4201 = vadd.f32 %v4131, %v4200
    %v4202 = vpop.f32.mrb[0].mxu0
    %4203 = vdwg.mxu0
    %4204 = vmatprep.subr.mxu0 0.0
    %4205 = vmatpush1.msra.mxu0 %v4028
    %4206 = vmatprep.subr.mxu0 0.0
    %4207 = vmatpush1.msra.mxu0 %v4029
    %4208 = vmatprep.subr.mxu0 0.0
    %4209 = vmatpush1.msra.mxu0 %v4030
    %4210 = vmatprep.subr.mxu0 0.0
    %4211 = vmatpush1.msra.mxu0 %v4031
    %4212 = vmatprep.subr.mxu0 0.0
    %4213 = vmatpush1.msra.mxu0 %v4032
    %4214 = vmatprep.subr.mxu0 0.0
    %4215 = vmatpush1.msra.mxu0 %v4033
    %4216 = vmatprep.subr.mxu0 0.0
    %4217 = vmatpush1.msra.mxu0 %v4034
    %4218 = vmatprep.subr.mxu0 0.0
    %4219 = vmatpush1.msra.mxu0 %v4035
    %4220 = vmatprep.subr.mxu0 0.0
    %4221 = vmatpush1.msra.mxu0 %v4036
    %4222 = vmatprep.subr.mxu0 0.0
    %4223 = vmatpush1.msra.mxu0 %v4037
    %4224 = vmatprep.subr.mxu0 0.0
    %4225 = vmatpush1.msra.mxu0 %v4038
    %4226 = vmatprep.subr.mxu0 0.0
    %4227 = vmatpush1.msra.mxu0 %v4039
    %4228 = vmatprep.subr.mxu0 0.0
    %4229 = vmatpush1.msra.mxu0 %v4040
    %4230 = vmatprep.subr.mxu0 0.0
    %4231 = vmatpush1.msra.mxu0 %v4041
    %4232 = vmatprep.subr.mxu0 0.0
    %4233 = vmatpush1.msra.mxu0 %v4042
    %4234 = vmatprep.subr.mxu0 0.0
    %4235 = vmatpush1.msra.mxu0 %v4043
    %4236 = vmatprep.subr.mxu0 0.0
    %4237 = vmatpush1.msra.mxu0 %v4044
    %4238 = vmatprep.subr.mxu0 0.0
    %4239 = vmatpush1.msra.mxu0 %v4045
    %4240 = vmatprep.subr.mxu0 0.0
    %4241 = vmatpush1.msra.mxu0 %v4046
    %4242 = vmatprep.subr.mxu0 0.0
    %4243 = vmatpush1.msra.mxu0 %v4047
    %4244 = vmatprep.subr.mxu0 0.0
    %4245 = vmatpush1.msra.mxu0 %v4062
    %4246 = vmatprep.subr.mxu0 0.0
    %4247 = vmatpush1.msra.mxu0 0.0
    %4248 = vmatprep.subr.mxu0 0.0
    %4249 = vmatpush1.msra.mxu0 0.0
    %4250 = vmatprep.subr.mxu0 0.0
    %4251 = vmatpush1.msra.mxu0 0.0
    %4252 = vmatprep.subr.mxu0 0.0
    %4253 = vmatpush1.msra.mxu0 0.0
    %4254 = vmatprep.subr.mxu0 0.0
    %4255 = vmatpush1.msra.mxu0 0.0
    %4256 = vmatprep.subr.mxu0 0.0
    %4257 = vmatpush1.msra.mxu0 0.0
    %4258 = vmatprep.subr.mxu0 0.0
    %4259 = vmatpush1.msra.mxu0 0.0
    %4260 = vmatprep.subr.mxu0 0.0
    %4261 = vmatpush1.msra.mxu0 0.0
    %4262 = vmatprep.subr.mxu0 0.0
    %4263 = vmatpush1.msra.mxu0 0.0
    %4264 = vmatprep.subr.mxu0 0.0
    %4265 = vmatpush1.msra.mxu0 0.0
    %4266 = vmatprep.subr.mxu0 0.0
    %4267 = vmatpush1.msra.mxu0 0.0
    %4268 = vmatprep.mubr.f32.mxu0 %v4058
    %4269 = vmatmul.mubr.f32.gmra.mrb[0].mxu0 %v3962
    %v4270 = vpop.f32.mrb[0].mxu0
    %v4271 = vadd.f32 %v4201, %v4270
    %v4272 = vpop.f32.mrb[0].mxu0
    %4273 = vdwg.mxu0
    %v4274 = vmax.f32 %v4271, 0.0
    %v4275 = vld [vmem:[%s7] sm:$0xff]
    %v4276 = vld [vmem:[%s7 + $0x8] sm:$0xff]
    %v4277 = vld [vmem:[%s7 + $0x10] sm:$0xff]
    %v4278 = vld [vmem:[%s7 + $0x18] sm:$0xff]
    %v4279 = vld [vmem:[%s7 + $0x20] sm:$0xff]
    %v4280 = vld [vmem:[%s7 + $0x28] sm:$0xff]
    %v4281 = vld [vmem:[%s7 + $0x30] sm:$0xff]
    %v4282 = vld [vmem:[%s7 + $0x38] sm:$0xff]
    %v4283 = vld [vmem:[%s7 + $0x40] sm:$0xff]
    %v4284 = vld [vmem:[%s7 + $0x48] sm:$0xff]
    %v4285 = vld [vmem:[%s7 + $0x50] sm:$0xf]
    %v4286 = vld [vmem:[%s8] sm:$0x1]
    %v4288 = vlaneseq
    %v4289 = vshrl.u32 %v4288, 7
    %v4290 = vsub.s32 0, %v4289
    %v4291 = vrot.slane %v4286, %v4290
    %vm4293 = vcmask 687104
    %v4295 = vsel %vm4293, %v4274, 0
    %v4298 = vsel %vm4060, %v4285, 0
    %4300 = vmatprep.subr.mxu0 0.0
    %4301 = vmatpush1.msra.mxu0 %v4275
    %4302 = vmatprep.subr.mxu0 0.0
    %4303 = vmatpush1.msra.mxu0 %v4276
    %4304 = vmatprep.subr.mxu0 0.0
    %4305 = vmatpush1.msra.mxu0 %v4277
    %4306 = vmatprep.subr.mxu0 0.0
    %4307 = vmatpush1.msra.mxu0 %v4278
    %4308 = vmatprep.subr.mxu0 0.0
    %4309 = vmatpush1.msra.mxu0 %v4279
    %4310 = vmatprep.subr.mxu0 0.0
    %4311 = vmatpush1.msra.mxu0 %v4280
    %4312 = vmatprep.subr.mxu0 0.0
    %4313 = vmatpush1.msra.mxu0 %v4281
    %4314 = vmatprep.subr.mxu0 0.0
    %4315 = vmatpush1.msra.mxu0 %v4282
    %4316 = vmatprep.subr.mxu0 0.0
    %4317 = vmatpush1.msra.mxu0 %v4283
    %4318 = vmatprep.subr.mxu0 0.0
    %4319 = vmatpush1.msra.mxu0 %v4284
    %4320 = vmatprep.subr.mxu0 0.0
    %4321 = vmatpush1.msra.mxu0 %v4298
    %4322 = vmatprep.subr.mxu0 0.0
    %4323 = vmatpush1.msra.mxu0 0.0
    %4324 = vmatprep.subr.mxu0 0.0
    %4325 = vmatpush1.msra.mxu0 0.0
    %4326 = vmatprep.subr.mxu0 0.0
    %4327 = vmatpush1.msra.mxu0 0.0
    %4328 = vmatprep.subr.mxu0 0.0
    %4329 = vmatpush1.msra.mxu0 0.0
    %4330 = vmatprep.subr.mxu0 0.0
    %4331 = vmatpush1.msra.mxu0 0.0
    %4332 = vmatprep.subr.mxu0 0.0
    %4333 = vmatpush1.msra.mxu0 0.0
    %4334 = vmatprep.subr.mxu0 0.0
    %4335 = vmatpush1.msra.mxu0 0.0
    %4336 = vmatprep.subr.mxu0 0.0
    %4337 = vmatpush1.msra.mxu0 0.0
    %4338 = vmatprep.subr.mxu0 0.0
    %4339 = vmatpush1.msra.mxu0 0.0
    %4340 = vmatprep.subr.mxu0 0.0
    %4341 = vmatpush1.msra.mxu0 0.0
    %4342 = vmatprep.subr.mxu0 0.0
    %4343 = vmatpush1.msra.mxu0 0.0
    %4344 = vmatprep.subr.mxu0 0.0
    %4345 = vmatpush1.msra.mxu0 0.0
    %4346 = vmatprep.subr.mxu0 0.0
    %4347 = vmatpush1.msra.mxu0 0.0
    %4348 = vmatprep.subr.mxu0 0.0
    %4349 = vmatpush1.msra.mxu0 0.0
    %4350 = vmatprep.subr.mxu0 0.0
    %4351 = vmatpush1.msra.mxu0 0.0
    %4352 = vmatprep.subr.mxu0 0.0
    %4353 = vmatpush1.msra.mxu0 0.0
    %4354 = vmatprep.subr.mxu0 0.0
    %4355 = vmatpush1.msra.mxu0 0.0
    %4356 = vmatprep.subr.mxu0 0.0
    %4357 = vmatpush1.msra.mxu0 0.0
    %4358 = vmatprep.subr.mxu0 0.0
    %4359 = vmatpush1.msra.mxu0 0.0
    %4360 = vmatprep.subr.mxu0 0.0
    %4361 = vmatpush1.msra.mxu0 0.0
    %4362 = vmatprep.subr.mxu0 0.0
    %4363 = vmatpush1.msra.mxu0 0.0
    %4364 = vmatprep.mubr.f32.mxu0 0.0
    %4365 = vmatmul.mubr.f32.gmra.mrb[0].mxu0 %v4295
    %v4366 = vpop.f32.mrb[0].mxu0
    %v4367 = vadd.f32 %v4291, %v4366
    %v4368 = vpop.f32.mrb[0].mxu0
    %4369 = vdwg.mxu0
    %vm4370 = vcmask 74752
    %4371 = vst.msk [vmem:[#allocation7] sm:$0x3] %vm4370, %v4367
    // Predicated region
    $region46: #{forward.1} parent=1 // pred_check
      _
    $region47: #{forward.1} parent=1 // pred_check_branch
      %4373 = sbr.rel (0) target = $region49
    $region48: #{forward.1} parent=1 // pred_region
      %s4375 = ssub.s32 32, 32
      %4376 = vsyncadd [#allocation3], %s4375
      %s4378 = sshll.u32 [#allocation7], 4
      %s4379 = int_to_ptr.vmem [resolvable:$true] %s4378
      %4381 = dma.vmem_to_hbm [thread:$0]  %s4379, 32, %s9, [#allocation3]
    $region49: #{forward.1} parent=1 // pred_fallthru
      _
    // Predicated region
    $region50: #{forward.1} parent=1 // pred_check
      _
    $region51: #{forward.1} parent=1 // pred_check_branch
      %4383 = sbr.rel (0) target = $region53
    $region52: #{forward.1} parent=1 // pred_region
      %4384 = dma.done [#allocation3], 32
    $region53: #{forward.1} parent=1 // pred_fallthru
      _
    %4385 = vsyncpa [#allocation3], 1
    %4386 = vsyncpa [#allocation4], 1
    %4387 = vsyncpa [#allocation6], 1

</llo_original>
